<compile_context>
chip_gen: v5e
topology: v5e:2x2
jax: 0.10.0
libtpu: 0.0.40
codegen_flags: <defaults>
</compile_context>

<pallas_src>
import jax
import jax.numpy as jnp
from jax.experimental import pallas as pl
from jax.experimental.pallas import tpu as pltpu


def _round_up(v, m):
    return (v + m - 1) // m * m


def _gated_attn_kernel(x_ref, wab_ref, bab_ref, wc_ref, bc_ref, out_ref):
    # x_ref:   (TN, L)       input dtype (e.g. f32); cast to MXU dtype here
    # wab_ref: (L, 2*Dp)     packed [Wa | Wb], bf16, VMEM-resident
    # bab_ref: (1, 2*Dp)     packed [ba | bb], f32
    # wc_ref:  (Dp, Cp)      bf16, Cp padded to 128 lanes for the MXU
    # bc_ref:  (1, C)        f32 (unpadded)
    # out_ref: (TN, C)       only the real classes are stored (no padded slab)
    x = x_ref[...].astype(wab_ref.dtype)     # in-kernel cast to MXU dtype
    # One fused MXU matmul produces both gate pre-activations; f32 accumulate.
    ab = jnp.dot(x, wab_ref[...], preferred_element_type=jnp.float32) + bab_ref[...]
    dp = ab.shape[-1] // 2
    a = jnp.tanh(ab[:, :dp])                                 # Tanh gate (EUP)
    b = 0.5 * jnp.tanh(0.5 * ab[:, dp:]) + 0.5               # sigmoid via tanh identity
    h = (a * b).astype(wc_ref.dtype)                         # gated features -> bf16
    scores = jnp.dot(h, wc_ref[...], preferred_element_type=jnp.float32)
    c = out_ref.shape[-1]
    out_ref[...] = (scores[:, :c] + bc_ref[...]).astype(out_ref.dtype)


def pack_attn_params(wa, ba, wb, bb, wc, bc, matmul_dtype=jnp.bfloat16):
    """Pack/pad weights once (hoisted out of the per-call path).

    Weights are given pre-transposed as (in_features, out_features); biases as
    (1, out_features). Returns (wab, bab, wc_p, bc_p).
    """
    L, D = wa.shape
    C = wc.shape[1]
    f32 = jnp.float32
    Dp = _round_up(D, 128)
    Cp = _round_up(max(C, 1), 128)

    wab = jnp.zeros((L, 2 * Dp), matmul_dtype)
    wab = wab.at[:, :D].set(wa.astype(matmul_dtype))
    wab = wab.at[:, Dp:Dp + D].set(wb.astype(matmul_dtype))
    bab = jnp.zeros((1, 2 * Dp), f32)
    bab = bab.at[:, :D].set(ba.reshape(1, D).astype(f32))
    bab = bab.at[:, Dp:Dp + D].set(bb.reshape(1, D).astype(f32))

    wc_p = jnp.zeros((Dp, Cp), matmul_dtype).at[:D, :C].set(wc.astype(matmul_dtype))
    bc_p = bc.reshape(1, C).astype(f32)
    return wab, bab, wc_p, bc_p


def attn_net_gated_packed(x, wab, bab, wc_p, bc_p, *, tn=2048,
                          vmem_limit_bytes=48 * 1024 * 1024):
    """Forward pass with pre-packed weights. Returns (A, x)."""
    N, L = x.shape
    Dp, Cp = wc_p.shape
    C = bc_p.shape[1]

    # N-tile: multiple of 16 (sublane packing), capped at `tn`, and also capped
    # at ceil(N/2) so the grid has >=2 blocks whenever possible (v7x megacore).
    TN = max(16, min(_round_up(tn, 16), _round_up(pl.cdiv(N, 2), 16)))
    num_tiles = pl.cdiv(N, TN)          # last block may be partial (masked I/O)

    out = pl.pallas_call(
        _gated_attn_kernel,
        out_shape=jax.ShapeDtypeStruct((N, C), x.dtype),
        grid=(num_tiles,),
        in_specs=[
            pl.BlockSpec((TN, L), lambda i: (i, 0)),        # x: streamed/pipelined
            pl.BlockSpec((L, 2 * Dp), lambda i: (0, 0)),    # Wab: VMEM-resident
            pl.BlockSpec((1, 2 * Dp), lambda i: (0, 0)),    # bab: resident
            pl.BlockSpec((Dp, Cp), lambda i: (0, 0)),       # Wc: resident
            pl.BlockSpec((1, C), lambda i: (0, 0)),         # bc: resident
        ],
        out_specs=pl.BlockSpec((TN, C), lambda i: (i, 0)),  # only real classes stored
        compiler_params=pltpu.CompilerParams(
            dimension_semantics=("parallel",),              # split N over TCs
            vmem_limit_bytes=vmem_limit_bytes,
        ),
    )(x, wab, bab, wc_p, bc_p)

    # Module also returns its input unchanged (pass-through, no compute).
    return out, x


def attn_net_gated(x, wa, ba, wb, bb, wc, bc, **kw):
    """Convenience wrapper: packs weights then runs the kernel (prefer packing
    once with pack_attn_params for repeated calls)."""
    packed = pack_attn_params(wa, ba, wb, bb, wc, bc)
    return attn_net_gated_packed(x, *packed, **kw)


def init_params(key, L, D, n_classes, dtype=jnp.float32):
    """Deterministic synthetic parameters with the same shapes as the module."""
    ks = jax.random.split(key, 6)
    scale_a = 1.0 / jnp.sqrt(L)
    scale_c = 1.0 / jnp.sqrt(D)
    wa = jax.random.uniform(ks[0], (L, D), dtype, -scale_a, scale_a)
    ba = jax.random.uniform(ks[1], (1, D), dtype, -scale_a, scale_a)
    wb = jax.random.uniform(ks[2], (L, D), dtype, -scale_a, scale_a)
    bb = jax.random.uniform(ks[3], (1, D), dtype, -scale_a, scale_a)
    wc = jax.random.uniform(ks[4], (D, n_classes), dtype, -scale_c, scale_c)
    bc = jax.random.uniform(ks[5], (1, n_classes), dtype, -scale_c, scale_c)
    return wa, ba, wb, bb, wc, bc


if __name__ == "__main__":
    # Module defaults L=1024, D=256, n_classes=1; small bag of N instances
    # (N deliberately not a multiple of the tile to exercise partial blocks,
    # and > 1 tile so the "parallel" grid axis is actually split).
    N, L, D, n_classes = 200, 1024, 256, 1
    key = jax.random.PRNGKey(0)
    kx, kp = jax.random.split(key)
    x = jax.random.normal(kx, (N, L), dtype=jnp.float32)
    params = init_params(kp, L, D, n_classes)

    # Pack weights once (hoisted out of the per-call path).
    packed = pack_attn_params(*params)
    fwd = jax.jit(attn_net_gated_packed)

    A, x_out = fwd(x, *packed)
    jax.block_until_ready((A, x_out))

    # Pure-JAX f32 (HIGHEST precision) reference of the PyTorch forward.
    wa, ba, wb, bb, wc, bc = params
    hi = jax.lax.Precision.HIGHEST
    a_ref = jnp.tanh(jnp.dot(x, wa, precision=hi) + ba)
    b_ref = jax.nn.sigmoid(jnp.dot(x, wb, precision=hi) + bb)
    A_ref = jnp.dot(a_ref * b_ref, wc, precision=hi) + bc

    assert A.shape == (N, n_classes)
    assert x_out.shape == (N, L)
    # bf16 MXU inputs with f32 accumulation -> modest tolerance vs f32 reference.
    assert jnp.allclose(A, A_ref, atol=1e-2, rtol=1e-2), \
        float(jnp.max(jnp.abs(A - A_ref)))
    assert jnp.array_equal(x_out, x)

    # TODO(synk): nn.Dropout (dropout=True training path) not implemented;
    # forward here matches the default dropout=False / inference behavior.
    print("KERNEL_OK")
</pallas_src>

<mosaic_0001>
module attributes {stable_mosaic.version = 11 : i64} {
  func.func @_gated_attn_kernel(%arg0: i32, %arg1: memref<112x1024xf32, #tpu.memory_space<vmem>>, %arg2: memref<1024x512xbf16, #tpu.memory_space<vmem>>, %arg3: memref<1x512xf32, #tpu.memory_space<vmem>>, %arg4: memref<256x128xbf16, #tpu.memory_space<vmem>>, %arg5: memref<1x1xf32, #tpu.memory_space<vmem>>, %arg6: memref<112x1xf32, #tpu.memory_space<vmem>>) attributes {dimension_semantics = [#tpu.dimension_semantics<parallel>], iteration_bounds = array<i64: 2>, scalar_prefetch = 0 : i64, scratch_operands = 0 : i64, tpu.core_type = #tpu.core_type<tc>, window_params = [{transform_indices = @transform_0, window_bounds = array<i64: 112, 1024>}, {pipeline_mode = #tpu.pipeline_mode<synchronous>, transform_indices = @transform_1, window_bounds = array<i64: 1024, 512>}, {pipeline_mode = #tpu.pipeline_mode<synchronous>, transform_indices = @transform_2, window_bounds = array<i64: 1, 512>}, {pipeline_mode = #tpu.pipeline_mode<synchronous>, transform_indices = @transform_3, window_bounds = array<i64: 256, 128>}, {pipeline_mode = #tpu.pipeline_mode<synchronous>, transform_indices = @transform_4, window_bounds = array<i64: 1, 1>}, {transform_indices = @transform_5, window_bounds = array<i64: 112, 1>}]} {
    %c0 = arith.constant 0 : index
    %c0_0 = arith.constant 0 : index
    %0 = vector.load %arg1[%c0, %c0_0] : memref<112x1024xf32, #tpu.memory_space<vmem>>, vector<112x1024xf32>
    %1 = arith.truncf %0 : vector<112x1024xf32> to vector<112x1024xbf16>
    %c0_1 = arith.constant 0 : index
    %c0_2 = arith.constant 0 : index
    %2 = vector.load %arg2[%c0_1, %c0_2] : memref<1024x512xbf16, #tpu.memory_space<vmem>>, vector<1024x512xbf16>
    %cst = arith.constant dense<0.000000e+00> : vector<112x512xf32>
    %3 = tpu.matmul %1, %2, %cst {dimension_numbers = #tpu.dot_dimension_numbers<[1], [0], [0], [1], [0, 0, 1, 1], [], []>} : vector<112x1024xbf16>, vector<1024x512xbf16>, vector<112x512xf32> -> vector<112x512xf32>
    %c0_3 = arith.constant 0 : index
    %c0_4 = arith.constant 0 : index
    %4 = vector.load %arg3[%c0_3, %c0_4] : memref<1x512xf32, #tpu.memory_space<vmem>>, vector<1x512xf32>
    %5 = vector.broadcast %4 : vector<1x512xf32> to vector<112x512xf32>
    %6 = arith.addf %3, %5 : vector<112x512xf32>
    %7 = vector.extract_strided_slice %6 {offsets = [0, 0], sizes = [112, 256], strides = [1, 1]} : vector<112x512xf32> to vector<112x256xf32>
    %8 = math.tanh %7 : vector<112x256xf32>
    %9 = vector.extract_strided_slice %6 {offsets = [0, 256], sizes = [112, 256], strides = [1, 1]} : vector<112x512xf32> to vector<112x256xf32>
    %cst_5 = arith.constant 5.000000e-01 : f32
    %10 = vector.broadcast %cst_5 : f32 to vector<112x256xf32>
    %11 = arith.mulf %10, %9 : vector<112x256xf32>
    %12 = math.tanh %11 : vector<112x256xf32>
    %cst_6 = arith.constant 5.000000e-01 : f32
    %13 = vector.broadcast %cst_6 : f32 to vector<112x256xf32>
    %14 = arith.mulf %13, %12 : vector<112x256xf32>
    %cst_7 = arith.constant 5.000000e-01 : f32
    %15 = vector.broadcast %cst_7 : f32 to vector<112x256xf32>
    %16 = arith.addf %14, %15 : vector<112x256xf32>
    %17 = arith.mulf %8, %16 : vector<112x256xf32>
    %18 = arith.truncf %17 : vector<112x256xf32> to vector<112x256xbf16>
    %c0_8 = arith.constant 0 : index
    %c0_9 = arith.constant 0 : index
    %19 = vector.load %arg4[%c0_8, %c0_9] : memref<256x128xbf16, #tpu.memory_space<vmem>>, vector<256x128xbf16>
    %cst_10 = arith.constant dense<0.000000e+00> : vector<112x128xf32>
    %20 = tpu.matmul %18, %19, %cst_10 {dimension_numbers = #tpu.dot_dimension_numbers<[1], [0], [0], [1], [0, 0, 1, 1], [], []>} : vector<112x256xbf16>, vector<256x128xbf16>, vector<112x128xf32> -> vector<112x128xf32>
    %21 = vector.extract_strided_slice %20 {offsets = [0, 0], sizes = [112, 1], strides = [1, 1]} : vector<112x128xf32> to vector<112x1xf32>
    %c0_11 = arith.constant 0 : index
    %c0_12 = arith.constant 0 : index
    %22 = vector.load %arg5[%c0_11, %c0_12] : memref<1x1xf32, #tpu.memory_space<vmem>>, vector<1x1xf32>
    %23 = vector.broadcast %22 : vector<1x1xf32> to vector<112x1xf32>
    %24 = arith.addf %21, %23 : vector<112x1xf32>
    %c0_13 = arith.constant 0 : index
    %c0_14 = arith.constant 0 : index
    %25 = vector.load %arg6[%c0_13, %c0_14] : memref<112x1xf32, #tpu.memory_space<vmem>>, vector<112x1xf32>
    tpu.vector_store %arg6[%c0_13, %c0_14], %24 {strides = array<i32>} : memref<112x1xf32, #tpu.memory_space<vmem>>, vector<112x1xf32>,
    return
  }
  func.func @transform_0(%arg0: i32) -> (i32, i32) {
    %c0_i32 = arith.constant 0 : i32
    %c0_i32_0 = arith.constant 0 : i32
    return %arg0, %c0_i32 : i32, i32
  }
  func.func @transform_1(%arg0: i32) -> (i32, i32) {
    %c0_i32 = arith.constant 0 : i32
    %c0_i32_0 = arith.constant 0 : i32
    %c0_i32_1 = arith.constant 0 : i32
    return %c0_i32, %c0_i32_0 : i32, i32
  }
  func.func @transform_2(%arg0: i32) -> (i32, i32) {
    %c0_i32 = arith.constant 0 : i32
    %c0_i32_0 = arith.constant 0 : i32
    %c0_i32_1 = arith.constant 0 : i32
    return %c0_i32, %c0_i32_0 : i32, i32
  }
  func.func @transform_3(%arg0: i32) -> (i32, i32) {
    %c0_i32 = arith.constant 0 : i32
    %c0_i32_0 = arith.constant 0 : i32
    %c0_i32_1 = arith.constant 0 : i32
    return %c0_i32, %c0_i32_0 : i32, i32
  }
  func.func @transform_4(%arg0: i32) -> (i32, i32) {
    %c0_i32 = arith.constant 0 : i32
    %c0_i32_0 = arith.constant 0 : i32
    %c0_i32_1 = arith.constant 0 : i32
    return %c0_i32, %c0_i32_0 : i32, i32
  }
  func.func @transform_5(%arg0: i32) -> (i32, i32) {
    %c0_i32 = arith.constant 0 : i32
    %c0_i32_0 = arith.constant 0 : i32
    return %arg0, %c0_i32 : i32, i32
  }
}

</mosaic_0001>

<llo_original>
// kernel: attn_net_gated_packed.1
$region0: #{attn_net_gated_packed.1}
  #allocation0 [shape = 'u32[]', space=smem, size = 0x4, offset = 0x4, fixed_abs, tag = 'smem constant byte address 0x4 - core index']
  #allocation1 [shape = 'u32[72,128]{1,0:T(1,128)}', space=vmem, size = 0x9000, scoped, tag = 'internal scratch']
  #allocation2 [shape = 'f32[1,1]{1,0:T(1,128)S(1)}', space=vmem, size = 0x200, scoped, tag = 'scoped memory for attn_net_gated_packed.1']
  %s0 = inlined_call_operand.hbm [shape: f32[200,1024], index: 0, kind: input, shape index: {}]
  %s1 = inlined_call_operand.hbm [shape: bf16[1024,512], index: 1, kind: input, shape index: {}]
  %s2 = inlined_call_operand.hbm [shape: f32[1,512], index: 2, kind: input, shape index: {}]
  %s3 = inlined_call_operand.hbm [shape: bf16[256,128], index: 3, kind: input, shape index: {}]
  %s4 = inlined_call_operand.<no memory space> [shape: f32[1,1], index: 4, kind: input, shape index: {}]
  %s5 = inlined_call_operand.vmem [shape: f32[200,1], index: 5, kind: output, shape index: {}]
  %s6 = sld [smem:[#allocation0]]
  $region117: #{attn_net_gated_packed.1} parent=0
    _
  %s8 = ssub.s32 1, %s6
  %s9 = scalar_select 0, %s8, %s6
  %v10 = vstv %s4
  %11 = vst [vmem:[#allocation2] sm:$0x1] %v10
  $region1: #{attn_net_gated_packed.1} parent=0
    #allocation3 [shape = 'u8[917504]{0}', space=vmem, size = 0xe0000, scoped, tag = 'input window, operand 0']
    #allocation4 [shape = 's32[2]{0}', space=sflag, size = 0x8, scoped, tag = 'scoped memory for attn_net_gated_packed.1']
    #allocation5 [shape = 'u8[1048576]{0}', space=vmem, size = 0x100000, scoped, tag = 'input window, operand 1, single buffered']
    #allocation6 [shape = 's32[1]{0}', space=sflag, size = 0x4, scoped, tag = 'scoped memory for attn_net_gated_packed.1']
    #allocation7 [shape = 'u8[2048]{0}', space=vmem, size = 0x800, scoped, tag = 'input window, operand 2, single buffered']
    #allocation8 [shape = 'u8[65536]{0}', space=vmem, size = 0x10000, scoped, tag = 'input window, operand 3, single buffered']
    #allocation9 [shape = 's32[1]{0}', space=sflag, size = 0x4, scoped, tag = 'scoped memory for attn_net_gated_packed.1']
    #allocation10 [shape = 'u8[114688]{0}', space=vmem, size = 0x1c000, scoped, tag = 'output window, operand 0']
    %12 = vsyncpa [#allocation4], 0
    %s13 = scalar_lea.sflag [#allocation4], 1
    %14 = vsyncpa %s13, 0
    %15 = vsyncpa [#allocation6], 0
    %16 = vsyncpa [#allocation9], 0
    loop: start=0, step=1, limit=4
    $region2: #{attn_net_gated_packed.1} parent=1 // loop_pre_header
      _
    $region3: #{attn_net_gated_packed.1} parent=1 // loop_header
      %s18 = sphi 0, %s22
      %p19 = scmp.ge.s32.totalorder %s18, 4
      %s28 = sphi 0, %s30
      %s31 = sphi 0, %s28
      %s32 = sphi 0, %s31
      %s48 = sphi 0, %s32
      %s52 = sphi 0, %s52
      %s54 = sphi 0, %s52
      %s55 = sphi 0, %s54
      %s69 = sphi 0, %s55
      %s73 = sphi 0, %s73
      %s75 = sphi 0, %s73
      %s76 = sphi 0, %s75
      %s90 = sphi 0, %s76
      %s94 = sphi 0, %s94
      %s96 = sphi 0, %s94
      %s97 = sphi 0, %s96
      %s111 = sphi 0, %s97
      %s115 = sphi 0, %s115
      %s117 = sphi 0, %s115
      %s118 = sphi 0, %s117
      %s132 = sphi 0, %s118
      %s138 = sphi 0, %s140
      %s141 = sphi 0, %s138
      %s142 = sphi 0, %s141
      %s158 = sphi 0, %s142
    $region4: #{attn_net_gated_packed.1} parent=1 // loop_header_branch
      %21 = sbr.rel (%p19) target = $region8
    $region5: #{attn_net_gated_packed.1} parent=1 // loop_body
      %s23 = ssub.s32 %s18, 1
      %s24 = ssub.s32 %s18, 2
      %s25 = sadd.s32 %s18, 1
      %s26 = ssub.s32 %s18, %s25
      %p27 = scmp.eq.s32.totalorder %s26, 0
      %s29 = sadd.s32 %s28, 1
      %s30 = scalar_select %p27, %s28, %s29
      %p33 = pneg %p27
      %p34 = scmp.eq.s32.totalorder %s18, 1
      %p35 = por %p33, %p34
      %p36 = scmp.ne.s32.totalorder %s28, %s31
      %p37 = scmp.eq.s32.totalorder %s18, 0
      %p38 = por %p36, %p37
      %p39 = scmp.ne.s32.totalorder %s28, %s31
      %p40 = scmp.eq.s32.totalorder %s23, 1
      %p41 = por %p39, %p40
      %p42 = scmp.ne.s32.totalorder %s31, %s32
      %p43 = scmp.eq.s32.totalorder %s23, 0
      %p44 = por %p42, %p43
      %p45 = scmp.ne.s32.totalorder %s31, %s32
      %p46 = scmp.eq.s32.totalorder %s24, 1
      %p47 = por %p45, %p46
      %p49 = scmp.ne.s32.totalorder %s32, %s48
      %p50 = scmp.eq.s32.totalorder %s24, 0
      %p51 = por %p49, %p50
      %s53 = sadd.s32 %s52, 1
      %p56 = scmp.eq.s32.totalorder %s18, 1
      %p57 = scmp.ne.s32.totalorder %s52, %s54
      %p58 = scmp.eq.s32.totalorder %s18, 0
      %p59 = por %p57, %p58
      %p60 = scmp.ne.s32.totalorder %s52, %s54
      %p61 = scmp.eq.s32.totalorder %s23, 1
      %p62 = por %p60, %p61
      %p63 = scmp.ne.s32.totalorder %s54, %s55
      %p64 = scmp.eq.s32.totalorder %s23, 0
      %p65 = por %p63, %p64
      %p66 = scmp.ne.s32.totalorder %s54, %s55
      %p67 = scmp.eq.s32.totalorder %s24, 1
      %p68 = por %p66, %p67
      %p70 = scmp.ne.s32.totalorder %s55, %s69
      %p71 = scmp.eq.s32.totalorder %s24, 0
      %p72 = por %p70, %p71
      %s74 = sadd.s32 %s73, 1
      %p77 = scmp.eq.s32.totalorder %s18, 1
      %p78 = scmp.ne.s32.totalorder %s73, %s75
      %p79 = scmp.eq.s32.totalorder %s18, 0
      %p80 = por %p78, %p79
      %p81 = scmp.ne.s32.totalorder %s73, %s75
      %p82 = scmp.eq.s32.totalorder %s23, 1
      %p83 = por %p81, %p82
      %p84 = scmp.ne.s32.totalorder %s75, %s76
      %p85 = scmp.eq.s32.totalorder %s23, 0
      %p86 = por %p84, %p85
      %p87 = scmp.ne.s32.totalorder %s75, %s76
      %p88 = scmp.eq.s32.totalorder %s24, 1
      %p89 = por %p87, %p88
      %p91 = scmp.ne.s32.totalorder %s76, %s90
      %p92 = scmp.eq.s32.totalorder %s24, 0
      %p93 = por %p91, %p92
      %s95 = sadd.s32 %s94, 1
      %p98 = scmp.eq.s32.totalorder %s18, 1
      %p99 = scmp.ne.s32.totalorder %s94, %s96
      %p100 = scmp.eq.s32.totalorder %s18, 0
      %p101 = por %p99, %p100
      %p102 = scmp.ne.s32.totalorder %s94, %s96
      %p103 = scmp.eq.s32.totalorder %s23, 1
      %p104 = por %p102, %p103
      %p105 = scmp.ne.s32.totalorder %s96, %s97
      %p106 = scmp.eq.s32.totalorder %s23, 0
      %p107 = por %p105, %p106
      %p108 = scmp.ne.s32.totalorder %s96, %s97
      %p109 = scmp.eq.s32.totalorder %s24, 1
      %p110 = por %p108, %p109
      %p112 = scmp.ne.s32.totalorder %s97, %s111
      %p113 = scmp.eq.s32.totalorder %s24, 0
      %p114 = por %p112, %p113
      %s116 = sadd.s32 %s115, 1
      %p119 = scmp.eq.s32.totalorder %s18, 1
      %p120 = scmp.ne.s32.totalorder %s115, %s117
      %p121 = scmp.eq.s32.totalorder %s18, 0
      %p122 = por %p120, %p121
      %p123 = scmp.ne.s32.totalorder %s115, %s117
      %p124 = scmp.eq.s32.totalorder %s23, 1
      %p125 = por %p123, %p124
      %p126 = scmp.ne.s32.totalorder %s117, %s118
      %p127 = scmp.eq.s32.totalorder %s23, 0
      %p128 = por %p126, %p127
      %p129 = scmp.ne.s32.totalorder %s117, %s118
      %p130 = scmp.eq.s32.totalorder %s24, 1
      %p131 = por %p129, %p130
      %p133 = scmp.ne.s32.totalorder %s118, %s132
      %p134 = scmp.eq.s32.totalorder %s24, 0
      %p135 = por %p133, %p134
      %s136 = ssub.s32 %s18, %s25
      %p137 = scmp.eq.s32.totalorder %s136, 0
      %s139 = sadd.s32 %s138, 1
      %s140 = scalar_select %p137, %s138, %s139
      %p143 = pneg %p137
      %p144 = scmp.eq.s32.totalorder %s18, 1
      %p145 = por %p143, %p144
      %p146 = scmp.ne.s32.totalorder %s138, %s141
      %p147 = scmp.eq.s32.totalorder %s18, 0
      %p148 = por %p146, %p147
      %p149 = scmp.ne.s32.totalorder %s138, %s141
      %p150 = scmp.eq.s32.totalorder %s23, 1
      %p151 = por %p149, %p150
      %p152 = scmp.ne.s32.totalorder %s141, %s142
      %p153 = scmp.eq.s32.totalorder %s23, 0
      %p154 = por %p152, %p153
      %p155 = scmp.ne.s32.totalorder %s141, %s142
      %p156 = scmp.eq.s32.totalorder %s24, 1
      %p157 = por %p155, %p156
      %p159 = scmp.ne.s32.totalorder %s142, %s158
      %p160 = scmp.eq.s32.totalorder %s24, 0
      %p161 = por %p159, %p160
      %p162 = scmp.le.s32.totalorder 1, %s18
      %p163 = scmp.lt.s32.totalorder %s18, 3
      %p164 = pnand %p162, %p163
      %p165 = pneg %p164
      // Predicated region
      $region9: #{attn_net_gated_packed.1} parent=5 // pred_check
        _
      $region10: #{attn_net_gated_packed.1} parent=5 // pred_check_branch
        %167 = sbr.rel (%p164) target = $region12
      $region11: #{attn_net_gated_packed.1} parent=5 // pred_region
        %s168 = ssub.s32 %s18, 1
        // Predicated region
        $region13: #{attn_net_gated_packed.1} parent=11 // pred_check
          %p169 = pneg %p65
        $region14: #{attn_net_gated_packed.1} parent=11 // pred_check_branch
          %171 = sbr.rel (%p169) target = $region16
        $region15: #{attn_net_gated_packed.1} parent=11 // pred_region
          %173 = vsyncadd [#allocation6], 0
          %s174 = sshll.u32 %s1, 4
          %s175 = int_to_ptr.hbm [resolvable:$true] %s174
          %s176 = sshll.u32 [#allocation5], 4
          %s177 = int_to_ptr.vmem [resolvable:$true] %s176
          %182 = dma.hbm_to_vmem [thread:$0]  %s175, 32768, %s177, [#allocation6], 256, 256, 16
        $region16: #{attn_net_gated_packed.1} parent=11 // pred_fallthru
          _
        // Predicated region
        $region17: #{attn_net_gated_packed.1} parent=11 // pred_check
          %p183 = pneg %p86
        $region18: #{attn_net_gated_packed.1} parent=11 // pred_check_branch
          %185 = sbr.rel (%p183) target = $region20
        $region19: #{attn_net_gated_packed.1} parent=11 // pred_region
          %187 = vsyncadd [#allocation6], 0
          %s189 = sshll.u32 %s2, 4
          %s190 = int_to_ptr.hbm [resolvable:$true] %s189
          %s191 = sshll.u32 [#allocation7], 4
          %s192 = int_to_ptr.vmem [resolvable:$true] %s191
          %194 = dma.hbm_to_vmem [thread:$0]  %s190, 64, %s192, [#allocation6]
        $region20: #{attn_net_gated_packed.1} parent=11 // pred_fallthru
          _
        // Predicated region
        $region21: #{attn_net_gated_packed.1} parent=11 // pred_check
          %p195 = pneg %p107
        $region22: #{attn_net_gated_packed.1} parent=11 // pred_check_branch
          %197 = sbr.rel (%p195) target = $region24
        $region23: #{attn_net_gated_packed.1} parent=11 // pred_region
          %199 = vsyncadd [#allocation9], 0
          %s200 = sshll.u32 %s3, 4
          %s201 = int_to_ptr.hbm [resolvable:$true] %s200
          %s202 = sshll.u32 [#allocation8], 4
          %s203 = int_to_ptr.vmem [resolvable:$true] %s202
          %208 = dma.hbm_to_vmem [thread:$0]  %s201, 2048, %s203, [#allocation9], 64, 64, 4
        $region24: #{attn_net_gated_packed.1} parent=11 // pred_fallthru
          _
        // Predicated region
        $region25: #{attn_net_gated_packed.1} parent=11 // pred_check
          %p209 = pneg %p128
        $region26: #{attn_net_gated_packed.1} parent=11 // pred_check_branch
          %211 = sbr.rel (%p209) target = $region28
        $region27: #{attn_net_gated_packed.1} parent=11 // pred_region
          _
        $region28: #{attn_net_gated_packed.1} parent=11 // pred_fallthru
          _
      $region12: #{attn_net_gated_packed.1} parent=5 // pred_fallthru
        _
      %p212 = scmp.lt.s32.totalorder %s18, 2
      // Predicated region
      $region29: #{attn_net_gated_packed.1} parent=5 // pred_check
        %p213 = pneg %p212
      $region30: #{attn_net_gated_packed.1} parent=5 // pred_check_branch
        %215 = sbr.rel (%p213) target = $region32
      $region31: #{attn_net_gated_packed.1} parent=5 // pred_region
        // Predicated region
        $region33: #{attn_net_gated_packed.1} parent=31 // pred_check
          %p216 = pneg %p38
        $region34: #{attn_net_gated_packed.1} parent=31 // pred_check_branch
          %218 = sbr.rel (%p216) target = $region36
        $region35: #{attn_net_gated_packed.1} parent=31 // pred_region
          %s219 = sand.u32 %s28, 1
          %s220 = scalar_lea.sflag [#allocation4], %s219
          %s221 = sand.u32 %s28, 1
          %s222 = smul.addr %s221, 896
          %s223 = scalar_lea.vmem [#allocation3], %s222
          %s224 = smul.u32 14, %s18
          %s225 = ssub.s32 25, %s224
          %p226 = scmp.lt.s32.totalorder %s225, 14
          %s227 = scalar_select %p226, %s225, 14
          %s228 = smul.u32 8, %s227
          %s229 = smul.u32 %s228, 8
          %s230 = ssub.s32 896, %s229
          %s231 = sshll.u32 %s230, 4
          %232 = vsyncadd %s220, %s231
          %p233 = scmp.ne.s32.totalorder 0, %s229
          %s234 = smul.addr %s224, 8
          %s235 = smul.addr %s234, 8
          %s236 = scalar_lea.hbm %s0, %s235
          %s237 = smul.u32 64, %s227
          %s238 = sshll.u32 %s236, 4
          %s239 = int_to_ptr.hbm [resolvable:$true] %s238
          %s240 = sshll.u32 %s223, 4
          %s241 = int_to_ptr.vmem [resolvable:$true] %s240
          %s242 = sshll.u32 %s237, 4
          %246 = dma.hbm_to_vmem [thread:$0]  (%p233), %s239, %s242, %s241, %s220, 1024, 1024, 64
        $region36: #{attn_net_gated_packed.1} parent=31 // pred_fallthru
          _
      $region32: #{attn_net_gated_packed.1} parent=5 // pred_fallthru
        _
      %p247 = scmp.le.s32.totalorder 1, %s18
      %p248 = scmp.lt.s32.totalorder %s18, 3
      %p249 = pnand %p247, %p248
      %p250 = pneg %p249
      // Predicated region
      $region37: #{attn_net_gated_packed.1} parent=5 // pred_check
        _
      $region38: #{attn_net_gated_packed.1} parent=5 // pred_check_branch
        %252 = sbr.rel (%p249) target = $region40
      $region39: #{attn_net_gated_packed.1} parent=5 // pred_region
        %s253 = ssub.s32 %s18, 1
        %s254 = sand.u32 %s31, 1
        %s255 = scalar_lea.sflag [#allocation4], %s254
        %s256 = sand.u32 %s31, 1
        %s257 = smul.addr %s256, 896
        %s258 = scalar_lea.vmem [#allocation3], %s257
        // Predicated region
        $region41: #{attn_net_gated_packed.1} parent=39 // pred_check
          %p259 = pneg %p44
        $region42: #{attn_net_gated_packed.1} parent=39 // pred_check_branch
          %261 = sbr.rel (%p259) target = $region44
        $region43: #{attn_net_gated_packed.1} parent=39 // pred_region
          %263 = dma.done %s255, 14336
        $region44: #{attn_net_gated_packed.1} parent=39 // pred_fallthru
          _
        // Predicated region
        $region45: #{attn_net_gated_packed.1} parent=39 // pred_check
          %p264 = pneg %p65
        $region46: #{attn_net_gated_packed.1} parent=39 // pred_check_branch
          %266 = sbr.rel (%p264) target = $region48
        $region47: #{attn_net_gated_packed.1} parent=39 // pred_region
          %268 = dma.done [#allocation6], 32768
        $region48: #{attn_net_gated_packed.1} parent=39 // pred_fallthru
          _
        // Predicated region
        $region49: #{attn_net_gated_packed.1} parent=39 // pred_check
          %p269 = pneg %p86
        $region50: #{attn_net_gated_packed.1} parent=39 // pred_check_branch
          %271 = sbr.rel (%p269) target = $region52
        $region51: #{attn_net_gated_packed.1} parent=39 // pred_region
          %273 = dma.done [#allocation6], 64
        $region52: #{attn_net_gated_packed.1} parent=39 // pred_fallthru
          _
        // Predicated region
        $region53: #{attn_net_gated_packed.1} parent=39 // pred_check
          %p274 = pneg %p107
        $region54: #{attn_net_gated_packed.1} parent=39 // pred_check_branch
          %276 = sbr.rel (%p274) target = $region56
        $region55: #{attn_net_gated_packed.1} parent=39 // pred_region
          %278 = dma.done [#allocation9], 2048
        $region56: #{attn_net_gated_packed.1} parent=39 // pred_fallthru
          _
        %s279 = sand.u32 %s31, 1
        %s280 = scalar_lea.sflag [#allocation4], %s279
        %s281 = sand.u32 %s31, 1
        %s282 = smul.addr %s281, 896
        %s283 = scalar_lea.vmem [#allocation3], %s282
        %p284 = pneg %p44
        %p285 = pneg %p41
        %p286 = pneg %p65
        %p287 = pneg %p62
        %p288 = pneg %p86
        %p289 = pneg %p83
        %p290 = pneg %p107
        %p291 = pneg %p104
        %p292 = pneg %p128
        %p293 = pneg %p125
        %p294 = pneg %p154
        %p295 = pneg %p151
        %s296 = sand.u32 %s141, 1
        %s297 = sand.u32 %s141, 1
        %s298 = smul.addr %s297, 112
        %s299 = scalar_lea.vmem [#allocation10], %s298
        %s300 = smul.u32 14, %s23
        %s301 = ssub.s32 25, %s300
        %p302 = scmp.lt.s32.totalorder %s301, 14
        %s303 = scalar_select %p302, %s301, 14
        %s304 = smul.u32 8, %s303
        %s305 = smul.u32 %s304, 8
        %s306 = smul.u32 14, %s23
        %s307 = ssub.s32 25, %s306
        %p308 = scmp.lt.s32.totalorder %s307, 14
        %s309 = scalar_select %p308, %s307, 14
        %s310 = smul.u32 8, %s309
        %v311 = vld [vmem:[%s258] sm:$0xff]
        %v312 = vld [vmem:[%s258 + $0x8] sm:$0xff]
        %v313 = vld [vmem:[%s258 + $0x10] sm:$0xff]
        %v314 = vld [vmem:[%s258 + $0x18] sm:$0xff]
        %v315 = vld [vmem:[%s258 + $0x20] sm:$0xff]
        %v316 = vld [vmem:[%s258 + $0x28] sm:$0xff]
        %v317 = vld [vmem:[%s258 + $0x30] sm:$0xff]
        %v318 = vld [vmem:[%s258 + $0x38] sm:$0xff]
        %v319 = vld [vmem:[%s258 + $0x40] sm:$0xff]
        %v320 = vld [vmem:[%s258 + $0x48] sm:$0xff]
        %v321 = vld [vmem:[%s258 + $0x50] sm:$0xff]
        %v322 = vld [vmem:[%s258 + $0x58] sm:$0xff]
        %v323 = vld [vmem:[%s258 + $0x60] sm:$0xff]
        %v324 = vld [vmem:[%s258 + $0x68] sm:$0xff]
        %v325 = vld [vmem:[%s258 + $0x70] sm:$0xff]
        %v326 = vld [vmem:[%s258 + $0x78] sm:$0xff]
        %v327 = vld [vmem:[%s258 + $0x80] sm:$0xff]
        %v328 = vld [vmem:[%s258 + $0x88] sm:$0xff]
        %v329 = vld [vmem:[%s258 + $0x90] sm:$0xff]
        %v330 = vld [vmem:[%s258 + $0x98] sm:$0xff]
        %v331 = vld [vmem:[%s258 + $0xa0] sm:$0xff]
        %v332 = vld [vmem:[%s258 + $0xa8] sm:$0xff]
        %v333 = vld [vmem:[%s258 + $0xb0] sm:$0xff]
        %v334 = vld [vmem:[%s258 + $0xb8] sm:$0xff]
        %v335 = vld [vmem:[%s258 + $0xc0] sm:$0xff]
        %v336 = vld [vmem:[%s258 + $0xc8] sm:$0xff]
        %v337 = vld [vmem:[%s258 + $0xd0] sm:$0xff]
        %v338 = vld [vmem:[%s258 + $0xd8] sm:$0xff]
        %v339 = vld [vmem:[%s258 + $0xe0] sm:$0xff]
        %v340 = vld [vmem:[%s258 + $0xe8] sm:$0xff]
        %v341 = vld [vmem:[%s258 + $0xf0] sm:$0xff]
        %v342 = vld [vmem:[%s258 + $0xf8] sm:$0xff]
        %v343 = vld [vmem:[%s258 + $0x100] sm:$0xff]
        %v344 = vld [vmem:[%s258 + $0x108] sm:$0xff]
        %v345 = vld [vmem:[%s258 + $0x110] sm:$0xff]
        %v346 = vld [vmem:[%s258 + $0x118] sm:$0xff]
        %v347 = vld [vmem:[%s258 + $0x120] sm:$0xff]
        %v348 = vld [vmem:[%s258 + $0x128] sm:$0xff]
        %v349 = vld [vmem:[%s258 + $0x130] sm:$0xff]
        %v350 = vld [vmem:[%s258 + $0x138] sm:$0xff]
        %v351 = vld [vmem:[%s258 + $0x140] sm:$0xff]
        %v352 = vld [vmem:[%s258 + $0x148] sm:$0xff]
        %v353 = vld [vmem:[%s258 + $0x150] sm:$0xff]
        %v354 = vld [vmem:[%s258 + $0x158] sm:$0xff]
        %v355 = vld [vmem:[%s258 + $0x160] sm:$0xff]
        %v356 = vld [vmem:[%s258 + $0x168] sm:$0xff]
        %v357 = vld [vmem:[%s258 + $0x170] sm:$0xff]
        %v358 = vld [vmem:[%s258 + $0x178] sm:$0xff]
        %v359 = vld [vmem:[%s258 + $0x180] sm:$0xff]
        %v360 = vld [vmem:[%s258 + $0x188] sm:$0xff]
        %v361 = vld [vmem:[%s258 + $0x190] sm:$0xff]
        %v362 = vld [vmem:[%s258 + $0x198] sm:$0xff]
        %v363 = vld [vmem:[%s258 + $0x1a0] sm:$0xff]
        %v364 = vld [vmem:[%s258 + $0x1a8] sm:$0xff]
        %v365 = vld [vmem:[%s258 + $0x1b0] sm:$0xff]
        %v366 = vld [vmem:[%s258 + $0x1b8] sm:$0xff]
        %v367 = vld [vmem:[%s258 + $0x1c0] sm:$0xff]
        %v368 = vld [vmem:[%s258 + $0x1c8] sm:$0xff]
        %v369 = vld [vmem:[%s258 + $0x1d0] sm:$0xff]
        %v370 = vld [vmem:[%s258 + $0x1d8] sm:$0xff]
        %v371 = vld [vmem:[%s258 + $0x1e0] sm:$0xff]
        %v372 = vld [vmem:[%s258 + $0x1e8] sm:$0xff]
        %v373 = vld [vmem:[%s258 + $0x1f0] sm:$0xff]
        %v374 = vld [vmem:[%s258 + $0x1f8] sm:$0xff]
        %v375 = vld [vmem:[%s258 + $0x200] sm:$0xff]
        %v376 = vld [vmem:[%s258 + $0x208] sm:$0xff]
        %v377 = vld [vmem:[%s258 + $0x210] sm:$0xff]
        %v378 = vld [vmem:[%s258 + $0x218] sm:$0xff]
        %v379 = vld [vmem:[%s258 + $0x220] sm:$0xff]
        %v380 = vld [vmem:[%s258 + $0x228] sm:$0xff]
        %v381 = vld [vmem:[%s258 + $0x230] sm:$0xff]
        %v382 = vld [vmem:[%s258 + $0x238] sm:$0xff]
        %v383 = vld [vmem:[%s258 + $0x240] sm:$0xff]
        %v384 = vld [vmem:[%s258 + $0x248] sm:$0xff]
        %v385 = vld [vmem:[%s258 + $0x250] sm:$0xff]
        %v386 = vld [vmem:[%s258 + $0x258] sm:$0xff]
        %v387 = vld [vmem:[%s258 + $0x260] sm:$0xff]
        %v388 = vld [vmem:[%s258 + $0x268] sm:$0xff]
        %v389 = vld [vmem:[%s258 + $0x270] sm:$0xff]
        %v390 = vld [vmem:[%s258 + $0x278] sm:$0xff]
        %v391 = vld [vmem:[%s258 + $0x280] sm:$0xff]
        %v392 = vld [vmem:[%s258 + $0x288] sm:$0xff]
        %v393 = vld [vmem:[%s258 + $0x290] sm:$0xff]
        %v394 = vld [vmem:[%s258 + $0x298] sm:$0xff]
        %v395 = vld [vmem:[%s258 + $0x2a0] sm:$0xff]
        %v396 = vld [vmem:[%s258 + $0x2a8] sm:$0xff]
        %v397 = vld [vmem:[%s258 + $0x2b0] sm:$0xff]
        %v398 = vld [vmem:[%s258 + $0x2b8] sm:$0xff]
        %v399 = vld [vmem:[%s258 + $0x2c0] sm:$0xff]
        %v400 = vld [vmem:[%s258 + $0x2c8] sm:$0xff]
        %v401 = vld [vmem:[%s258 + $0x2d0] sm:$0xff]
        %v402 = vld [vmem:[%s258 + $0x2d8] sm:$0xff]
        %v403 = vld [vmem:[%s258 + $0x2e0] sm:$0xff]
        %v404 = vld [vmem:[%s258 + $0x2e8] sm:$0xff]
        %v405 = vld [vmem:[%s258 + $0x2f0] sm:$0xff]
        %v406 = vld [vmem:[%s258 + $0x2f8] sm:$0xff]
        %v407 = vld [vmem:[%s258 + $0x300] sm:$0xff]
        %v408 = vld [vmem:[%s258 + $0x308] sm:$0xff]
        %v409 = vld [vmem:[%s258 + $0x310] sm:$0xff]
        %v410 = vld [vmem:[%s258 + $0x318] sm:$0xff]
        %v411 = vld [vmem:[%s258 + $0x320] sm:$0xff]
        %v412 = vld [vmem:[%s258 + $0x328] sm:$0xff]
        %v413 = vld [vmem:[%s258 + $0x330] sm:$0xff]
        %v414 = vld [vmem:[%s258 + $0x338] sm:$0xff]
        %v415 = vld [vmem:[%s258 + $0x340] sm:$0xff]
        %v416 = vld [vmem:[%s258 + $0x348] sm:$0xff]
        %v417 = vld [vmem:[%s258 + $0x350] sm:$0xff]
        %v418 = vld [vmem:[%s258 + $0x358] sm:$0xff]
        %v419 = vld [vmem:[%s258 + $0x360] sm:$0xff]
        %v420 = vld [vmem:[%s258 + $0x368] sm:$0xff]
        %v421 = vld [vmem:[%s258 + $0x370] sm:$0xff]
        %v422 = vld [vmem:[%s258 + $0x378] sm:$0xff]
        %v423 = vpack.c.bf16 %v319, %v311
        %v424 = vpack.c.bf16 %v320, %v312
        %v425 = vpack.c.bf16 %v321, %v313
        %v426 = vpack.c.bf16 %v322, %v314
        %v427 = vpack.c.bf16 %v323, %v315
        %v428 = vpack.c.bf16 %v324, %v316
        %v429 = vpack.c.bf16 %v325, %v317
        %v430 = vpack.c.bf16 %v326, %v318
        %v431 = vpack.c.bf16 %v335, %v327
        %v432 = vpack.c.bf16 %v336, %v328
        %v433 = vpack.c.bf16 %v337, %v329
        %v434 = vpack.c.bf16 %v338, %v330
        %v435 = vpack.c.bf16 %v339, %v331
        %v436 = vpack.c.bf16 %v340, %v332
        %v437 = vpack.c.bf16 %v341, %v333
        %v438 = vpack.c.bf16 %v342, %v334
        %v439 = vpack.c.bf16 %v351, %v343
        %v440 = vpack.c.bf16 %v352, %v344
        %v441 = vpack.c.bf16 %v353, %v345
        %v442 = vpack.c.bf16 %v354, %v346
        %v443 = vpack.c.bf16 %v355, %v347
        %v444 = vpack.c.bf16 %v356, %v348
        %v445 = vpack.c.bf16 %v357, %v349
        %v446 = vpack.c.bf16 %v358, %v350
        %v447 = vpack.c.bf16 %v367, %v359
        %v448 = vpack.c.bf16 %v368, %v360
        %v449 = vpack.c.bf16 %v369, %v361
        %v450 = vpack.c.bf16 %v370, %v362
        %v451 = vpack.c.bf16 %v371, %v363
        %v452 = vpack.c.bf16 %v372, %v364
        %v453 = vpack.c.bf16 %v373, %v365
        %v454 = vpack.c.bf16 %v374, %v366
        %v455 = vpack.c.bf16 %v383, %v375
        %v456 = vpack.c.bf16 %v384, %v376
        %v457 = vpack.c.bf16 %v385, %v377
        %v458 = vpack.c.bf16 %v386, %v378
        %v459 = vpack.c.bf16 %v387, %v379
        %v460 = vpack.c.bf16 %v388, %v380
        %v461 = vpack.c.bf16 %v389, %v381
        %v462 = vpack.c.bf16 %v390, %v382
        %v463 = vpack.c.bf16 %v399, %v391
        %v464 = vpack.c.bf16 %v400, %v392
        %v465 = vpack.c.bf16 %v401, %v393
        %v466 = vpack.c.bf16 %v402, %v394
        %v467 = vpack.c.bf16 %v403, %v395
        %v468 = vpack.c.bf16 %v404, %v396
        %v469 = vpack.c.bf16 %v405, %v397
        %v470 = vpack.c.bf16 %v406, %v398
        %v471 = vpack.c.bf16 %v415, %v407
        %v472 = vpack.c.bf16 %v416, %v408
        %v473 = vpack.c.bf16 %v417, %v409
        %v474 = vpack.c.bf16 %v418, %v410
        %v475 = vpack.c.bf16 %v419, %v411
        %v476 = vpack.c.bf16 %v420, %v412
        %v477 = vpack.c.bf16 %v421, %v413
        %v478 = vpack.c.bf16 %v422, %v414
        %v479 = vld [vmem:[#allocation5] sm:$0xff]
        %v480 = vld [vmem:[#allocation5 + $0x8] sm:$0xff]
        %v481 = vld [vmem:[#allocation5 + $0x10] sm:$0xff]
        %v482 = vld [vmem:[#allocation5 + $0x18] sm:$0xff]
        %v483 = vld [vmem:[#allocation5 + $0x20] sm:$0xff]
        %v484 = vld [vmem:[#allocation5 + $0x28] sm:$0xff]
        %v485 = vld [vmem:[#allocation5 + $0x30] sm:$0xff]
        %v486 = vld [vmem:[#allocation5 + $0x38] sm:$0xff]
        %v487 = vld [vmem:[#allocation5 + $0x40] sm:$0xff]
        %v488 = vld [vmem:[#allocation5 + $0x48] sm:$0xff]
        %v489 = vld [vmem:[#allocation5 + $0x50] sm:$0xff]
        %v490 = vld [vmem:[#allocation5 + $0x58] sm:$0xff]
        %v491 = vld [vmem:[#allocation5 + $0x60] sm:$0xff]
        %v492 = vld [vmem:[#allocation5 + $0x68] sm:$0xff]
        %v493 = vld [vmem:[#allocation5 + $0x70] sm:$0xff]
        %v494 = vld [vmem:[#allocation5 + $0x78] sm:$0xff]
        %v495 = vld [vmem:[#allocation5 + $0x80] sm:$0xff]
        %v496 = vld [vmem:[#allocation5 + $0x88] sm:$0xff]
        %v497 = vld [vmem:[#allocation5 + $0x90] sm:$0xff]
        %v498 = vld [vmem:[#allocation5 + $0x98] sm:$0xff]
        %v499 = vld [vmem:[#allocation5 + $0xa0] sm:$0xff]
        %v500 = vld [vmem:[#allocation5 + $0xa8] sm:$0xff]
        %v501 = vld [vmem:[#allocation5 + $0xb0] sm:$0xff]
        %v502 = vld [vmem:[#allocation5 + $0xb8] sm:$0xff]
        %v503 = vld [vmem:[#allocation5 + $0xc0] sm:$0xff]
        %v504 = vld [vmem:[#allocation5 + $0xc8] sm:$0xff]
        %v505 = vld [vmem:[#allocation5 + $0xd0] sm:$0xff]
        %v506 = vld [vmem:[#allocation5 + $0xd8] sm:$0xff]
        %v507 = vld [vmem:[#allocation5 + $0xe0] sm:$0xff]
        %v508 = vld [vmem:[#allocation5 + $0xe8] sm:$0xff]
        %v509 = vld [vmem:[#allocation5 + $0xf0] sm:$0xff]
        %v510 = vld [vmem:[#allocation5 + $0xf8] sm:$0xff]
        %v511 = vld [vmem:[#allocation5 + $0x100] sm:$0xff]
        %v512 = vld [vmem:[#allocation5 + $0x108] sm:$0xff]
        %v513 = vld [vmem:[#allocation5 + $0x110] sm:$0xff]
        %v514 = vld [vmem:[#allocation5 + $0x118] sm:$0xff]
        %v515 = vld [vmem:[#allocation5 + $0x120] sm:$0xff]
        %v516 = vld [vmem:[#allocation5 + $0x128] sm:$0xff]
        %v517 = vld [vmem:[#allocation5 + $0x130] sm:$0xff]
        %v518 = vld [vmem:[#allocation5 + $0x138] sm:$0xff]
        %v519 = vld [vmem:[#allocation5 + $0x140] sm:$0xff]
        %v520 = vld [vmem:[#allocation5 + $0x148] sm:$0xff]
        %v521 = vld [vmem:[#allocation5 + $0x150] sm:$0xff]
        %v522 = vld [vmem:[#allocation5 + $0x158] sm:$0xff]
        %v523 = vld [vmem:[#allocation5 + $0x160] sm:$0xff]
        %v524 = vld [vmem:[#allocation5 + $0x168] sm:$0xff]
        %v525 = vld [vmem:[#allocation5 + $0x170] sm:$0xff]
        %v526 = vld [vmem:[#allocation5 + $0x178] sm:$0xff]
        %v527 = vld [vmem:[#allocation5 + $0x180] sm:$0xff]
        %v528 = vld [vmem:[#allocation5 + $0x188] sm:$0xff]
        %v529 = vld [vmem:[#allocation5 + $0x190] sm:$0xff]
        %v530 = vld [vmem:[#allocation5 + $0x198] sm:$0xff]
        %v531 = vld [vmem:[#allocation5 + $0x1a0] sm:$0xff]
        %v532 = vld [vmem:[#allocation5 + $0x1a8] sm:$0xff]
        %v533 = vld [vmem:[#allocation5 + $0x1b0] sm:$0xff]
        %v534 = vld [vmem:[#allocation5 + $0x1b8] sm:$0xff]
        %v535 = vld [vmem:[#allocation5 + $0x1c0] sm:$0xff]
        %v536 = vld [vmem:[#allocation5 + $0x1c8] sm:$0xff]
        %v537 = vld [vmem:[#allocation5 + $0x1d0] sm:$0xff]
        %v538 = vld [vmem:[#allocation5 + $0x1d8] sm:$0xff]
        %v539 = vld [vmem:[#allocation5 + $0x1e0] sm:$0xff]
        %v540 = vld [vmem:[#allocation5 + $0x1e8] sm:$0xff]
        %v541 = vld [vmem:[#allocation5 + $0x1f0] sm:$0xff]
        %v542 = vld [vmem:[#allocation5 + $0x1f8] sm:$0xff]
        %v543 = vld [vmem:[#allocation5 + $0x200] sm:$0xff]
        %v544 = vld [vmem:[#allocation5 + $0x208] sm:$0xff]
        %v545 = vld [vmem:[#allocation5 + $0x210] sm:$0xff]
        %v546 = vld [vmem:[#allocation5 + $0x218] sm:$0xff]
        %v547 = vld [vmem:[#allocation5 + $0x220] sm:$0xff]
        %v548 = vld [vmem:[#allocation5 + $0x228] sm:$0xff]
        %v549 = vld [vmem:[#allocation5 + $0x230] sm:$0xff]
        %v550 = vld [vmem:[#allocation5 + $0x238] sm:$0xff]
        %v551 = vld [vmem:[#allocation5 + $0x240] sm:$0xff]
        %v552 = vld [vmem:[#allocation5 + $0x248] sm:$0xff]
        %v553 = vld [vmem:[#allocation5 + $0x250] sm:$0xff]
        %v554 = vld [vmem:[#allocation5 + $0x258] sm:$0xff]
        %v555 = vld [vmem:[#allocation5 + $0x260] sm:$0xff]
        %v556 = vld [vmem:[#allocation5 + $0x268] sm:$0xff]
        %v557 = vld [vmem:[#allocation5 + $0x270] sm:$0xff]
        %v558 = vld [vmem:[#allocation5 + $0x278] sm:$0xff]
        %v559 = vld [vmem:[#allocation5 + $0x280] sm:$0xff]
        %v560 = vld [vmem:[#allocation5 + $0x288] sm:$0xff]
        %v561 = vld [vmem:[#allocation5 + $0x290] sm:$0xff]
        %v562 = vld [vmem:[#allocation5 + $0x298] sm:$0xff]
        %v563 = vld [vmem:[#allocation5 + $0x2a0] sm:$0xff]
        %v564 = vld [vmem:[#allocation5 + $0x2a8] sm:$0xff]
        %v565 = vld [vmem:[#allocation5 + $0x2b0] sm:$0xff]
        %v566 = vld [vmem:[#allocation5 + $0x2b8] sm:$0xff]
        %v567 = vld [vmem:[#allocation5 + $0x2c0] sm:$0xff]
        %v568 = vld [vmem:[#allocation5 + $0x2c8] sm:$0xff]
        %v569 = vld [vmem:[#allocation5 + $0x2d0] sm:$0xff]
        %v570 = vld [vmem:[#allocation5 + $0x2d8] sm:$0xff]
        %v571 = vld [vmem:[#allocation5 + $0x2e0] sm:$0xff]
        %v572 = vld [vmem:[#allocation5 + $0x2e8] sm:$0xff]
        %v573 = vld [vmem:[#allocation5 + $0x2f0] sm:$0xff]
        %v574 = vld [vmem:[#allocation5 + $0x2f8] sm:$0xff]
        %v575 = vld [vmem:[#allocation5 + $0x300] sm:$0xff]
        %v576 = vld [vmem:[#allocation5 + $0x308] sm:$0xff]
        %v577 = vld [vmem:[#allocation5 + $0x310] sm:$0xff]
        %v578 = vld [vmem:[#allocation5 + $0x318] sm:$0xff]
        %v579 = vld [vmem:[#allocation5 + $0x320] sm:$0xff]
        %v580 = vld [vmem:[#allocation5 + $0x328] sm:$0xff]
        %v581 = vld [vmem:[#allocation5 + $0x330] sm:$0xff]
        %v582 = vld [vmem:[#allocation5 + $0x338] sm:$0xff]
        %v583 = vld [vmem:[#allocation5 + $0x340] sm:$0xff]
        %v584 = vld [vmem:[#allocation5 + $0x348] sm:$0xff]
        %v585 = vld [vmem:[#allocation5 + $0x350] sm:$0xff]
        %v586 = vld [vmem:[#allocation5 + $0x358] sm:$0xff]
        %v587 = vld [vmem:[#allocation5 + $0x360] sm:$0xff]
        %v588 = vld [vmem:[#allocation5 + $0x368] sm:$0xff]
        %v589 = vld [vmem:[#allocation5 + $0x370] sm:$0xff]
        %v590 = vld [vmem:[#allocation5 + $0x378] sm:$0xff]
        %v591 = vld [vmem:[#allocation5 + $0x380] sm:$0xff]
        %v592 = vld [vmem:[#allocation5 + $0x388] sm:$0xff]
        %v593 = vld [vmem:[#allocation5 + $0x390] sm:$0xff]
        %v594 = vld [vmem:[#allocation5 + $0x398] sm:$0xff]
        %v595 = vld [vmem:[#allocation5 + $0x3a0] sm:$0xff]
        %v596 = vld [vmem:[#allocation5 + $0x3a8] sm:$0xff]
        %v597 = vld [vmem:[#allocation5 + $0x3b0] sm:$0xff]
        %v598 = vld [vmem:[#allocation5 + $0x3b8] sm:$0xff]
        %v599 = vld [vmem:[#allocation5 + $0x3c0] sm:$0xff]
        %v600 = vld [vmem:[#allocation5 + $0x3c8] sm:$0xff]
        %v601 = vld [vmem:[#allocation5 + $0x3d0] sm:$0xff]
        %v602 = vld [vmem:[#allocation5 + $0x3d8] sm:$0xff]
        %v603 = vld [vmem:[#allocation5 + $0x3e0] sm:$0xff]
        %v604 = vld [vmem:[#allocation5 + $0x3e8] sm:$0xff]
        %v605 = vld [vmem:[#allocation5 + $0x3f0] sm:$0xff]
        %v606 = vld [vmem:[#allocation5 + $0x3f8] sm:$0xff]
        %v607 = vld [vmem:[#allocation5 + $0x400] sm:$0xff]
        %v608 = vld [vmem:[#allocation5 + $0x408] sm:$0xff]
        %v609 = vld [vmem:[#allocation5 + $0x410] sm:$0xff]
        %v610 = vld [vmem:[#allocation5 + $0x418] sm:$0xff]
        %v611 = vld [vmem:[#allocation5 + $0x420] sm:$0xff]
        %v612 = vld [vmem:[#allocation5 + $0x428] sm:$0xff]
        %v613 = vld [vmem:[#allocation5 + $0x430] sm:$0xff]
        %v614 = vld [vmem:[#allocation5 + $0x438] sm:$0xff]
        %v615 = vld [vmem:[#allocation5 + $0x440] sm:$0xff]
        %v616 = vld [vmem:[#allocation5 + $0x448] sm:$0xff]
        %v617 = vld [vmem:[#allocation5 + $0x450] sm:$0xff]
        %v618 = vld [vmem:[#allocation5 + $0x458] sm:$0xff]
        %v619 = vld [vmem:[#allocation5 + $0x460] sm:$0xff]
        %v620 = vld [vmem:[#allocation5 + $0x468] sm:$0xff]
        %v621 = vld [vmem:[#allocation5 + $0x470] sm:$0xff]
        %v622 = vld [vmem:[#allocation5 + $0x478] sm:$0xff]
        %v623 = vld [vmem:[#allocation5 + $0x480] sm:$0xff]
        %v624 = vld [vmem:[#allocation5 + $0x488] sm:$0xff]
        %v625 = vld [vmem:[#allocation5 + $0x490] sm:$0xff]
        %v626 = vld [vmem:[#allocation5 + $0x498] sm:$0xff]
        %v627 = vld [vmem:[#allocation5 + $0x4a0] sm:$0xff]
        %v628 = vld [vmem:[#allocation5 + $0x4a8] sm:$0xff]
        %v629 = vld [vmem:[#allocation5 + $0x4b0] sm:$0xff]
        %v630 = vld [vmem:[#allocation5 + $0x4b8] sm:$0xff]
        %v631 = vld [vmem:[#allocation5 + $0x4c0] sm:$0xff]
        %v632 = vld [vmem:[#allocation5 + $0x4c8] sm:$0xff]
        %v633 = vld [vmem:[#allocation5 + $0x4d0] sm:$0xff]
        %v634 = vld [vmem:[#allocation5 + $0x4d8] sm:$0xff]
        %v635 = vld [vmem:[#allocation5 + $0x4e0] sm:$0xff]
        %v636 = vld [vmem:[#allocation5 + $0x4e8] sm:$0xff]
        %v637 = vld [vmem:[#allocation5 + $0x4f0] sm:$0xff]
        %v638 = vld [vmem:[#allocation5 + $0x4f8] sm:$0xff]
        %v639 = vld [vmem:[#allocation5 + $0x500] sm:$0xff]
        %v640 = vld [vmem:[#allocation5 + $0x508] sm:$0xff]
        %v641 = vld [vmem:[#allocation5 + $0x510] sm:$0xff]
        %v642 = vld [vmem:[#allocation5 + $0x518] sm:$0xff]
        %v643 = vld [vmem:[#allocation5 + $0x520] sm:$0xff]
        %v644 = vld [vmem:[#allocation5 + $0x528] sm:$0xff]
        %v645 = vld [vmem:[#allocation5 + $0x530] sm:$0xff]
        %v646 = vld [vmem:[#allocation5 + $0x538] sm:$0xff]
        %v647 = vld [vmem:[#allocation5 + $0x540] sm:$0xff]
        %v648 = vld [vmem:[#allocation5 + $0x548] sm:$0xff]
        %v649 = vld [vmem:[#allocation5 + $0x550] sm:$0xff]
        %v650 = vld [vmem:[#allocation5 + $0x558] sm:$0xff]
        %v651 = vld [vmem:[#allocation5 + $0x560] sm:$0xff]
        %v652 = vld [vmem:[#allocation5 + $0x568] sm:$0xff]
        %v653 = vld [vmem:[#allocation5 + $0x570] sm:$0xff]
        %v654 = vld [vmem:[#allocation5 + $0x578] sm:$0xff]
        %v655 = vld [vmem:[#allocation5 + $0x580] sm:$0xff]
        %v656 = vld [vmem:[#allocation5 + $0x588] sm:$0xff]
        %v657 = vld [vmem:[#allocation5 + $0x590] sm:$0xff]
        %v658 = vld [vmem:[#allocation5 + $0x598] sm:$0xff]
        %v659 = vld [vmem:[#allocation5 + $0x5a0] sm:$0xff]
        %v660 = vld [vmem:[#allocation5 + $0x5a8] sm:$0xff]
        %v661 = vld [vmem:[#allocation5 + $0x5b0] sm:$0xff]
        %v662 = vld [vmem:[#allocation5 + $0x5b8] sm:$0xff]
        %v663 = vld [vmem:[#allocation5 + $0x5c0] sm:$0xff]
        %v664 = vld [vmem:[#allocation5 + $0x5c8] sm:$0xff]
        %v665 = vld [vmem:[#allocation5 + $0x5d0] sm:$0xff]
        %v666 = vld [vmem:[#allocation5 + $0x5d8] sm:$0xff]
        %v667 = vld [vmem:[#allocation5 + $0x5e0] sm:$0xff]
        %v668 = vld [vmem:[#allocation5 + $0x5e8] sm:$0xff]
        %v669 = vld [vmem:[#allocation5 + $0x5f0] sm:$0xff]
        %v670 = vld [vmem:[#allocation5 + $0x5f8] sm:$0xff]
        %v671 = vld [vmem:[#allocation5 + $0x600] sm:$0xff]
        %v672 = vld [vmem:[#allocation5 + $0x608] sm:$0xff]
        %v673 = vld [vmem:[#allocation5 + $0x610] sm:$0xff]
        %v674 = vld [vmem:[#allocation5 + $0x618] sm:$0xff]
        %v675 = vld [vmem:[#allocation5 + $0x620] sm:$0xff]
        %v676 = vld [vmem:[#allocation5 + $0x628] sm:$0xff]
        %v677 = vld [vmem:[#allocation5 + $0x630] sm:$0xff]
        %v678 = vld [vmem:[#allocation5 + $0x638] sm:$0xff]
        %v679 = vld [vmem:[#allocation5 + $0x640] sm:$0xff]
        %v680 = vld [vmem:[#allocation5 + $0x648] sm:$0xff]
        %v681 = vld [vmem:[#allocation5 + $0x650] sm:$0xff]
        %v682 = vld [vmem:[#allocation5 + $0x658] sm:$0xff]
        %v683 = vld [vmem:[#allocation5 + $0x660] sm:$0xff]
        %v684 = vld [vmem:[#allocation5 + $0x668] sm:$0xff]
        %v685 = vld [vmem:[#allocation5 + $0x670] sm:$0xff]
        %v686 = vld [vmem:[#allocation5 + $0x678] sm:$0xff]
        %v687 = vld [vmem:[#allocation5 + $0x680] sm:$0xff]
        %v688 = vld [vmem:[#allocation5 + $0x688] sm:$0xff]
        %v689 = vld [vmem:[#allocation5 + $0x690] sm:$0xff]
        %v690 = vld [vmem:[#allocation5 + $0x698] sm:$0xff]
        %v691 = vld [vmem:[#allocation5 + $0x6a0] sm:$0xff]
        %v692 = vld [vmem:[#allocation5 + $0x6a8] sm:$0xff]
        %v693 = vld [vmem:[#allocation5 + $0x6b0] sm:$0xff]
        %v694 = vld [vmem:[#allocation5 + $0x6b8] sm:$0xff]
        %v695 = vld [vmem:[#allocation5 + $0x6c0] sm:$0xff]
        %v696 = vld [vmem:[#allocation5 + $0x6c8] sm:$0xff]
        %v697 = vld [vmem:[#allocation5 + $0x6d0] sm:$0xff]
        %v698 = vld [vmem:[#allocation5 + $0x6d8] sm:$0xff]
        %v699 = vld [vmem:[#allocation5 + $0x6e0] sm:$0xff]
        %v700 = vld [vmem:[#allocation5 + $0x6e8] sm:$0xff]
        %v701 = vld [vmem:[#allocation5 + $0x6f0] sm:$0xff]
        %v702 = vld [vmem:[#allocation5 + $0x6f8] sm:$0xff]
        %v703 = vld [vmem:[#allocation5 + $0x700] sm:$0xff]
        %v704 = vld [vmem:[#allocation5 + $0x708] sm:$0xff]
        %v705 = vld [vmem:[#allocation5 + $0x710] sm:$0xff]
        %v706 = vld [vmem:[#allocation5 + $0x718] sm:$0xff]
        %v707 = vld [vmem:[#allocation5 + $0x720] sm:$0xff]
        %v708 = vld [vmem:[#allocation5 + $0x728] sm:$0xff]
        %v709 = vld [vmem:[#allocation5 + $0x730] sm:$0xff]
        %v710 = vld [vmem:[#allocation5 + $0x738] sm:$0xff]
        %v711 = vld [vmem:[#allocation5 + $0x740] sm:$0xff]
        %v712 = vld [vmem:[#allocation5 + $0x748] sm:$0xff]
        %v713 = vld [vmem:[#allocation5 + $0x750] sm:$0xff]
        %v714 = vld [vmem:[#allocation5 + $0x758] sm:$0xff]
        %v715 = vld [vmem:[#allocation5 + $0x760] sm:$0xff]
        %v716 = vld [vmem:[#allocation5 + $0x768] sm:$0xff]
        %v717 = vld [vmem:[#allocation5 + $0x770] sm:$0xff]
        %v718 = vld [vmem:[#allocation5 + $0x778] sm:$0xff]
        %v719 = vld [vmem:[#allocation5 + $0x780] sm:$0xff]
        %v720 = vld [vmem:[#allocation5 + $0x788] sm:$0xff]
        %v721 = vld [vmem:[#allocation5 + $0x790] sm:$0xff]
        %v722 = vld [vmem:[#allocation5 + $0x798] sm:$0xff]
        %v723 = vld [vmem:[#allocation5 + $0x7a0] sm:$0xff]
        %v724 = vld [vmem:[#allocation5 + $0x7a8] sm:$0xff]
        %v725 = vld [vmem:[#allocation5 + $0x7b0] sm:$0xff]
        %v726 = vld [vmem:[#allocation5 + $0x7b8] sm:$0xff]
        %v727 = vld [vmem:[#allocation5 + $0x7c0] sm:$0xff]
        %v728 = vld [vmem:[#allocation5 + $0x7c8] sm:$0xff]
        %v729 = vld [vmem:[#allocation5 + $0x7d0] sm:$0xff]
        %v730 = vld [vmem:[#allocation5 + $0x7d8] sm:$0xff]
        %v731 = vld [vmem:[#allocation5 + $0x7e0] sm:$0xff]
        %v732 = vld [vmem:[#allocation5 + $0x7e8] sm:$0xff]
        %v733 = vld [vmem:[#allocation5 + $0x7f0] sm:$0xff]
        %v734 = vld [vmem:[#allocation5 + $0x7f8] sm:$0xff]
        %v735 = vld [vmem:[#allocation7] sm:$0xf]
        %v737 = vperm.slane %v735, 0
        %v738 = vperm.slane %v735, 1
        %v739 = vperm.slane %v735, 2
        %v740 = vperm.slane %v735, 3
        %v1001 = vunpack.c.l.b16 %v479
        %v1002 = vunpack.c.h.b16 %v479
        %v1003 = vunpack.c.l.b16 %v480
        %v1004 = vunpack.c.h.b16 %v480
        %v1005 = vunpack.c.l.b16 %v481
        %v1006 = vunpack.c.h.b16 %v481
        %v1007 = vunpack.c.l.b16 %v482
        %v1008 = vunpack.c.h.b16 %v482
        %v1009 = vunpack.c.l.b16 %v483
        %v1010 = vunpack.c.h.b16 %v483
        %v1011 = vunpack.c.l.b16 %v484
        %v1012 = vunpack.c.h.b16 %v484
        %v1013 = vunpack.c.l.b16 %v485
        %v1014 = vunpack.c.h.b16 %v485
        %v1015 = vunpack.c.l.b16 %v486
        %v1016 = vunpack.c.h.b16 %v486
        %v1017 = vunpack.c.l.b16 %v487
        %v1018 = vunpack.c.h.b16 %v487
        %v1019 = vunpack.c.l.b16 %v488
        %v1020 = vunpack.c.h.b16 %v488
        %v1021 = vunpack.c.l.b16 %v489
        %v1022 = vunpack.c.h.b16 %v489
        %v1023 = vunpack.c.l.b16 %v490
        %v1024 = vunpack.c.h.b16 %v490
        %v1025 = vunpack.c.l.b16 %v491
        %v1026 = vunpack.c.h.b16 %v491
        %v1027 = vunpack.c.l.b16 %v492
        %v1028 = vunpack.c.h.b16 %v492
        %v1029 = vunpack.c.l.b16 %v493
        %v1030 = vunpack.c.h.b16 %v493
        %v1031 = vunpack.c.l.b16 %v494
        %v1032 = vunpack.c.h.b16 %v494
        %v1033 = vunpack.c.l.b16 %v495
        %v1034 = vunpack.c.h.b16 %v495
        %v1035 = vunpack.c.l.b16 %v496
        %v1036 = vunpack.c.h.b16 %v496
        %v1037 = vunpack.c.l.b16 %v497
        %v1038 = vunpack.c.h.b16 %v497
        %v1039 = vunpack.c.l.b16 %v498
        %v1040 = vunpack.c.h.b16 %v498
        %v1041 = vunpack.c.l.b16 %v499
        %v1042 = vunpack.c.h.b16 %v499
        %v1043 = vunpack.c.l.b16 %v500
        %v1044 = vunpack.c.h.b16 %v500
        %v1045 = vunpack.c.l.b16 %v501
        %v1046 = vunpack.c.h.b16 %v501
        %v1047 = vunpack.c.l.b16 %v502
        %v1048 = vunpack.c.h.b16 %v502
        %v1049 = vunpack.c.l.b16 %v503
        %v1050 = vunpack.c.h.b16 %v503
        %v1051 = vunpack.c.l.b16 %v504
        %v1052 = vunpack.c.h.b16 %v504
        %v1053 = vunpack.c.l.b16 %v505
        %v1054 = vunpack.c.h.b16 %v505
        %v1055 = vunpack.c.l.b16 %v506
        %v1056 = vunpack.c.h.b16 %v506
        %v1057 = vunpack.c.l.b16 %v507
        %v1058 = vunpack.c.h.b16 %v507
        %v1059 = vunpack.c.l.b16 %v508
        %v1060 = vunpack.c.h.b16 %v508
        %v1061 = vunpack.c.l.b16 %v509
        %v1062 = vunpack.c.h.b16 %v509
        %v1063 = vunpack.c.l.b16 %v510
        %v1064 = vunpack.c.h.b16 %v510
        %v1065 = vunpack.c.l.b16 %v511
        %v1066 = vunpack.c.h.b16 %v511
        %v1067 = vunpack.c.l.b16 %v512
        %v1068 = vunpack.c.h.b16 %v512
        %v1069 = vunpack.c.l.b16 %v513
        %v1070 = vunpack.c.h.b16 %v513
        %v1071 = vunpack.c.l.b16 %v514
        %v1072 = vunpack.c.h.b16 %v514
        %v1073 = vunpack.c.l.b16 %v515
        %v1074 = vunpack.c.h.b16 %v515
        %v1075 = vunpack.c.l.b16 %v516
        %v1076 = vunpack.c.h.b16 %v516
        %v1077 = vunpack.c.l.b16 %v517
        %v1078 = vunpack.c.h.b16 %v517
        %v1079 = vunpack.c.l.b16 %v518
        %v1080 = vunpack.c.h.b16 %v518
        %v1081 = vunpack.c.l.b16 %v519
        %v1082 = vunpack.c.h.b16 %v519
        %v1083 = vunpack.c.l.b16 %v520
        %v1084 = vunpack.c.h.b16 %v520
        %v1085 = vunpack.c.l.b16 %v521
        %v1086 = vunpack.c.h.b16 %v521
        %v1087 = vunpack.c.l.b16 %v522
        %v1088 = vunpack.c.h.b16 %v522
        %v1089 = vunpack.c.l.b16 %v523
        %v1090 = vunpack.c.h.b16 %v523
        %v1091 = vunpack.c.l.b16 %v524
        %v1092 = vunpack.c.h.b16 %v524
        %v1093 = vunpack.c.l.b16 %v525
        %v1094 = vunpack.c.h.b16 %v525
        %v1095 = vunpack.c.l.b16 %v526
        %v1096 = vunpack.c.h.b16 %v526
        %v1097 = vunpack.c.l.b16 %v527
        %v1098 = vunpack.c.h.b16 %v527
        %v1099 = vunpack.c.l.b16 %v528
        %v1100 = vunpack.c.h.b16 %v528
        %v1101 = vunpack.c.l.b16 %v529
        %v1102 = vunpack.c.h.b16 %v529
        %v1103 = vunpack.c.l.b16 %v530
        %v1104 = vunpack.c.h.b16 %v530
        %v1105 = vunpack.c.l.b16 %v531
        %v1106 = vunpack.c.h.b16 %v531
        %v1107 = vunpack.c.l.b16 %v532
        %v1108 = vunpack.c.h.b16 %v532
        %v1109 = vunpack.c.l.b16 %v533
        %v1110 = vunpack.c.h.b16 %v533
        %v1111 = vunpack.c.l.b16 %v534
        %v1112 = vunpack.c.h.b16 %v534
        %v1113 = vunpack.c.l.b16 %v535
        %v1114 = vunpack.c.h.b16 %v535
        %v1115 = vunpack.c.l.b16 %v536
        %v1116 = vunpack.c.h.b16 %v536
        %v1117 = vunpack.c.l.b16 %v537
        %v1118 = vunpack.c.h.b16 %v537
        %v1119 = vunpack.c.l.b16 %v538
        %v1120 = vunpack.c.h.b16 %v538
        %v1121 = vunpack.c.l.b16 %v539
        %v1122 = vunpack.c.h.b16 %v539
        %v1123 = vunpack.c.l.b16 %v540
        %v1124 = vunpack.c.h.b16 %v540
        %v1125 = vunpack.c.l.b16 %v541
        %v1126 = vunpack.c.h.b16 %v541
        %v1127 = vunpack.c.l.b16 %v542
        %v1128 = vunpack.c.h.b16 %v542
        %v1129 = vunpack.c.l.b16 %v543
        %v1130 = vunpack.c.h.b16 %v543
        %v1131 = vunpack.c.l.b16 %v544
        %v1132 = vunpack.c.h.b16 %v544
        %v1133 = vunpack.c.l.b16 %v545
        %v1134 = vunpack.c.h.b16 %v545
        %v1135 = vunpack.c.l.b16 %v546
        %v1136 = vunpack.c.h.b16 %v546
        %v1137 = vunpack.c.l.b16 %v547
        %v1138 = vunpack.c.h.b16 %v547
        %v1139 = vunpack.c.l.b16 %v548
        %v1140 = vunpack.c.h.b16 %v548
        %v1141 = vunpack.c.l.b16 %v549
        %v1142 = vunpack.c.h.b16 %v549
        %v1143 = vunpack.c.l.b16 %v550
        %v1144 = vunpack.c.h.b16 %v550
        %v1145 = vunpack.c.l.b16 %v551
        %v1146 = vunpack.c.h.b16 %v551
        %v1147 = vunpack.c.l.b16 %v552
        %v1148 = vunpack.c.h.b16 %v552
        %v1149 = vunpack.c.l.b16 %v553
        %v1150 = vunpack.c.h.b16 %v553
        %v1151 = vunpack.c.l.b16 %v554
        %v1152 = vunpack.c.h.b16 %v554
        %v1153 = vunpack.c.l.b16 %v555
        %v1154 = vunpack.c.h.b16 %v555
        %v1155 = vunpack.c.l.b16 %v556
        %v1156 = vunpack.c.h.b16 %v556
        %v1157 = vunpack.c.l.b16 %v557
        %v1158 = vunpack.c.h.b16 %v557
        %v1159 = vunpack.c.l.b16 %v558
        %v1160 = vunpack.c.h.b16 %v558
        %v1161 = vunpack.c.l.b16 %v559
        %v1162 = vunpack.c.h.b16 %v559
        %v1163 = vunpack.c.l.b16 %v560
        %v1164 = vunpack.c.h.b16 %v560
        %v1165 = vunpack.c.l.b16 %v561
        %v1166 = vunpack.c.h.b16 %v561
        %v1167 = vunpack.c.l.b16 %v562
        %v1168 = vunpack.c.h.b16 %v562
        %v1169 = vunpack.c.l.b16 %v563
        %v1170 = vunpack.c.h.b16 %v563
        %v1171 = vunpack.c.l.b16 %v564
        %v1172 = vunpack.c.h.b16 %v564
        %v1173 = vunpack.c.l.b16 %v565
        %v1174 = vunpack.c.h.b16 %v565
        %v1175 = vunpack.c.l.b16 %v566
        %v1176 = vunpack.c.h.b16 %v566
        %v1177 = vunpack.c.l.b16 %v567
        %v1178 = vunpack.c.h.b16 %v567
        %v1179 = vunpack.c.l.b16 %v568
        %v1180 = vunpack.c.h.b16 %v568
        %v1181 = vunpack.c.l.b16 %v569
        %v1182 = vunpack.c.h.b16 %v569
        %v1183 = vunpack.c.l.b16 %v570
        %v1184 = vunpack.c.h.b16 %v570
        %v1185 = vunpack.c.l.b16 %v571
        %v1186 = vunpack.c.h.b16 %v571
        %v1187 = vunpack.c.l.b16 %v572
        %v1188 = vunpack.c.h.b16 %v572
        %v1189 = vunpack.c.l.b16 %v573
        %v1190 = vunpack.c.h.b16 %v573
        %v1191 = vunpack.c.l.b16 %v574
        %v1192 = vunpack.c.h.b16 %v574
        %v1193 = vunpack.c.l.b16 %v575
        %v1194 = vunpack.c.h.b16 %v575
        %v1195 = vunpack.c.l.b16 %v576
        %v1196 = vunpack.c.h.b16 %v576
        %v1197 = vunpack.c.l.b16 %v577
        %v1198 = vunpack.c.h.b16 %v577
        %v1199 = vunpack.c.l.b16 %v578
        %v1200 = vunpack.c.h.b16 %v578
        %v1201 = vunpack.c.l.b16 %v579
        %v1202 = vunpack.c.h.b16 %v579
        %v1203 = vunpack.c.l.b16 %v580
        %v1204 = vunpack.c.h.b16 %v580
        %v1205 = vunpack.c.l.b16 %v581
        %v1206 = vunpack.c.h.b16 %v581
        %v1207 = vunpack.c.l.b16 %v582
        %v1208 = vunpack.c.h.b16 %v582
        %v1209 = vunpack.c.l.b16 %v583
        %v1210 = vunpack.c.h.b16 %v583
        %v1211 = vunpack.c.l.b16 %v584
        %v1212 = vunpack.c.h.b16 %v584
        %v1213 = vunpack.c.l.b16 %v585
        %v1214 = vunpack.c.h.b16 %v585
        %v1215 = vunpack.c.l.b16 %v586
        %v1216 = vunpack.c.h.b16 %v586
        %v1217 = vunpack.c.l.b16 %v587
        %v1218 = vunpack.c.h.b16 %v587
        %v1219 = vunpack.c.l.b16 %v588
        %v1220 = vunpack.c.h.b16 %v588
        %v1221 = vunpack.c.l.b16 %v589
        %v1222 = vunpack.c.h.b16 %v589
        %v1223 = vunpack.c.l.b16 %v590
        %v1224 = vunpack.c.h.b16 %v590
        %v1225 = vunpack.c.l.b16 %v591
        %v1226 = vunpack.c.h.b16 %v591
        %v1227 = vunpack.c.l.b16 %v592
        %v1228 = vunpack.c.h.b16 %v592
        %v1229 = vunpack.c.l.b16 %v593
        %v1230 = vunpack.c.h.b16 %v593
        %v1231 = vunpack.c.l.b16 %v594
        %v1232 = vunpack.c.h.b16 %v594
        %v1233 = vunpack.c.l.b16 %v595
        %v1234 = vunpack.c.h.b16 %v595
        %v1235 = vunpack.c.l.b16 %v596
        %v1236 = vunpack.c.h.b16 %v596
        %v1237 = vunpack.c.l.b16 %v597
        %v1238 = vunpack.c.h.b16 %v597
        %v1239 = vunpack.c.l.b16 %v598
        %v1240 = vunpack.c.h.b16 %v598
        %v1241 = vunpack.c.l.b16 %v599
        %v1242 = vunpack.c.h.b16 %v599
        %v1243 = vunpack.c.l.b16 %v600
        %v1244 = vunpack.c.h.b16 %v600
        %v1245 = vunpack.c.l.b16 %v601
        %v1246 = vunpack.c.h.b16 %v601
        %v1247 = vunpack.c.l.b16 %v602
        %v1248 = vunpack.c.h.b16 %v602
        %v1249 = vunpack.c.l.b16 %v603
        %v1250 = vunpack.c.h.b16 %v603
        %v1251 = vunpack.c.l.b16 %v604
        %v1252 = vunpack.c.h.b16 %v604
        %v1253 = vunpack.c.l.b16 %v605
        %v1254 = vunpack.c.h.b16 %v605
        %v1255 = vunpack.c.l.b16 %v606
        %v1256 = vunpack.c.h.b16 %v606
        %v1257 = vunpack.c.l.b16 %v607
        %v1258 = vunpack.c.h.b16 %v607
        %v1259 = vunpack.c.l.b16 %v608
        %v1260 = vunpack.c.h.b16 %v608
        %v1261 = vunpack.c.l.b16 %v609
        %v1262 = vunpack.c.h.b16 %v609
        %v1263 = vunpack.c.l.b16 %v610
        %v1264 = vunpack.c.h.b16 %v610
        %v1265 = vunpack.c.l.b16 %v611
        %v1266 = vunpack.c.h.b16 %v611
        %v1267 = vunpack.c.l.b16 %v612
        %v1268 = vunpack.c.h.b16 %v612
        %v1269 = vunpack.c.l.b16 %v613
        %v1270 = vunpack.c.h.b16 %v613
        %v1271 = vunpack.c.l.b16 %v614
        %v1272 = vunpack.c.h.b16 %v614
        %v1273 = vunpack.c.l.b16 %v615
        %v1274 = vunpack.c.h.b16 %v615
        %v1275 = vunpack.c.l.b16 %v616
        %v1276 = vunpack.c.h.b16 %v616
        %v1277 = vunpack.c.l.b16 %v617
        %v1278 = vunpack.c.h.b16 %v617
        %v1279 = vunpack.c.l.b16 %v618
        %v1280 = vunpack.c.h.b16 %v618
        %v1281 = vunpack.c.l.b16 %v619
        %v1282 = vunpack.c.h.b16 %v619
        %v1283 = vunpack.c.l.b16 %v620
        %v1284 = vunpack.c.h.b16 %v620
        %v1285 = vunpack.c.l.b16 %v621
        %v1286 = vunpack.c.h.b16 %v621
        %v1287 = vunpack.c.l.b16 %v622
        %v1288 = vunpack.c.h.b16 %v622
        %v1289 = vunpack.c.l.b16 %v623
        %v1290 = vunpack.c.h.b16 %v623
        %v1291 = vunpack.c.l.b16 %v624
        %v1292 = vunpack.c.h.b16 %v624
        %v1293 = vunpack.c.l.b16 %v625
        %v1294 = vunpack.c.h.b16 %v625
        %v1295 = vunpack.c.l.b16 %v626
        %v1296 = vunpack.c.h.b16 %v626
        %v1297 = vunpack.c.l.b16 %v627
        %v1298 = vunpack.c.h.b16 %v627
        %v1299 = vunpack.c.l.b16 %v628
        %v1300 = vunpack.c.h.b16 %v628
        %v1301 = vunpack.c.l.b16 %v629
        %v1302 = vunpack.c.h.b16 %v629
        %v1303 = vunpack.c.l.b16 %v630
        %v1304 = vunpack.c.h.b16 %v630
        %v1305 = vunpack.c.l.b16 %v631
        %v1306 = vunpack.c.h.b16 %v631
        %v1307 = vunpack.c.l.b16 %v632
        %v1308 = vunpack.c.h.b16 %v632
        %v1309 = vunpack.c.l.b16 %v633
        %v1310 = vunpack.c.h.b16 %v633
        %v1311 = vunpack.c.l.b16 %v634
        %v1312 = vunpack.c.h.b16 %v634
        %v1313 = vunpack.c.l.b16 %v635
        %v1314 = vunpack.c.h.b16 %v635
        %v1315 = vunpack.c.l.b16 %v636
        %v1316 = vunpack.c.h.b16 %v636
        %v1317 = vunpack.c.l.b16 %v637
        %v1318 = vunpack.c.h.b16 %v637
        %v1319 = vunpack.c.l.b16 %v638
        %v1320 = vunpack.c.h.b16 %v638
        %v1321 = vunpack.c.l.b16 %v639
        %v1322 = vunpack.c.h.b16 %v639
        %v1323 = vunpack.c.l.b16 %v640
        %v1324 = vunpack.c.h.b16 %v640
        %v1325 = vunpack.c.l.b16 %v641
        %v1326 = vunpack.c.h.b16 %v641
        %v1327 = vunpack.c.l.b16 %v642
        %v1328 = vunpack.c.h.b16 %v642
        %v1329 = vunpack.c.l.b16 %v643
        %v1330 = vunpack.c.h.b16 %v643
        %v1331 = vunpack.c.l.b16 %v644
        %v1332 = vunpack.c.h.b16 %v644
        %v1333 = vunpack.c.l.b16 %v645
        %v1334 = vunpack.c.h.b16 %v645
        %v1335 = vunpack.c.l.b16 %v646
        %v1336 = vunpack.c.h.b16 %v646
        %v1337 = vunpack.c.l.b16 %v647
        %v1338 = vunpack.c.h.b16 %v647
        %v1339 = vunpack.c.l.b16 %v648
        %v1340 = vunpack.c.h.b16 %v648
        %v1341 = vunpack.c.l.b16 %v649
        %v1342 = vunpack.c.h.b16 %v649
        %v1343 = vunpack.c.l.b16 %v650
        %v1344 = vunpack.c.h.b16 %v650
        %v1345 = vunpack.c.l.b16 %v651
        %v1346 = vunpack.c.h.b16 %v651
        %v1347 = vunpack.c.l.b16 %v652
        %v1348 = vunpack.c.h.b16 %v652
        %v1349 = vunpack.c.l.b16 %v653
        %v1350 = vunpack.c.h.b16 %v653
        %v1351 = vunpack.c.l.b16 %v654
        %v1352 = vunpack.c.h.b16 %v654
        %v1353 = vunpack.c.l.b16 %v655
        %v1354 = vunpack.c.h.b16 %v655
        %v1355 = vunpack.c.l.b16 %v656
        %v1356 = vunpack.c.h.b16 %v656
        %v1357 = vunpack.c.l.b16 %v657
        %v1358 = vunpack.c.h.b16 %v657
        %v1359 = vunpack.c.l.b16 %v658
        %v1360 = vunpack.c.h.b16 %v658
        %v1361 = vunpack.c.l.b16 %v659
        %v1362 = vunpack.c.h.b16 %v659
        %v1363 = vunpack.c.l.b16 %v660
        %v1364 = vunpack.c.h.b16 %v660
        %v1365 = vunpack.c.l.b16 %v661
        %v1366 = vunpack.c.h.b16 %v661
        %v1367 = vunpack.c.l.b16 %v662
        %v1368 = vunpack.c.h.b16 %v662
        %v1369 = vunpack.c.l.b16 %v663
        %v1370 = vunpack.c.h.b16 %v663
        %v1371 = vunpack.c.l.b16 %v664
        %v1372 = vunpack.c.h.b16 %v664
        %v1373 = vunpack.c.l.b16 %v665
        %v1374 = vunpack.c.h.b16 %v665
        %v1375 = vunpack.c.l.b16 %v666
        %v1376 = vunpack.c.h.b16 %v666
        %v1377 = vunpack.c.l.b16 %v667
        %v1378 = vunpack.c.h.b16 %v667
        %v1379 = vunpack.c.l.b16 %v668
        %v1380 = vunpack.c.h.b16 %v668
        %v1381 = vunpack.c.l.b16 %v669
        %v1382 = vunpack.c.h.b16 %v669
        %v1383 = vunpack.c.l.b16 %v670
        %v1384 = vunpack.c.h.b16 %v670
        %v1385 = vunpack.c.l.b16 %v671
        %v1386 = vunpack.c.h.b16 %v671
        %v1387 = vunpack.c.l.b16 %v672
        %v1388 = vunpack.c.h.b16 %v672
        %v1389 = vunpack.c.l.b16 %v673
        %v1390 = vunpack.c.h.b16 %v673
        %v1391 = vunpack.c.l.b16 %v674
        %v1392 = vunpack.c.h.b16 %v674
        %v1393 = vunpack.c.l.b16 %v675
        %v1394 = vunpack.c.h.b16 %v675
        %v1395 = vunpack.c.l.b16 %v676
        %v1396 = vunpack.c.h.b16 %v676
        %v1397 = vunpack.c.l.b16 %v677
        %v1398 = vunpack.c.h.b16 %v677
        %v1399 = vunpack.c.l.b16 %v678
        %v1400 = vunpack.c.h.b16 %v678
        %v1401 = vunpack.c.l.b16 %v679
        %v1402 = vunpack.c.h.b16 %v679
        %v1403 = vunpack.c.l.b16 %v680
        %v1404 = vunpack.c.h.b16 %v680
        %v1405 = vunpack.c.l.b16 %v681
        %v1406 = vunpack.c.h.b16 %v681
        %v1407 = vunpack.c.l.b16 %v682
        %v1408 = vunpack.c.h.b16 %v682
        %v1409 = vunpack.c.l.b16 %v683
        %v1410 = vunpack.c.h.b16 %v683
        %v1411 = vunpack.c.l.b16 %v684
        %v1412 = vunpack.c.h.b16 %v684
        %v1413 = vunpack.c.l.b16 %v685
        %v1414 = vunpack.c.h.b16 %v685
        %v1415 = vunpack.c.l.b16 %v686
        %v1416 = vunpack.c.h.b16 %v686
        %v1417 = vunpack.c.l.b16 %v687
        %v1418 = vunpack.c.h.b16 %v687
        %v1419 = vunpack.c.l.b16 %v688
        %v1420 = vunpack.c.h.b16 %v688
        %v1421 = vunpack.c.l.b16 %v689
        %v1422 = vunpack.c.h.b16 %v689
        %v1423 = vunpack.c.l.b16 %v690
        %v1424 = vunpack.c.h.b16 %v690
        %v1425 = vunpack.c.l.b16 %v691
        %v1426 = vunpack.c.h.b16 %v691
        %v1427 = vunpack.c.l.b16 %v692
        %v1428 = vunpack.c.h.b16 %v692
        %v1429 = vunpack.c.l.b16 %v693
        %v1430 = vunpack.c.h.b16 %v693
        %v1431 = vunpack.c.l.b16 %v694
        %v1432 = vunpack.c.h.b16 %v694
        %v1433 = vunpack.c.l.b16 %v695
        %v1434 = vunpack.c.h.b16 %v695
        %v1435 = vunpack.c.l.b16 %v696
        %v1436 = vunpack.c.h.b16 %v696
        %v1437 = vunpack.c.l.b16 %v697
        %v1438 = vunpack.c.h.b16 %v697
        %v1439 = vunpack.c.l.b16 %v698
        %v1440 = vunpack.c.h.b16 %v698
        %v1441 = vunpack.c.l.b16 %v699
        %v1442 = vunpack.c.h.b16 %v699
        %v1443 = vunpack.c.l.b16 %v700
        %v1444 = vunpack.c.h.b16 %v700
        %v1445 = vunpack.c.l.b16 %v701
        %v1446 = vunpack.c.h.b16 %v701
        %v1447 = vunpack.c.l.b16 %v702
        %v1448 = vunpack.c.h.b16 %v702
        %v1449 = vunpack.c.l.b16 %v703
        %v1450 = vunpack.c.h.b16 %v703
        %v1451 = vunpack.c.l.b16 %v704
        %v1452 = vunpack.c.h.b16 %v704
        %v1453 = vunpack.c.l.b16 %v705
        %v1454 = vunpack.c.h.b16 %v705
        %v1455 = vunpack.c.l.b16 %v706
        %v1456 = vunpack.c.h.b16 %v706
        %v1457 = vunpack.c.l.b16 %v707
        %v1458 = vunpack.c.h.b16 %v707
        %v1459 = vunpack.c.l.b16 %v708
        %v1460 = vunpack.c.h.b16 %v708
        %v1461 = vunpack.c.l.b16 %v709
        %v1462 = vunpack.c.h.b16 %v709
        %v1463 = vunpack.c.l.b16 %v710
        %v1464 = vunpack.c.h.b16 %v710
        %v1465 = vunpack.c.l.b16 %v711
        %v1466 = vunpack.c.h.b16 %v711
        %v1467 = vunpack.c.l.b16 %v712
        %v1468 = vunpack.c.h.b16 %v712
        %v1469 = vunpack.c.l.b16 %v713
        %v1470 = vunpack.c.h.b16 %v713
        %v1471 = vunpack.c.l.b16 %v714
        %v1472 = vunpack.c.h.b16 %v714
        %v1473 = vunpack.c.l.b16 %v715
        %v1474 = vunpack.c.h.b16 %v715
        %v1475 = vunpack.c.l.b16 %v716
        %v1476 = vunpack.c.h.b16 %v716
        %v1477 = vunpack.c.l.b16 %v717
        %v1478 = vunpack.c.h.b16 %v717
        %v1479 = vunpack.c.l.b16 %v718
        %v1480 = vunpack.c.h.b16 %v718
        %v1481 = vunpack.c.l.b16 %v719
        %v1482 = vunpack.c.h.b16 %v719
        %v1483 = vunpack.c.l.b16 %v720
        %v1484 = vunpack.c.h.b16 %v720
        %v1485 = vunpack.c.l.b16 %v721
        %v1486 = vunpack.c.h.b16 %v721
        %v1487 = vunpack.c.l.b16 %v722
        %v1488 = vunpack.c.h.b16 %v722
        %v1489 = vunpack.c.l.b16 %v723
        %v1490 = vunpack.c.h.b16 %v723
        %v1491 = vunpack.c.l.b16 %v724
        %v1492 = vunpack.c.h.b16 %v724
        %v1493 = vunpack.c.l.b16 %v725
        %v1494 = vunpack.c.h.b16 %v725
        %v1495 = vunpack.c.l.b16 %v726
        %v1496 = vunpack.c.h.b16 %v726
        %v1497 = vunpack.c.l.b16 %v727
        %v1498 = vunpack.c.h.b16 %v727
        %v1499 = vunpack.c.l.b16 %v728
        %v1500 = vunpack.c.h.b16 %v728
        %v1501 = vunpack.c.l.b16 %v729
        %v1502 = vunpack.c.h.b16 %v729
        %v1503 = vunpack.c.l.b16 %v730
        %v1504 = vunpack.c.h.b16 %v730
        %v1505 = vunpack.c.l.b16 %v731
        %v1506 = vunpack.c.h.b16 %v731
        %v1507 = vunpack.c.l.b16 %v732
        %v1508 = vunpack.c.h.b16 %v732
        %v1509 = vunpack.c.l.b16 %v733
        %v1510 = vunpack.c.h.b16 %v733
        %v1511 = vunpack.c.l.b16 %v734
        %v1512 = vunpack.c.h.b16 %v734
        %v1513 = vpack.c.b16 %v1005, %v1001
        %v1514 = vpack.c.b16 %v1006, %v1002
        %v1515 = vpack.c.b16 %v1007, %v1003
        %v1516 = vpack.c.b16 %v1008, %v1004
        %v1517 = vpack.c.b16 %v1013, %v1009
        %v1518 = vpack.c.b16 %v1014, %v1010
        %v1519 = vpack.c.b16 %v1015, %v1011
        %v1520 = vpack.c.b16 %v1016, %v1012
        %v1521 = vpack.c.b16 %v1021, %v1017
        %v1522 = vpack.c.b16 %v1022, %v1018
        %v1523 = vpack.c.b16 %v1023, %v1019
        %v1524 = vpack.c.b16 %v1024, %v1020
        %v1525 = vpack.c.b16 %v1029, %v1025
        %v1526 = vpack.c.b16 %v1030, %v1026
        %v1527 = vpack.c.b16 %v1031, %v1027
        %v1528 = vpack.c.b16 %v1032, %v1028
        %v1529 = vpack.c.b16 %v1037, %v1033
        %v1530 = vpack.c.b16 %v1038, %v1034
        %v1531 = vpack.c.b16 %v1039, %v1035
        %v1532 = vpack.c.b16 %v1040, %v1036
        %v1533 = vpack.c.b16 %v1045, %v1041
        %v1534 = vpack.c.b16 %v1046, %v1042
        %v1535 = vpack.c.b16 %v1047, %v1043
        %v1536 = vpack.c.b16 %v1048, %v1044
        %v1537 = vpack.c.b16 %v1053, %v1049
        %v1538 = vpack.c.b16 %v1054, %v1050
        %v1539 = vpack.c.b16 %v1055, %v1051
        %v1540 = vpack.c.b16 %v1056, %v1052
        %v1541 = vpack.c.b16 %v1061, %v1057
        %v1542 = vpack.c.b16 %v1062, %v1058
        %v1543 = vpack.c.b16 %v1063, %v1059
        %v1544 = vpack.c.b16 %v1064, %v1060
        %v1545 = vpack.c.b16 %v1069, %v1065
        %v1546 = vpack.c.b16 %v1070, %v1066
        %v1547 = vpack.c.b16 %v1071, %v1067
        %v1548 = vpack.c.b16 %v1072, %v1068
        %v1549 = vpack.c.b16 %v1077, %v1073
        %v1550 = vpack.c.b16 %v1078, %v1074
        %v1551 = vpack.c.b16 %v1079, %v1075
        %v1552 = vpack.c.b16 %v1080, %v1076
        %v1553 = vpack.c.b16 %v1085, %v1081
        %v1554 = vpack.c.b16 %v1086, %v1082
        %v1555 = vpack.c.b16 %v1087, %v1083
        %v1556 = vpack.c.b16 %v1088, %v1084
        %v1557 = vpack.c.b16 %v1093, %v1089
        %v1558 = vpack.c.b16 %v1094, %v1090
        %v1559 = vpack.c.b16 %v1095, %v1091
        %v1560 = vpack.c.b16 %v1096, %v1092
        %v1561 = vpack.c.b16 %v1101, %v1097
        %v1562 = vpack.c.b16 %v1102, %v1098
        %v1563 = vpack.c.b16 %v1103, %v1099
        %v1564 = vpack.c.b16 %v1104, %v1100
        %v1565 = vpack.c.b16 %v1109, %v1105
        %v1566 = vpack.c.b16 %v1110, %v1106
        %v1567 = vpack.c.b16 %v1111, %v1107
        %v1568 = vpack.c.b16 %v1112, %v1108
        %v1569 = vpack.c.b16 %v1117, %v1113
        %v1570 = vpack.c.b16 %v1118, %v1114
        %v1571 = vpack.c.b16 %v1119, %v1115
        %v1572 = vpack.c.b16 %v1120, %v1116
        %v1573 = vpack.c.b16 %v1125, %v1121
        %v1574 = vpack.c.b16 %v1126, %v1122
        %v1575 = vpack.c.b16 %v1127, %v1123
        %v1576 = vpack.c.b16 %v1128, %v1124
        %v1577 = vpack.c.b16 %v1133, %v1129
        %v1578 = vpack.c.b16 %v1134, %v1130
        %v1579 = vpack.c.b16 %v1135, %v1131
        %v1580 = vpack.c.b16 %v1136, %v1132
        %v1581 = vpack.c.b16 %v1141, %v1137
        %v1582 = vpack.c.b16 %v1142, %v1138
        %v1583 = vpack.c.b16 %v1143, %v1139
        %v1584 = vpack.c.b16 %v1144, %v1140
        %v1585 = vpack.c.b16 %v1149, %v1145
        %v1586 = vpack.c.b16 %v1150, %v1146
        %v1587 = vpack.c.b16 %v1151, %v1147
        %v1588 = vpack.c.b16 %v1152, %v1148
        %v1589 = vpack.c.b16 %v1157, %v1153
        %v1590 = vpack.c.b16 %v1158, %v1154
        %v1591 = vpack.c.b16 %v1159, %v1155
        %v1592 = vpack.c.b16 %v1160, %v1156
        %v1593 = vpack.c.b16 %v1165, %v1161
        %v1594 = vpack.c.b16 %v1166, %v1162
        %v1595 = vpack.c.b16 %v1167, %v1163
        %v1596 = vpack.c.b16 %v1168, %v1164
        %v1597 = vpack.c.b16 %v1173, %v1169
        %v1598 = vpack.c.b16 %v1174, %v1170
        %v1599 = vpack.c.b16 %v1175, %v1171
        %v1600 = vpack.c.b16 %v1176, %v1172
        %v1601 = vpack.c.b16 %v1181, %v1177
        %v1602 = vpack.c.b16 %v1182, %v1178
        %v1603 = vpack.c.b16 %v1183, %v1179
        %v1604 = vpack.c.b16 %v1184, %v1180
        %v1605 = vpack.c.b16 %v1189, %v1185
        %v1606 = vpack.c.b16 %v1190, %v1186
        %v1607 = vpack.c.b16 %v1191, %v1187
        %v1608 = vpack.c.b16 %v1192, %v1188
        %v1609 = vpack.c.b16 %v1197, %v1193
        %v1610 = vpack.c.b16 %v1198, %v1194
        %v1611 = vpack.c.b16 %v1199, %v1195
        %v1612 = vpack.c.b16 %v1200, %v1196
        %v1613 = vpack.c.b16 %v1205, %v1201
        %v1614 = vpack.c.b16 %v1206, %v1202
        %v1615 = vpack.c.b16 %v1207, %v1203
        %v1616 = vpack.c.b16 %v1208, %v1204
        %v1617 = vpack.c.b16 %v1213, %v1209
        %v1618 = vpack.c.b16 %v1214, %v1210
        %v1619 = vpack.c.b16 %v1215, %v1211
        %v1620 = vpack.c.b16 %v1216, %v1212
        %v1621 = vpack.c.b16 %v1221, %v1217
        %v1622 = vpack.c.b16 %v1222, %v1218
        %v1623 = vpack.c.b16 %v1223, %v1219
        %v1624 = vpack.c.b16 %v1224, %v1220
        %v1625 = vpack.c.b16 %v1229, %v1225
        %v1626 = vpack.c.b16 %v1230, %v1226
        %v1627 = vpack.c.b16 %v1231, %v1227
        %v1628 = vpack.c.b16 %v1232, %v1228
        %v1629 = vpack.c.b16 %v1237, %v1233
        %v1630 = vpack.c.b16 %v1238, %v1234
        %v1631 = vpack.c.b16 %v1239, %v1235
        %v1632 = vpack.c.b16 %v1240, %v1236
        %v1633 = vpack.c.b16 %v1245, %v1241
        %v1634 = vpack.c.b16 %v1246, %v1242
        %v1635 = vpack.c.b16 %v1247, %v1243
        %v1636 = vpack.c.b16 %v1248, %v1244
        %v1637 = vpack.c.b16 %v1253, %v1249
        %v1638 = vpack.c.b16 %v1254, %v1250
        %v1639 = vpack.c.b16 %v1255, %v1251
        %v1640 = vpack.c.b16 %v1256, %v1252
        %v1641 = vpack.c.b16 %v1261, %v1257
        %v1642 = vpack.c.b16 %v1262, %v1258
        %v1643 = vpack.c.b16 %v1263, %v1259
        %v1644 = vpack.c.b16 %v1264, %v1260
        %v1645 = vpack.c.b16 %v1269, %v1265
        %v1646 = vpack.c.b16 %v1270, %v1266
        %v1647 = vpack.c.b16 %v1271, %v1267
        %v1648 = vpack.c.b16 %v1272, %v1268
        %v1649 = vpack.c.b16 %v1277, %v1273
        %v1650 = vpack.c.b16 %v1278, %v1274
        %v1651 = vpack.c.b16 %v1279, %v1275
        %v1652 = vpack.c.b16 %v1280, %v1276
        %v1653 = vpack.c.b16 %v1285, %v1281
        %v1654 = vpack.c.b16 %v1286, %v1282
        %v1655 = vpack.c.b16 %v1287, %v1283
        %v1656 = vpack.c.b16 %v1288, %v1284
        %v1657 = vpack.c.b16 %v1293, %v1289
        %v1658 = vpack.c.b16 %v1294, %v1290
        %v1659 = vpack.c.b16 %v1295, %v1291
        %v1660 = vpack.c.b16 %v1296, %v1292
        %v1661 = vpack.c.b16 %v1301, %v1297
        %v1662 = vpack.c.b16 %v1302, %v1298
        %v1663 = vpack.c.b16 %v1303, %v1299
        %v1664 = vpack.c.b16 %v1304, %v1300
        %v1665 = vpack.c.b16 %v1309, %v1305
        %v1666 = vpack.c.b16 %v1310, %v1306
        %v1667 = vpack.c.b16 %v1311, %v1307
        %v1668 = vpack.c.b16 %v1312, %v1308
        %v1669 = vpack.c.b16 %v1317, %v1313
        %v1670 = vpack.c.b16 %v1318, %v1314
        %v1671 = vpack.c.b16 %v1319, %v1315
        %v1672 = vpack.c.b16 %v1320, %v1316
        %v1673 = vpack.c.b16 %v1325, %v1321
        %v1674 = vpack.c.b16 %v1326, %v1322
        %v1675 = vpack.c.b16 %v1327, %v1323
        %v1676 = vpack.c.b16 %v1328, %v1324
        %v1677 = vpack.c.b16 %v1333, %v1329
        %v1678 = vpack.c.b16 %v1334, %v1330
        %v1679 = vpack.c.b16 %v1335, %v1331
        %v1680 = vpack.c.b16 %v1336, %v1332
        %v1681 = vpack.c.b16 %v1341, %v1337
        %v1682 = vpack.c.b16 %v1342, %v1338
        %v1683 = vpack.c.b16 %v1343, %v1339
        %v1684 = vpack.c.b16 %v1344, %v1340
        %v1685 = vpack.c.b16 %v1349, %v1345
        %v1686 = vpack.c.b16 %v1350, %v1346
        %v1687 = vpack.c.b16 %v1351, %v1347
        %v1688 = vpack.c.b16 %v1352, %v1348
        %v1689 = vpack.c.b16 %v1357, %v1353
        %v1690 = vpack.c.b16 %v1358, %v1354
        %v1691 = vpack.c.b16 %v1359, %v1355
        %v1692 = vpack.c.b16 %v1360, %v1356
        %v1693 = vpack.c.b16 %v1365, %v1361
        %v1694 = vpack.c.b16 %v1366, %v1362
        %v1695 = vpack.c.b16 %v1367, %v1363
        %v1696 = vpack.c.b16 %v1368, %v1364
        %v1697 = vpack.c.b16 %v1373, %v1369
        %v1698 = vpack.c.b16 %v1374, %v1370
        %v1699 = vpack.c.b16 %v1375, %v1371
        %v1700 = vpack.c.b16 %v1376, %v1372
        %v1701 = vpack.c.b16 %v1381, %v1377
        %v1702 = vpack.c.b16 %v1382, %v1378
        %v1703 = vpack.c.b16 %v1383, %v1379
        %v1704 = vpack.c.b16 %v1384, %v1380
        %v1705 = vpack.c.b16 %v1389, %v1385
        %v1706 = vpack.c.b16 %v1390, %v1386
        %v1707 = vpack.c.b16 %v1391, %v1387
        %v1708 = vpack.c.b16 %v1392, %v1388
        %v1709 = vpack.c.b16 %v1397, %v1393
        %v1710 = vpack.c.b16 %v1398, %v1394
        %v1711 = vpack.c.b16 %v1399, %v1395
        %v1712 = vpack.c.b16 %v1400, %v1396
        %v1713 = vpack.c.b16 %v1405, %v1401
        %v1714 = vpack.c.b16 %v1406, %v1402
        %v1715 = vpack.c.b16 %v1407, %v1403
        %v1716 = vpack.c.b16 %v1408, %v1404
        %v1717 = vpack.c.b16 %v1413, %v1409
        %v1718 = vpack.c.b16 %v1414, %v1410
        %v1719 = vpack.c.b16 %v1415, %v1411
        %v1720 = vpack.c.b16 %v1416, %v1412
        %v1721 = vpack.c.b16 %v1421, %v1417
        %v1722 = vpack.c.b16 %v1422, %v1418
        %v1723 = vpack.c.b16 %v1423, %v1419
        %v1724 = vpack.c.b16 %v1424, %v1420
        %v1725 = vpack.c.b16 %v1429, %v1425
        %v1726 = vpack.c.b16 %v1430, %v1426
        %v1727 = vpack.c.b16 %v1431, %v1427
        %v1728 = vpack.c.b16 %v1432, %v1428
        %v1729 = vpack.c.b16 %v1437, %v1433
        %v1730 = vpack.c.b16 %v1438, %v1434
        %v1731 = vpack.c.b16 %v1439, %v1435
        %v1732 = vpack.c.b16 %v1440, %v1436
        %v1733 = vpack.c.b16 %v1445, %v1441
        %v1734 = vpack.c.b16 %v1446, %v1442
        %v1735 = vpack.c.b16 %v1447, %v1443
        %v1736 = vpack.c.b16 %v1448, %v1444
        %v1737 = vpack.c.b16 %v1453, %v1449
        %v1738 = vpack.c.b16 %v1454, %v1450
        %v1739 = vpack.c.b16 %v1455, %v1451
        %v1740 = vpack.c.b16 %v1456, %v1452
        %v1741 = vpack.c.b16 %v1461, %v1457
        %v1742 = vpack.c.b16 %v1462, %v1458
        %v1743 = vpack.c.b16 %v1463, %v1459
        %v1744 = vpack.c.b16 %v1464, %v1460
        %v1745 = vpack.c.b16 %v1469, %v1465
        %v1746 = vpack.c.b16 %v1470, %v1466
        %v1747 = vpack.c.b16 %v1471, %v1467
        %v1748 = vpack.c.b16 %v1472, %v1468
        %v1749 = vpack.c.b16 %v1477, %v1473
        %v1750 = vpack.c.b16 %v1478, %v1474
        %v1751 = vpack.c.b16 %v1479, %v1475
        %v1752 = vpack.c.b16 %v1480, %v1476
        %v1753 = vpack.c.b16 %v1485, %v1481
        %v1754 = vpack.c.b16 %v1486, %v1482
        %v1755 = vpack.c.b16 %v1487, %v1483
        %v1756 = vpack.c.b16 %v1488, %v1484
        %v1757 = vpack.c.b16 %v1493, %v1489
        %v1758 = vpack.c.b16 %v1494, %v1490
        %v1759 = vpack.c.b16 %v1495, %v1491
        %v1760 = vpack.c.b16 %v1496, %v1492
        %v1761 = vpack.c.b16 %v1501, %v1497
        %v1762 = vpack.c.b16 %v1502, %v1498
        %v1763 = vpack.c.b16 %v1503, %v1499
        %v1764 = vpack.c.b16 %v1504, %v1500
        %v1765 = vpack.c.b16 %v1509, %v1505
        %v1766 = vpack.c.b16 %v1510, %v1506
        %v1767 = vpack.c.b16 %v1511, %v1507
        %v1768 = vpack.c.b16 %v1512, %v1508
        %2025 = vmatpush.bf16.msra.mxu0 %v1541
        %2026 = vmatpush.bf16.msra.mxu0 %v1537
        %2027 = vmatpush.bf16.msra.mxu0 %v1533
        %2028 = vmatpush.bf16.msra.mxu0 %v1529
        %2029 = vmatpush.bf16.msra.mxu0 %v1525
        %2030 = vmatpush.bf16.msra.mxu0 %v1521
        %2031 = vmatpush.bf16.msra.mxu0 %v1517
        %2032 = vmatpush.bf16.msra.mxu0 %v1513
        %2033 = vmatmul.bf16.gmra.mxu0 %v423
        %v2034 = vpop.f32.mrf.mxu0
        %v2035 = vadd.f32 %v737, %v2034
        %v2036 = vpop.f32.mrf.mxu0
        %v2037 = vadd.f32 %v737, %v2036
        %2038 = vmatmul.bf16.gmra.mxu0 %v431
        %v2039 = vpop.f32.mrf.mxu0
        %v2040 = vadd.f32 %v737, %v2039
        %v2041 = vpop.f32.mrf.mxu0
        %v2042 = vadd.f32 %v737, %v2041
        %2043 = vmatmul.bf16.gmra.mxu0 %v439
        %v2044 = vpop.f32.mrf.mxu0
        %v2045 = vadd.f32 %v737, %v2044
        %v2046 = vpop.f32.mrf.mxu0
        %v2047 = vadd.f32 %v737, %v2046
        %2048 = vmatmul.bf16.gmra.mxu0 %v447
        %v2049 = vpop.f32.mrf.mxu0
        %v2050 = vadd.f32 %v737, %v2049
        %v2051 = vpop.f32.mrf.mxu0
        %v2052 = vadd.f32 %v737, %v2051
        %2053 = vmatmul.bf16.gmra.mxu0 %v455
        %v2054 = vpop.f32.mrf.mxu0
        %v2055 = vadd.f32 %v737, %v2054
        %v2056 = vpop.f32.mrf.mxu0
        %v2057 = vadd.f32 %v737, %v2056
        %2058 = vmatmul.bf16.gmra.mxu0 %v463
        %v2059 = vpop.f32.mrf.mxu0
        %v2060 = vadd.f32 %v737, %v2059
        %v2061 = vpop.f32.mrf.mxu0
        %v2062 = vadd.f32 %v737, %v2061
        %2063 = vmatmul.bf16.gmra.mxu0 %v471
        %v2064 = vpop.f32.mrf.mxu0
        %v2065 = vadd.f32 %v737, %v2064
        %v2066 = vpop.f32.mrf.mxu0
        %v2067 = vadd.f32 %v737, %v2066
        %2068 = vdwg.mxu0
        %2069 = vmatpush.bf16.msra.mxu0 %v1573
        %2070 = vmatpush.bf16.msra.mxu0 %v1569
        %2071 = vmatpush.bf16.msra.mxu0 %v1565
        %2072 = vmatpush.bf16.msra.mxu0 %v1561
        %2073 = vmatpush.bf16.msra.mxu0 %v1557
        %2074 = vmatpush.bf16.msra.mxu0 %v1553
        %2075 = vmatpush.bf16.msra.mxu0 %v1549
        %2076 = vmatpush.bf16.msra.mxu0 %v1545
        %2077 = vmatmul.bf16.gmra.mxu0 %v424
        %v2078 = vpop.f32.mrf.mxu0
        %v2079 = vadd.f32 %v2035, %v2078
        %v2080 = vpop.f32.mrf.mxu0
        %v2081 = vadd.f32 %v2037, %v2080
        %2082 = vmatmul.bf16.gmra.mxu0 %v432
        %v2083 = vpop.f32.mrf.mxu0
        %v2084 = vadd.f32 %v2040, %v2083
        %v2085 = vpop.f32.mrf.mxu0
        %v2086 = vadd.f32 %v2042, %v2085
        %2087 = vmatmul.bf16.gmra.mxu0 %v440
        %v2088 = vpop.f32.mrf.mxu0
        %v2089 = vadd.f32 %v2045, %v2088
        %v2090 = vpop.f32.mrf.mxu0
        %v2091 = vadd.f32 %v2047, %v2090
        %2092 = vmatmul.bf16.gmra.mxu0 %v448
        %v2093 = vpop.f32.mrf.mxu0
        %v2094 = vadd.f32 %v2050, %v2093
        %v2095 = vpop.f32.mrf.mxu0
        %v2096 = vadd.f32 %v2052, %v2095
        %2097 = vmatmul.bf16.gmra.mxu0 %v456
        %v2098 = vpop.f32.mrf.mxu0
        %v2099 = vadd.f32 %v2055, %v2098
        %v2100 = vpop.f32.mrf.mxu0
        %v2101 = vadd.f32 %v2057, %v2100
        %2102 = vmatmul.bf16.gmra.mxu0 %v464
        %v2103 = vpop.f32.mrf.mxu0
        %v2104 = vadd.f32 %v2060, %v2103
        %v2105 = vpop.f32.mrf.mxu0
        %v2106 = vadd.f32 %v2062, %v2105
        %2107 = vmatmul.bf16.gmra.mxu0 %v472
        %v2108 = vpop.f32.mrf.mxu0
        %v2109 = vadd.f32 %v2065, %v2108
        %v2110 = vpop.f32.mrf.mxu0
        %v2111 = vadd.f32 %v2067, %v2110
        %2112 = vdwg.mxu0
        %2113 = vmatpush.bf16.msra.mxu0 %v1605
        %2114 = vmatpush.bf16.msra.mxu0 %v1601
        %2115 = vmatpush.bf16.msra.mxu0 %v1597
        %2116 = vmatpush.bf16.msra.mxu0 %v1593
        %2117 = vmatpush.bf16.msra.mxu0 %v1589
        %2118 = vmatpush.bf16.msra.mxu0 %v1585
        %2119 = vmatpush.bf16.msra.mxu0 %v1581
        %2120 = vmatpush.bf16.msra.mxu0 %v1577
        %2121 = vmatmul.bf16.gmra.mxu0 %v425
        %v2122 = vpop.f32.mrf.mxu0
        %v2123 = vadd.f32 %v2079, %v2122
        %v2124 = vpop.f32.mrf.mxu0
        %v2125 = vadd.f32 %v2081, %v2124
        %2126 = vmatmul.bf16.gmra.mxu0 %v433
        %v2127 = vpop.f32.mrf.mxu0
        %v2128 = vadd.f32 %v2084, %v2127
        %v2129 = vpop.f32.mrf.mxu0
        %v2130 = vadd.f32 %v2086, %v2129
        %2131 = vmatmul.bf16.gmra.mxu0 %v441
        %v2132 = vpop.f32.mrf.mxu0
        %v2133 = vadd.f32 %v2089, %v2132
        %v2134 = vpop.f32.mrf.mxu0
        %v2135 = vadd.f32 %v2091, %v2134
        %2136 = vmatmul.bf16.gmra.mxu0 %v449
        %v2137 = vpop.f32.mrf.mxu0
        %v2138 = vadd.f32 %v2094, %v2137
        %v2139 = vpop.f32.mrf.mxu0
        %v2140 = vadd.f32 %v2096, %v2139
        %2141 = vmatmul.bf16.gmra.mxu0 %v457
        %v2142 = vpop.f32.mrf.mxu0
        %v2143 = vadd.f32 %v2099, %v2142
        %v2144 = vpop.f32.mrf.mxu0
        %v2145 = vadd.f32 %v2101, %v2144
        %2146 = vmatmul.bf16.gmra.mxu0 %v465
        %v2147 = vpop.f32.mrf.mxu0
        %v2148 = vadd.f32 %v2104, %v2147
        %v2149 = vpop.f32.mrf.mxu0
        %v2150 = vadd.f32 %v2106, %v2149
        %2151 = vmatmul.bf16.gmra.mxu0 %v473
        %v2152 = vpop.f32.mrf.mxu0
        %v2153 = vadd.f32 %v2109, %v2152
        %v2154 = vpop.f32.mrf.mxu0
        %v2155 = vadd.f32 %v2111, %v2154
        %2156 = vdwg.mxu0
        %2157 = vmatpush.bf16.msra.mxu0 %v1637
        %2158 = vmatpush.bf16.msra.mxu0 %v1633
        %2159 = vmatpush.bf16.msra.mxu0 %v1629
        %2160 = vmatpush.bf16.msra.mxu0 %v1625
        %2161 = vmatpush.bf16.msra.mxu0 %v1621
        %2162 = vmatpush.bf16.msra.mxu0 %v1617
        %2163 = vmatpush.bf16.msra.mxu0 %v1613
        %2164 = vmatpush.bf16.msra.mxu0 %v1609
        %2165 = vmatmul.bf16.gmra.mxu0 %v426
        %v2166 = vpop.f32.mrf.mxu0
        %v2167 = vadd.f32 %v2123, %v2166
        %v2168 = vpop.f32.mrf.mxu0
        %v2169 = vadd.f32 %v2125, %v2168
        %2170 = vmatmul.bf16.gmra.mxu0 %v434
        %v2171 = vpop.f32.mrf.mxu0
        %v2172 = vadd.f32 %v2128, %v2171
        %v2173 = vpop.f32.mrf.mxu0
        %v2174 = vadd.f32 %v2130, %v2173
        %2175 = vmatmul.bf16.gmra.mxu0 %v442
        %v2176 = vpop.f32.mrf.mxu0
        %v2177 = vadd.f32 %v2133, %v2176
        %v2178 = vpop.f32.mrf.mxu0
        %v2179 = vadd.f32 %v2135, %v2178
        %2180 = vmatmul.bf16.gmra.mxu0 %v450
        %v2181 = vpop.f32.mrf.mxu0
        %v2182 = vadd.f32 %v2138, %v2181
        %v2183 = vpop.f32.mrf.mxu0
        %v2184 = vadd.f32 %v2140, %v2183
        %2185 = vmatmul.bf16.gmra.mxu0 %v458
        %v2186 = vpop.f32.mrf.mxu0
        %v2187 = vadd.f32 %v2143, %v2186
        %v2188 = vpop.f32.mrf.mxu0
        %v2189 = vadd.f32 %v2145, %v2188
        %2190 = vmatmul.bf16.gmra.mxu0 %v466
        %v2191 = vpop.f32.mrf.mxu0
        %v2192 = vadd.f32 %v2148, %v2191
        %v2193 = vpop.f32.mrf.mxu0
        %v2194 = vadd.f32 %v2150, %v2193
        %2195 = vmatmul.bf16.gmra.mxu0 %v474
        %v2196 = vpop.f32.mrf.mxu0
        %v2197 = vadd.f32 %v2153, %v2196
        %v2198 = vpop.f32.mrf.mxu0
        %v2199 = vadd.f32 %v2155, %v2198
        %2200 = vdwg.mxu0
        %2201 = vmatpush.bf16.msra.mxu0 %v1669
        %2202 = vmatpush.bf16.msra.mxu0 %v1665
        %2203 = vmatpush.bf16.msra.mxu0 %v1661
        %2204 = vmatpush.bf16.msra.mxu0 %v1657
        %2205 = vmatpush.bf16.msra.mxu0 %v1653
        %2206 = vmatpush.bf16.msra.mxu0 %v1649
        %2207 = vmatpush.bf16.msra.mxu0 %v1645
        %2208 = vmatpush.bf16.msra.mxu0 %v1641
        %2209 = vmatmul.bf16.gmra.mxu0 %v427
        %v2210 = vpop.f32.mrf.mxu0
        %v2211 = vadd.f32 %v2167, %v2210
        %v2212 = vpop.f32.mrf.mxu0
        %v2213 = vadd.f32 %v2169, %v2212
        %2214 = vmatmul.bf16.gmra.mxu0 %v435
        %v2215 = vpop.f32.mrf.mxu0
        %v2216 = vadd.f32 %v2172, %v2215
        %v2217 = vpop.f32.mrf.mxu0
        %v2218 = vadd.f32 %v2174, %v2217
        %2219 = vmatmul.bf16.gmra.mxu0 %v443
        %v2220 = vpop.f32.mrf.mxu0
        %v2221 = vadd.f32 %v2177, %v2220
        %v2222 = vpop.f32.mrf.mxu0
        %v2223 = vadd.f32 %v2179, %v2222
        %2224 = vmatmul.bf16.gmra.mxu0 %v451
        %v2225 = vpop.f32.mrf.mxu0
        %v2226 = vadd.f32 %v2182, %v2225
        %v2227 = vpop.f32.mrf.mxu0
        %v2228 = vadd.f32 %v2184, %v2227
        %2229 = vmatmul.bf16.gmra.mxu0 %v459
        %v2230 = vpop.f32.mrf.mxu0
        %v2231 = vadd.f32 %v2187, %v2230
        %v2232 = vpop.f32.mrf.mxu0
        %v2233 = vadd.f32 %v2189, %v2232
        %2234 = vmatmul.bf16.gmra.mxu0 %v467
        %v2235 = vpop.f32.mrf.mxu0
        %v2236 = vadd.f32 %v2192, %v2235
        %v2237 = vpop.f32.mrf.mxu0
        %v2238 = vadd.f32 %v2194, %v2237
        %2239 = vmatmul.bf16.gmra.mxu0 %v475
        %v2240 = vpop.f32.mrf.mxu0
        %v2241 = vadd.f32 %v2197, %v2240
        %v2242 = vpop.f32.mrf.mxu0
        %v2243 = vadd.f32 %v2199, %v2242
        %2244 = vdwg.mxu0
        %2245 = vmatpush.bf16.msra.mxu0 %v1701
        %2246 = vmatpush.bf16.msra.mxu0 %v1697
        %2247 = vmatpush.bf16.msra.mxu0 %v1693
        %2248 = vmatpush.bf16.msra.mxu0 %v1689
        %2249 = vmatpush.bf16.msra.mxu0 %v1685
        %2250 = vmatpush.bf16.msra.mxu0 %v1681
        %2251 = vmatpush.bf16.msra.mxu0 %v1677
        %2252 = vmatpush.bf16.msra.mxu0 %v1673
        %2253 = vmatmul.bf16.gmra.mxu0 %v428
        %v2254 = vpop.f32.mrf.mxu0
        %v2255 = vadd.f32 %v2211, %v2254
        %v2256 = vpop.f32.mrf.mxu0
        %v2257 = vadd.f32 %v2213, %v2256
        %2258 = vmatmul.bf16.gmra.mxu0 %v436
        %v2259 = vpop.f32.mrf.mxu0
        %v2260 = vadd.f32 %v2216, %v2259
        %v2261 = vpop.f32.mrf.mxu0
        %v2262 = vadd.f32 %v2218, %v2261
        %2263 = vmatmul.bf16.gmra.mxu0 %v444
        %v2264 = vpop.f32.mrf.mxu0
        %v2265 = vadd.f32 %v2221, %v2264
        %v2266 = vpop.f32.mrf.mxu0
        %v2267 = vadd.f32 %v2223, %v2266
        %2268 = vmatmul.bf16.gmra.mxu0 %v452
        %v2269 = vpop.f32.mrf.mxu0
        %v2270 = vadd.f32 %v2226, %v2269
        %v2271 = vpop.f32.mrf.mxu0
        %v2272 = vadd.f32 %v2228, %v2271
        %2273 = vmatmul.bf16.gmra.mxu0 %v460
        %v2274 = vpop.f32.mrf.mxu0
        %v2275 = vadd.f32 %v2231, %v2274
        %v2276 = vpop.f32.mrf.mxu0
        %v2277 = vadd.f32 %v2233, %v2276
        %2278 = vmatmul.bf16.gmra.mxu0 %v468
        %v2279 = vpop.f32.mrf.mxu0
        %v2280 = vadd.f32 %v2236, %v2279
        %v2281 = vpop.f32.mrf.mxu0
        %v2282 = vadd.f32 %v2238, %v2281
        %2283 = vmatmul.bf16.gmra.mxu0 %v476
        %v2284 = vpop.f32.mrf.mxu0
        %v2285 = vadd.f32 %v2241, %v2284
        %v2286 = vpop.f32.mrf.mxu0
        %v2287 = vadd.f32 %v2243, %v2286
        %2288 = vdwg.mxu0
        %2289 = vmatpush.bf16.msra.mxu0 %v1733
        %2290 = vmatpush.bf16.msra.mxu0 %v1729
        %2291 = vmatpush.bf16.msra.mxu0 %v1725
        %2292 = vmatpush.bf16.msra.mxu0 %v1721
        %2293 = vmatpush.bf16.msra.mxu0 %v1717
        %2294 = vmatpush.bf16.msra.mxu0 %v1713
        %2295 = vmatpush.bf16.msra.mxu0 %v1709
        %2296 = vmatpush.bf16.msra.mxu0 %v1705
        %2297 = vmatmul.bf16.gmra.mxu0 %v429
        %v2298 = vpop.f32.mrf.mxu0
        %v2299 = vadd.f32 %v2255, %v2298
        %v2300 = vpop.f32.mrf.mxu0
        %v2301 = vadd.f32 %v2257, %v2300
        %2302 = vmatmul.bf16.gmra.mxu0 %v437
        %v2303 = vpop.f32.mrf.mxu0
        %v2304 = vadd.f32 %v2260, %v2303
        %v2305 = vpop.f32.mrf.mxu0
        %v2306 = vadd.f32 %v2262, %v2305
        %2307 = vmatmul.bf16.gmra.mxu0 %v445
        %v2308 = vpop.f32.mrf.mxu0
        %v2309 = vadd.f32 %v2265, %v2308
        %v2310 = vpop.f32.mrf.mxu0
        %v2311 = vadd.f32 %v2267, %v2310
        %2312 = vmatmul.bf16.gmra.mxu0 %v453
        %v2313 = vpop.f32.mrf.mxu0
        %v2314 = vadd.f32 %v2270, %v2313
        %v2315 = vpop.f32.mrf.mxu0
        %v2316 = vadd.f32 %v2272, %v2315
        %2317 = vmatmul.bf16.gmra.mxu0 %v461
        %v2318 = vpop.f32.mrf.mxu0
        %v2319 = vadd.f32 %v2275, %v2318
        %v2320 = vpop.f32.mrf.mxu0
        %v2321 = vadd.f32 %v2277, %v2320
        %2322 = vmatmul.bf16.gmra.mxu0 %v469
        %v2323 = vpop.f32.mrf.mxu0
        %v2324 = vadd.f32 %v2280, %v2323
        %v2325 = vpop.f32.mrf.mxu0
        %v2326 = vadd.f32 %v2282, %v2325
        %2327 = vmatmul.bf16.gmra.mxu0 %v477
        %v2328 = vpop.f32.mrf.mxu0
        %v2329 = vadd.f32 %v2285, %v2328
        %v2330 = vpop.f32.mrf.mxu0
        %v2331 = vadd.f32 %v2287, %v2330
        %2332 = vdwg.mxu0
        %2333 = vmatpush.bf16.msra.mxu0 %v1765
        %2334 = vmatpush.bf16.msra.mxu0 %v1761
        %2335 = vmatpush.bf16.msra.mxu0 %v1757
        %2336 = vmatpush.bf16.msra.mxu0 %v1753
        %2337 = vmatpush.bf16.msra.mxu0 %v1749
        %2338 = vmatpush.bf16.msra.mxu0 %v1745
        %2339 = vmatpush.bf16.msra.mxu0 %v1741
        %2340 = vmatpush.bf16.msra.mxu0 %v1737
        %2341 = vmatmul.bf16.gmra.mxu0 %v430
        %v2342 = vpop.f32.mrf.mxu0
        %v2343 = vadd.f32 %v2299, %v2342
        %v2344 = vpop.f32.mrf.mxu0
        %v2345 = vadd.f32 %v2301, %v2344
        %2346 = vmatmul.bf16.gmra.mxu0 %v438
        %v2347 = vpop.f32.mrf.mxu0
        %v2348 = vadd.f32 %v2304, %v2347
        %v2349 = vpop.f32.mrf.mxu0
        %v2350 = vadd.f32 %v2306, %v2349
        %2351 = vmatmul.bf16.gmra.mxu0 %v446
        %v2352 = vpop.f32.mrf.mxu0
        %v2353 = vadd.f32 %v2309, %v2352
        %v2354 = vpop.f32.mrf.mxu0
        %v2355 = vadd.f32 %v2311, %v2354
        %2356 = vmatmul.bf16.gmra.mxu0 %v454
        %v2357 = vpop.f32.mrf.mxu0
        %v2358 = vadd.f32 %v2314, %v2357
        %v2359 = vpop.f32.mrf.mxu0
        %v2360 = vadd.f32 %v2316, %v2359
        %2361 = vmatmul.bf16.gmra.mxu0 %v462
        %v2362 = vpop.f32.mrf.mxu0
        %v2363 = vadd.f32 %v2319, %v2362
        %v2364 = vpop.f32.mrf.mxu0
        %v2365 = vadd.f32 %v2321, %v2364
        %2366 = vmatmul.bf16.gmra.mxu0 %v470
        %v2367 = vpop.f32.mrf.mxu0
        %v2368 = vadd.f32 %v2324, %v2367
        %v2369 = vpop.f32.mrf.mxu0
        %v2370 = vadd.f32 %v2326, %v2369
        %2371 = vmatmul.bf16.gmra.mxu0 %v478
        %v2372 = vpop.f32.mrf.mxu0
        %v2373 = vadd.f32 %v2329, %v2372
        %v2374 = vpop.f32.mrf.mxu0
        %v2375 = vadd.f32 %v2331, %v2374
        %2376 = vdwg.mxu0
        %2377 = vmatpush.bf16.msra.mxu0 %v1542
        %2378 = vmatpush.bf16.msra.mxu0 %v1538
        %2379 = vmatpush.bf16.msra.mxu0 %v1534
        %2380 = vmatpush.bf16.msra.mxu0 %v1530
        %2381 = vmatpush.bf16.msra.mxu0 %v1526
        %2382 = vmatpush.bf16.msra.mxu0 %v1522
        %2383 = vmatpush.bf16.msra.mxu0 %v1518
        %2384 = vmatpush.bf16.msra.mxu0 %v1514
        %2385 = vmatmul.bf16.gmra.mxu0 %v423
        %v2386 = vpop.f32.mrf.mxu0
        %v2387 = vadd.f32 %v738, %v2386
        %v2388 = vpop.f32.mrf.mxu0
        %v2389 = vadd.f32 %v738, %v2388
        %2390 = vmatmul.bf16.gmra.mxu0 %v431
        %v2391 = vpop.f32.mrf.mxu0
        %v2392 = vadd.f32 %v738, %v2391
        %v2393 = vpop.f32.mrf.mxu0
        %v2394 = vadd.f32 %v738, %v2393
        %2395 = vmatmul.bf16.gmra.mxu0 %v439
        %v2396 = vpop.f32.mrf.mxu0
        %v2397 = vadd.f32 %v738, %v2396
        %v2398 = vpop.f32.mrf.mxu0
        %v2399 = vadd.f32 %v738, %v2398
        %2400 = vmatmul.bf16.gmra.mxu0 %v447
        %v2401 = vpop.f32.mrf.mxu0
        %v2402 = vadd.f32 %v738, %v2401
        %v2403 = vpop.f32.mrf.mxu0
        %v2404 = vadd.f32 %v738, %v2403
        %2405 = vmatmul.bf16.gmra.mxu0 %v455
        %v2406 = vpop.f32.mrf.mxu0
        %v2407 = vadd.f32 %v738, %v2406
        %v2408 = vpop.f32.mrf.mxu0
        %v2409 = vadd.f32 %v738, %v2408
        %2410 = vmatmul.bf16.gmra.mxu0 %v463
        %v2411 = vpop.f32.mrf.mxu0
        %v2412 = vadd.f32 %v738, %v2411
        %v2413 = vpop.f32.mrf.mxu0
        %v2414 = vadd.f32 %v738, %v2413
        %2415 = vmatmul.bf16.gmra.mxu0 %v471
        %v2416 = vpop.f32.mrf.mxu0
        %v2417 = vadd.f32 %v738, %v2416
        %v2418 = vpop.f32.mrf.mxu0
        %v2419 = vadd.f32 %v738, %v2418
        %2420 = vdwg.mxu0
        %2421 = vmatpush.bf16.msra.mxu0 %v1574
        %2422 = vmatpush.bf16.msra.mxu0 %v1570
        %2423 = vmatpush.bf16.msra.mxu0 %v1566
        %2424 = vmatpush.bf16.msra.mxu0 %v1562
        %2425 = vmatpush.bf16.msra.mxu0 %v1558
        %2426 = vmatpush.bf16.msra.mxu0 %v1554
        %2427 = vmatpush.bf16.msra.mxu0 %v1550
        %2428 = vmatpush.bf16.msra.mxu0 %v1546
        %2429 = vmatmul.bf16.gmra.mxu0 %v424
        %v2430 = vpop.f32.mrf.mxu0
        %v2431 = vadd.f32 %v2387, %v2430
        %v2432 = vpop.f32.mrf.mxu0
        %v2433 = vadd.f32 %v2389, %v2432
        %2434 = vmatmul.bf16.gmra.mxu0 %v432
        %v2435 = vpop.f32.mrf.mxu0
        %v2436 = vadd.f32 %v2392, %v2435
        %v2437 = vpop.f32.mrf.mxu0
        %v2438 = vadd.f32 %v2394, %v2437
        %2439 = vmatmul.bf16.gmra.mxu0 %v440
        %v2440 = vpop.f32.mrf.mxu0
        %v2441 = vadd.f32 %v2397, %v2440
        %v2442 = vpop.f32.mrf.mxu0
        %v2443 = vadd.f32 %v2399, %v2442
        %2444 = vmatmul.bf16.gmra.mxu0 %v448
        %v2445 = vpop.f32.mrf.mxu0
        %v2446 = vadd.f32 %v2402, %v2445
        %v2447 = vpop.f32.mrf.mxu0
        %v2448 = vadd.f32 %v2404, %v2447
        %2449 = vmatmul.bf16.gmra.mxu0 %v456
        %v2450 = vpop.f32.mrf.mxu0
        %v2451 = vadd.f32 %v2407, %v2450
        %v2452 = vpop.f32.mrf.mxu0
        %v2453 = vadd.f32 %v2409, %v2452
        %2454 = vmatmul.bf16.gmra.mxu0 %v464
        %v2455 = vpop.f32.mrf.mxu0
        %v2456 = vadd.f32 %v2412, %v2455
        %v2457 = vpop.f32.mrf.mxu0
        %v2458 = vadd.f32 %v2414, %v2457
        %2459 = vmatmul.bf16.gmra.mxu0 %v472
        %v2460 = vpop.f32.mrf.mxu0
        %v2461 = vadd.f32 %v2417, %v2460
        %v2462 = vpop.f32.mrf.mxu0
        %v2463 = vadd.f32 %v2419, %v2462
        %2464 = vdwg.mxu0
        %2465 = vmatpush.bf16.msra.mxu0 %v1606
        %2466 = vmatpush.bf16.msra.mxu0 %v1602
        %2467 = vmatpush.bf16.msra.mxu0 %v1598
        %2468 = vmatpush.bf16.msra.mxu0 %v1594
        %2469 = vmatpush.bf16.msra.mxu0 %v1590
        %2470 = vmatpush.bf16.msra.mxu0 %v1586
        %2471 = vmatpush.bf16.msra.mxu0 %v1582
        %2472 = vmatpush.bf16.msra.mxu0 %v1578
        %2473 = vmatmul.bf16.gmra.mxu0 %v425
        %v2474 = vpop.f32.mrf.mxu0
        %v2475 = vadd.f32 %v2431, %v2474
        %v2476 = vpop.f32.mrf.mxu0
        %v2477 = vadd.f32 %v2433, %v2476
        %2478 = vmatmul.bf16.gmra.mxu0 %v433
        %v2479 = vpop.f32.mrf.mxu0
        %v2480 = vadd.f32 %v2436, %v2479
        %v2481 = vpop.f32.mrf.mxu0
        %v2482 = vadd.f32 %v2438, %v2481
        %2483 = vmatmul.bf16.gmra.mxu0 %v441
        %v2484 = vpop.f32.mrf.mxu0
        %v2485 = vadd.f32 %v2441, %v2484
        %v2486 = vpop.f32.mrf.mxu0
        %v2487 = vadd.f32 %v2443, %v2486
        %2488 = vmatmul.bf16.gmra.mxu0 %v449
        %v2489 = vpop.f32.mrf.mxu0
        %v2490 = vadd.f32 %v2446, %v2489
        %v2491 = vpop.f32.mrf.mxu0
        %v2492 = vadd.f32 %v2448, %v2491
        %2493 = vmatmul.bf16.gmra.mxu0 %v457
        %v2494 = vpop.f32.mrf.mxu0
        %v2495 = vadd.f32 %v2451, %v2494
        %v2496 = vpop.f32.mrf.mxu0
        %v2497 = vadd.f32 %v2453, %v2496
        %2498 = vmatmul.bf16.gmra.mxu0 %v465
        %v2499 = vpop.f32.mrf.mxu0
        %v2500 = vadd.f32 %v2456, %v2499
        %v2501 = vpop.f32.mrf.mxu0
        %v2502 = vadd.f32 %v2458, %v2501
        %2503 = vmatmul.bf16.gmra.mxu0 %v473
        %v2504 = vpop.f32.mrf.mxu0
        %v2505 = vadd.f32 %v2461, %v2504
        %v2506 = vpop.f32.mrf.mxu0
        %v2507 = vadd.f32 %v2463, %v2506
        %2508 = vdwg.mxu0
        %2509 = vmatpush.bf16.msra.mxu0 %v1638
        %2510 = vmatpush.bf16.msra.mxu0 %v1634
        %2511 = vmatpush.bf16.msra.mxu0 %v1630
        %2512 = vmatpush.bf16.msra.mxu0 %v1626
        %2513 = vmatpush.bf16.msra.mxu0 %v1622
        %2514 = vmatpush.bf16.msra.mxu0 %v1618
        %2515 = vmatpush.bf16.msra.mxu0 %v1614
        %2516 = vmatpush.bf16.msra.mxu0 %v1610
        %2517 = vmatmul.bf16.gmra.mxu0 %v426
        %v2518 = vpop.f32.mrf.mxu0
        %v2519 = vadd.f32 %v2475, %v2518
        %v2520 = vpop.f32.mrf.mxu0
        %v2521 = vadd.f32 %v2477, %v2520
        %2522 = vmatmul.bf16.gmra.mxu0 %v434
        %v2523 = vpop.f32.mrf.mxu0
        %v2524 = vadd.f32 %v2480, %v2523
        %v2525 = vpop.f32.mrf.mxu0
        %v2526 = vadd.f32 %v2482, %v2525
        %2527 = vmatmul.bf16.gmra.mxu0 %v442
        %v2528 = vpop.f32.mrf.mxu0
        %v2529 = vadd.f32 %v2485, %v2528
        %v2530 = vpop.f32.mrf.mxu0
        %v2531 = vadd.f32 %v2487, %v2530
        %2532 = vmatmul.bf16.gmra.mxu0 %v450
        %v2533 = vpop.f32.mrf.mxu0
        %v2534 = vadd.f32 %v2490, %v2533
        %v2535 = vpop.f32.mrf.mxu0
        %v2536 = vadd.f32 %v2492, %v2535
        %2537 = vmatmul.bf16.gmra.mxu0 %v458
        %v2538 = vpop.f32.mrf.mxu0
        %v2539 = vadd.f32 %v2495, %v2538
        %v2540 = vpop.f32.mrf.mxu0
        %v2541 = vadd.f32 %v2497, %v2540
        %2542 = vmatmul.bf16.gmra.mxu0 %v466
        %v2543 = vpop.f32.mrf.mxu0
        %v2544 = vadd.f32 %v2500, %v2543
        %v2545 = vpop.f32.mrf.mxu0
        %v2546 = vadd.f32 %v2502, %v2545
        %2547 = vmatmul.bf16.gmra.mxu0 %v474
        %v2548 = vpop.f32.mrf.mxu0
        %v2549 = vadd.f32 %v2505, %v2548
        %v2550 = vpop.f32.mrf.mxu0
        %v2551 = vadd.f32 %v2507, %v2550
        %2552 = vdwg.mxu0
        %2553 = vmatpush.bf16.msra.mxu0 %v1670
        %2554 = vmatpush.bf16.msra.mxu0 %v1666
        %2555 = vmatpush.bf16.msra.mxu0 %v1662
        %2556 = vmatpush.bf16.msra.mxu0 %v1658
        %2557 = vmatpush.bf16.msra.mxu0 %v1654
        %2558 = vmatpush.bf16.msra.mxu0 %v1650
        %2559 = vmatpush.bf16.msra.mxu0 %v1646
        %2560 = vmatpush.bf16.msra.mxu0 %v1642
        %2561 = vmatmul.bf16.gmra.mxu0 %v427
        %v2562 = vpop.f32.mrf.mxu0
        %v2563 = vadd.f32 %v2519, %v2562
        %v2564 = vpop.f32.mrf.mxu0
        %v2565 = vadd.f32 %v2521, %v2564
        %2566 = vmatmul.bf16.gmra.mxu0 %v435
        %v2567 = vpop.f32.mrf.mxu0
        %v2568 = vadd.f32 %v2524, %v2567
        %v2569 = vpop.f32.mrf.mxu0
        %v2570 = vadd.f32 %v2526, %v2569
        %2571 = vmatmul.bf16.gmra.mxu0 %v443
        %v2572 = vpop.f32.mrf.mxu0
        %v2573 = vadd.f32 %v2529, %v2572
        %v2574 = vpop.f32.mrf.mxu0
        %v2575 = vadd.f32 %v2531, %v2574
        %2576 = vmatmul.bf16.gmra.mxu0 %v451
        %v2577 = vpop.f32.mrf.mxu0
        %v2578 = vadd.f32 %v2534, %v2577
        %v2579 = vpop.f32.mrf.mxu0
        %v2580 = vadd.f32 %v2536, %v2579
        %2581 = vmatmul.bf16.gmra.mxu0 %v459
        %v2582 = vpop.f32.mrf.mxu0
        %v2583 = vadd.f32 %v2539, %v2582
        %v2584 = vpop.f32.mrf.mxu0
        %v2585 = vadd.f32 %v2541, %v2584
        %2586 = vmatmul.bf16.gmra.mxu0 %v467
        %v2587 = vpop.f32.mrf.mxu0
        %v2588 = vadd.f32 %v2544, %v2587
        %v2589 = vpop.f32.mrf.mxu0
        %v2590 = vadd.f32 %v2546, %v2589
        %2591 = vmatmul.bf16.gmra.mxu0 %v475
        %v2592 = vpop.f32.mrf.mxu0
        %v2593 = vadd.f32 %v2549, %v2592
        %v2594 = vpop.f32.mrf.mxu0
        %v2595 = vadd.f32 %v2551, %v2594
        %2596 = vdwg.mxu0
        %2597 = vmatpush.bf16.msra.mxu0 %v1702
        %2598 = vmatpush.bf16.msra.mxu0 %v1698
        %2599 = vmatpush.bf16.msra.mxu0 %v1694
        %2600 = vmatpush.bf16.msra.mxu0 %v1690
        %2601 = vmatpush.bf16.msra.mxu0 %v1686
        %2602 = vmatpush.bf16.msra.mxu0 %v1682
        %2603 = vmatpush.bf16.msra.mxu0 %v1678
        %2604 = vmatpush.bf16.msra.mxu0 %v1674
        %2605 = vmatmul.bf16.gmra.mxu0 %v428
        %v2606 = vpop.f32.mrf.mxu0
        %v2607 = vadd.f32 %v2563, %v2606
        %v2608 = vpop.f32.mrf.mxu0
        %v2609 = vadd.f32 %v2565, %v2608
        %2610 = vmatmul.bf16.gmra.mxu0 %v436
        %v2611 = vpop.f32.mrf.mxu0
        %v2612 = vadd.f32 %v2568, %v2611
        %v2613 = vpop.f32.mrf.mxu0
        %v2614 = vadd.f32 %v2570, %v2613
        %2615 = vmatmul.bf16.gmra.mxu0 %v444
        %v2616 = vpop.f32.mrf.mxu0
        %v2617 = vadd.f32 %v2573, %v2616
        %v2618 = vpop.f32.mrf.mxu0
        %v2619 = vadd.f32 %v2575, %v2618
        %2620 = vmatmul.bf16.gmra.mxu0 %v452
        %v2621 = vpop.f32.mrf.mxu0
        %v2622 = vadd.f32 %v2578, %v2621
        %v2623 = vpop.f32.mrf.mxu0
        %v2624 = vadd.f32 %v2580, %v2623
        %2625 = vmatmul.bf16.gmra.mxu0 %v460
        %v2626 = vpop.f32.mrf.mxu0
        %v2627 = vadd.f32 %v2583, %v2626
        %v2628 = vpop.f32.mrf.mxu0
        %v2629 = vadd.f32 %v2585, %v2628
        %2630 = vmatmul.bf16.gmra.mxu0 %v468
        %v2631 = vpop.f32.mrf.mxu0
        %v2632 = vadd.f32 %v2588, %v2631
        %v2633 = vpop.f32.mrf.mxu0
        %v2634 = vadd.f32 %v2590, %v2633
        %2635 = vmatmul.bf16.gmra.mxu0 %v476
        %v2636 = vpop.f32.mrf.mxu0
        %v2637 = vadd.f32 %v2593, %v2636
        %v2638 = vpop.f32.mrf.mxu0
        %v2639 = vadd.f32 %v2595, %v2638
        %2640 = vdwg.mxu0
        %2641 = vmatpush.bf16.msra.mxu0 %v1734
        %2642 = vmatpush.bf16.msra.mxu0 %v1730
        %2643 = vmatpush.bf16.msra.mxu0 %v1726
        %2644 = vmatpush.bf16.msra.mxu0 %v1722
        %2645 = vmatpush.bf16.msra.mxu0 %v1718
        %2646 = vmatpush.bf16.msra.mxu0 %v1714
        %2647 = vmatpush.bf16.msra.mxu0 %v1710
        %2648 = vmatpush.bf16.msra.mxu0 %v1706
        %2649 = vmatmul.bf16.gmra.mxu0 %v429
        %v2650 = vpop.f32.mrf.mxu0
        %v2651 = vadd.f32 %v2607, %v2650
        %v2652 = vpop.f32.mrf.mxu0
        %v2653 = vadd.f32 %v2609, %v2652
        %2654 = vmatmul.bf16.gmra.mxu0 %v437
        %v2655 = vpop.f32.mrf.mxu0
        %v2656 = vadd.f32 %v2612, %v2655
        %v2657 = vpop.f32.mrf.mxu0
        %v2658 = vadd.f32 %v2614, %v2657
        %2659 = vmatmul.bf16.gmra.mxu0 %v445
        %v2660 = vpop.f32.mrf.mxu0
        %v2661 = vadd.f32 %v2617, %v2660
        %v2662 = vpop.f32.mrf.mxu0
        %v2663 = vadd.f32 %v2619, %v2662
        %2664 = vmatmul.bf16.gmra.mxu0 %v453
        %v2665 = vpop.f32.mrf.mxu0
        %v2666 = vadd.f32 %v2622, %v2665
        %v2667 = vpop.f32.mrf.mxu0
        %v2668 = vadd.f32 %v2624, %v2667
        %2669 = vmatmul.bf16.gmra.mxu0 %v461
        %v2670 = vpop.f32.mrf.mxu0
        %v2671 = vadd.f32 %v2627, %v2670
        %v2672 = vpop.f32.mrf.mxu0
        %v2673 = vadd.f32 %v2629, %v2672
        %2674 = vmatmul.bf16.gmra.mxu0 %v469
        %v2675 = vpop.f32.mrf.mxu0
        %v2676 = vadd.f32 %v2632, %v2675
        %v2677 = vpop.f32.mrf.mxu0
        %v2678 = vadd.f32 %v2634, %v2677
        %2679 = vmatmul.bf16.gmra.mxu0 %v477
        %v2680 = vpop.f32.mrf.mxu0
        %v2681 = vadd.f32 %v2637, %v2680
        %v2682 = vpop.f32.mrf.mxu0
        %v2683 = vadd.f32 %v2639, %v2682
        %2684 = vdwg.mxu0
        %2685 = vmatpush.bf16.msra.mxu0 %v1766
        %2686 = vmatpush.bf16.msra.mxu0 %v1762
        %2687 = vmatpush.bf16.msra.mxu0 %v1758
        %2688 = vmatpush.bf16.msra.mxu0 %v1754
        %2689 = vmatpush.bf16.msra.mxu0 %v1750
        %2690 = vmatpush.bf16.msra.mxu0 %v1746
        %2691 = vmatpush.bf16.msra.mxu0 %v1742
        %2692 = vmatpush.bf16.msra.mxu0 %v1738
        %2693 = vmatmul.bf16.gmra.mxu0 %v430
        %v2694 = vpop.f32.mrf.mxu0
        %v2695 = vadd.f32 %v2651, %v2694
        %v2696 = vpop.f32.mrf.mxu0
        %v2697 = vadd.f32 %v2653, %v2696
        %2698 = vmatmul.bf16.gmra.mxu0 %v438
        %v2699 = vpop.f32.mrf.mxu0
        %v2700 = vadd.f32 %v2656, %v2699
        %v2701 = vpop.f32.mrf.mxu0
        %v2702 = vadd.f32 %v2658, %v2701
        %2703 = vmatmul.bf16.gmra.mxu0 %v446
        %v2704 = vpop.f32.mrf.mxu0
        %v2705 = vadd.f32 %v2661, %v2704
        %v2706 = vpop.f32.mrf.mxu0
        %v2707 = vadd.f32 %v2663, %v2706
        %2708 = vmatmul.bf16.gmra.mxu0 %v454
        %v2709 = vpop.f32.mrf.mxu0
        %v2710 = vadd.f32 %v2666, %v2709
        %v2711 = vpop.f32.mrf.mxu0
        %v2712 = vadd.f32 %v2668, %v2711
        %2713 = vmatmul.bf16.gmra.mxu0 %v462
        %v2714 = vpop.f32.mrf.mxu0
        %v2715 = vadd.f32 %v2671, %v2714
        %v2716 = vpop.f32.mrf.mxu0
        %v2717 = vadd.f32 %v2673, %v2716
        %2718 = vmatmul.bf16.gmra.mxu0 %v470
        %v2719 = vpop.f32.mrf.mxu0
        %v2720 = vadd.f32 %v2676, %v2719
        %v2721 = vpop.f32.mrf.mxu0
        %v2722 = vadd.f32 %v2678, %v2721
        %2723 = vmatmul.bf16.gmra.mxu0 %v478
        %v2724 = vpop.f32.mrf.mxu0
        %v2725 = vadd.f32 %v2681, %v2724
        %v2726 = vpop.f32.mrf.mxu0
        %v2727 = vadd.f32 %v2683, %v2726
        %2728 = vdwg.mxu0
        %2729 = vmatpush.bf16.msra.mxu0 %v1543
        %2730 = vmatpush.bf16.msra.mxu0 %v1539
        %2731 = vmatpush.bf16.msra.mxu0 %v1535
        %2732 = vmatpush.bf16.msra.mxu0 %v1531
        %2733 = vmatpush.bf16.msra.mxu0 %v1527
        %2734 = vmatpush.bf16.msra.mxu0 %v1523
        %2735 = vmatpush.bf16.msra.mxu0 %v1519
        %2736 = vmatpush.bf16.msra.mxu0 %v1515
        %2737 = vmatmul.bf16.gmra.mxu0 %v423
        %v2738 = vpop.f32.mrf.mxu0
        %v2739 = vadd.f32 %v739, %v2738
        %v2740 = vpop.f32.mrf.mxu0
        %v2741 = vadd.f32 %v739, %v2740
        %2742 = vmatmul.bf16.gmra.mxu0 %v431
        %v2743 = vpop.f32.mrf.mxu0
        %v2744 = vadd.f32 %v739, %v2743
        %v2745 = vpop.f32.mrf.mxu0
        %v2746 = vadd.f32 %v739, %v2745
        %2747 = vmatmul.bf16.gmra.mxu0 %v439
        %v2748 = vpop.f32.mrf.mxu0
        %v2749 = vadd.f32 %v739, %v2748
        %v2750 = vpop.f32.mrf.mxu0
        %v2751 = vadd.f32 %v739, %v2750
        %2752 = vmatmul.bf16.gmra.mxu0 %v447
        %v2753 = vpop.f32.mrf.mxu0
        %v2754 = vadd.f32 %v739, %v2753
        %v2755 = vpop.f32.mrf.mxu0
        %v2756 = vadd.f32 %v739, %v2755
        %2757 = vmatmul.bf16.gmra.mxu0 %v455
        %v2758 = vpop.f32.mrf.mxu0
        %v2759 = vadd.f32 %v739, %v2758
        %v2760 = vpop.f32.mrf.mxu0
        %v2761 = vadd.f32 %v739, %v2760
        %2762 = vmatmul.bf16.gmra.mxu0 %v463
        %v2763 = vpop.f32.mrf.mxu0
        %v2764 = vadd.f32 %v739, %v2763
        %v2765 = vpop.f32.mrf.mxu0
        %v2766 = vadd.f32 %v739, %v2765
        %2767 = vmatmul.bf16.gmra.mxu0 %v471
        %v2768 = vpop.f32.mrf.mxu0
        %v2769 = vadd.f32 %v739, %v2768
        %v2770 = vpop.f32.mrf.mxu0
        %v2771 = vadd.f32 %v739, %v2770
        %2772 = vdwg.mxu0
        %2773 = vmatpush.bf16.msra.mxu0 %v1575
        %2774 = vmatpush.bf16.msra.mxu0 %v1571
        %2775 = vmatpush.bf16.msra.mxu0 %v1567
        %2776 = vmatpush.bf16.msra.mxu0 %v1563
        %2777 = vmatpush.bf16.msra.mxu0 %v1559
        %2778 = vmatpush.bf16.msra.mxu0 %v1555
        %2779 = vmatpush.bf16.msra.mxu0 %v1551
        %2780 = vmatpush.bf16.msra.mxu0 %v1547
        %2781 = vmatmul.bf16.gmra.mxu0 %v424
        %v2782 = vpop.f32.mrf.mxu0
        %v2783 = vadd.f32 %v2739, %v2782
        %v2784 = vpop.f32.mrf.mxu0
        %v2785 = vadd.f32 %v2741, %v2784
        %2786 = vmatmul.bf16.gmra.mxu0 %v432
        %v2787 = vpop.f32.mrf.mxu0
        %v2788 = vadd.f32 %v2744, %v2787
        %v2789 = vpop.f32.mrf.mxu0
        %v2790 = vadd.f32 %v2746, %v2789
        %2791 = vmatmul.bf16.gmra.mxu0 %v440
        %v2792 = vpop.f32.mrf.mxu0
        %v2793 = vadd.f32 %v2749, %v2792
        %v2794 = vpop.f32.mrf.mxu0
        %v2795 = vadd.f32 %v2751, %v2794
        %2796 = vmatmul.bf16.gmra.mxu0 %v448
        %v2797 = vpop.f32.mrf.mxu0
        %v2798 = vadd.f32 %v2754, %v2797
        %v2799 = vpop.f32.mrf.mxu0
        %v2800 = vadd.f32 %v2756, %v2799
        %2801 = vmatmul.bf16.gmra.mxu0 %v456
        %v2802 = vpop.f32.mrf.mxu0
        %v2803 = vadd.f32 %v2759, %v2802
        %v2804 = vpop.f32.mrf.mxu0
        %v2805 = vadd.f32 %v2761, %v2804
        %2806 = vmatmul.bf16.gmra.mxu0 %v464
        %v2807 = vpop.f32.mrf.mxu0
        %v2808 = vadd.f32 %v2764, %v2807
        %v2809 = vpop.f32.mrf.mxu0
        %v2810 = vadd.f32 %v2766, %v2809
        %2811 = vmatmul.bf16.gmra.mxu0 %v472
        %v2812 = vpop.f32.mrf.mxu0
        %v2813 = vadd.f32 %v2769, %v2812
        %v2814 = vpop.f32.mrf.mxu0
        %v2815 = vadd.f32 %v2771, %v2814
        %2816 = vdwg.mxu0
        %2817 = vmatpush.bf16.msra.mxu0 %v1607
        %2818 = vmatpush.bf16.msra.mxu0 %v1603
        %2819 = vmatpush.bf16.msra.mxu0 %v1599
        %2820 = vmatpush.bf16.msra.mxu0 %v1595
        %2821 = vmatpush.bf16.msra.mxu0 %v1591
        %2822 = vmatpush.bf16.msra.mxu0 %v1587
        %2823 = vmatpush.bf16.msra.mxu0 %v1583
        %2824 = vmatpush.bf16.msra.mxu0 %v1579
        %2825 = vmatmul.bf16.gmra.mxu0 %v425
        %v2826 = vpop.f32.mrf.mxu0
        %v2827 = vadd.f32 %v2783, %v2826
        %v2828 = vpop.f32.mrf.mxu0
        %v2829 = vadd.f32 %v2785, %v2828
        %2830 = vmatmul.bf16.gmra.mxu0 %v433
        %v2831 = vpop.f32.mrf.mxu0
        %v2832 = vadd.f32 %v2788, %v2831
        %v2833 = vpop.f32.mrf.mxu0
        %v2834 = vadd.f32 %v2790, %v2833
        %2835 = vmatmul.bf16.gmra.mxu0 %v441
        %v2836 = vpop.f32.mrf.mxu0
        %v2837 = vadd.f32 %v2793, %v2836
        %v2838 = vpop.f32.mrf.mxu0
        %v2839 = vadd.f32 %v2795, %v2838
        %2840 = vmatmul.bf16.gmra.mxu0 %v449
        %v2841 = vpop.f32.mrf.mxu0
        %v2842 = vadd.f32 %v2798, %v2841
        %v2843 = vpop.f32.mrf.mxu0
        %v2844 = vadd.f32 %v2800, %v2843
        %2845 = vmatmul.bf16.gmra.mxu0 %v457
        %v2846 = vpop.f32.mrf.mxu0
        %v2847 = vadd.f32 %v2803, %v2846
        %v2848 = vpop.f32.mrf.mxu0
        %v2849 = vadd.f32 %v2805, %v2848
        %2850 = vmatmul.bf16.gmra.mxu0 %v465
        %v2851 = vpop.f32.mrf.mxu0
        %v2852 = vadd.f32 %v2808, %v2851
        %v2853 = vpop.f32.mrf.mxu0
        %v2854 = vadd.f32 %v2810, %v2853
        %2855 = vmatmul.bf16.gmra.mxu0 %v473
        %v2856 = vpop.f32.mrf.mxu0
        %v2857 = vadd.f32 %v2813, %v2856
        %v2858 = vpop.f32.mrf.mxu0
        %v2859 = vadd.f32 %v2815, %v2858
        %2860 = vdwg.mxu0
        %2861 = vmatpush.bf16.msra.mxu0 %v1639
        %2862 = vmatpush.bf16.msra.mxu0 %v1635
        %2863 = vmatpush.bf16.msra.mxu0 %v1631
        %2864 = vmatpush.bf16.msra.mxu0 %v1627
        %2865 = vmatpush.bf16.msra.mxu0 %v1623
        %2866 = vmatpush.bf16.msra.mxu0 %v1619
        %2867 = vmatpush.bf16.msra.mxu0 %v1615
        %2868 = vmatpush.bf16.msra.mxu0 %v1611
        %2869 = vmatmul.bf16.gmra.mxu0 %v426
        %v2870 = vpop.f32.mrf.mxu0
        %v2871 = vadd.f32 %v2827, %v2870
        %v2872 = vpop.f32.mrf.mxu0
        %v2873 = vadd.f32 %v2829, %v2872
        %2874 = vmatmul.bf16.gmra.mxu0 %v434
        %v2875 = vpop.f32.mrf.mxu0
        %v2876 = vadd.f32 %v2832, %v2875
        %v2877 = vpop.f32.mrf.mxu0
        %v2878 = vadd.f32 %v2834, %v2877
        %2879 = vmatmul.bf16.gmra.mxu0 %v442
        %v2880 = vpop.f32.mrf.mxu0
        %v2881 = vadd.f32 %v2837, %v2880
        %v2882 = vpop.f32.mrf.mxu0
        %v2883 = vadd.f32 %v2839, %v2882
        %2884 = vmatmul.bf16.gmra.mxu0 %v450
        %v2885 = vpop.f32.mrf.mxu0
        %v2886 = vadd.f32 %v2842, %v2885
        %v2887 = vpop.f32.mrf.mxu0
        %v2888 = vadd.f32 %v2844, %v2887
        %2889 = vmatmul.bf16.gmra.mxu0 %v458
        %v2890 = vpop.f32.mrf.mxu0
        %v2891 = vadd.f32 %v2847, %v2890
        %v2892 = vpop.f32.mrf.mxu0
        %v2893 = vadd.f32 %v2849, %v2892
        %2894 = vmatmul.bf16.gmra.mxu0 %v466
        %v2895 = vpop.f32.mrf.mxu0
        %v2896 = vadd.f32 %v2852, %v2895
        %v2897 = vpop.f32.mrf.mxu0
        %v2898 = vadd.f32 %v2854, %v2897
        %2899 = vmatmul.bf16.gmra.mxu0 %v474
        %v2900 = vpop.f32.mrf.mxu0
        %v2901 = vadd.f32 %v2857, %v2900
        %v2902 = vpop.f32.mrf.mxu0
        %v2903 = vadd.f32 %v2859, %v2902
        %2904 = vdwg.mxu0
        %2905 = vmatpush.bf16.msra.mxu0 %v1671
        %2906 = vmatpush.bf16.msra.mxu0 %v1667
        %2907 = vmatpush.bf16.msra.mxu0 %v1663
        %2908 = vmatpush.bf16.msra.mxu0 %v1659
        %2909 = vmatpush.bf16.msra.mxu0 %v1655
        %2910 = vmatpush.bf16.msra.mxu0 %v1651
        %2911 = vmatpush.bf16.msra.mxu0 %v1647
        %2912 = vmatpush.bf16.msra.mxu0 %v1643
        %2913 = vmatmul.bf16.gmra.mxu0 %v427
        %v2914 = vpop.f32.mrf.mxu0
        %v2915 = vadd.f32 %v2871, %v2914
        %v2916 = vpop.f32.mrf.mxu0
        %v2917 = vadd.f32 %v2873, %v2916
        %2918 = vmatmul.bf16.gmra.mxu0 %v435
        %v2919 = vpop.f32.mrf.mxu0
        %v2920 = vadd.f32 %v2876, %v2919
        %v2921 = vpop.f32.mrf.mxu0
        %v2922 = vadd.f32 %v2878, %v2921
        %2923 = vmatmul.bf16.gmra.mxu0 %v443
        %v2924 = vpop.f32.mrf.mxu0
        %v2925 = vadd.f32 %v2881, %v2924
        %v2926 = vpop.f32.mrf.mxu0
        %v2927 = vadd.f32 %v2883, %v2926
        %2928 = vmatmul.bf16.gmra.mxu0 %v451
        %v2929 = vpop.f32.mrf.mxu0
        %v2930 = vadd.f32 %v2886, %v2929
        %v2931 = vpop.f32.mrf.mxu0
        %v2932 = vadd.f32 %v2888, %v2931
        %2933 = vmatmul.bf16.gmra.mxu0 %v459
        %v2934 = vpop.f32.mrf.mxu0
        %v2935 = vadd.f32 %v2891, %v2934
        %v2936 = vpop.f32.mrf.mxu0
        %v2937 = vadd.f32 %v2893, %v2936
        %2938 = vmatmul.bf16.gmra.mxu0 %v467
        %v2939 = vpop.f32.mrf.mxu0
        %v2940 = vadd.f32 %v2896, %v2939
        %v2941 = vpop.f32.mrf.mxu0
        %v2942 = vadd.f32 %v2898, %v2941
        %2943 = vmatmul.bf16.gmra.mxu0 %v475
        %v2944 = vpop.f32.mrf.mxu0
        %v2945 = vadd.f32 %v2901, %v2944
        %v2946 = vpop.f32.mrf.mxu0
        %v2947 = vadd.f32 %v2903, %v2946
        %2948 = vdwg.mxu0
        %2949 = vmatpush.bf16.msra.mxu0 %v1703
        %2950 = vmatpush.bf16.msra.mxu0 %v1699
        %2951 = vmatpush.bf16.msra.mxu0 %v1695
        %2952 = vmatpush.bf16.msra.mxu0 %v1691
        %2953 = vmatpush.bf16.msra.mxu0 %v1687
        %2954 = vmatpush.bf16.msra.mxu0 %v1683
        %2955 = vmatpush.bf16.msra.mxu0 %v1679
        %2956 = vmatpush.bf16.msra.mxu0 %v1675
        %2957 = vmatmul.bf16.gmra.mxu0 %v428
        %v2958 = vpop.f32.mrf.mxu0
        %v2959 = vadd.f32 %v2915, %v2958
        %v2960 = vpop.f32.mrf.mxu0
        %v2961 = vadd.f32 %v2917, %v2960
        %2962 = vmatmul.bf16.gmra.mxu0 %v436
        %v2963 = vpop.f32.mrf.mxu0
        %v2964 = vadd.f32 %v2920, %v2963
        %v2965 = vpop.f32.mrf.mxu0
        %v2966 = vadd.f32 %v2922, %v2965
        %2967 = vmatmul.bf16.gmra.mxu0 %v444
        %v2968 = vpop.f32.mrf.mxu0
        %v2969 = vadd.f32 %v2925, %v2968
        %v2970 = vpop.f32.mrf.mxu0
        %v2971 = vadd.f32 %v2927, %v2970
        %2972 = vmatmul.bf16.gmra.mxu0 %v452
        %v2973 = vpop.f32.mrf.mxu0
        %v2974 = vadd.f32 %v2930, %v2973
        %v2975 = vpop.f32.mrf.mxu0
        %v2976 = vadd.f32 %v2932, %v2975
        %2977 = vmatmul.bf16.gmra.mxu0 %v460
        %v2978 = vpop.f32.mrf.mxu0
        %v2979 = vadd.f32 %v2935, %v2978
        %v2980 = vpop.f32.mrf.mxu0
        %v2981 = vadd.f32 %v2937, %v2980
        %2982 = vmatmul.bf16.gmra.mxu0 %v468
        %v2983 = vpop.f32.mrf.mxu0
        %v2984 = vadd.f32 %v2940, %v2983
        %v2985 = vpop.f32.mrf.mxu0
        %v2986 = vadd.f32 %v2942, %v2985
        %2987 = vmatmul.bf16.gmra.mxu0 %v476
        %v2988 = vpop.f32.mrf.mxu0
        %v2989 = vadd.f32 %v2945, %v2988
        %v2990 = vpop.f32.mrf.mxu0
        %v2991 = vadd.f32 %v2947, %v2990
        %2992 = vdwg.mxu0
        %2993 = vmatpush.bf16.msra.mxu0 %v1735
        %2994 = vmatpush.bf16.msra.mxu0 %v1731
        %2995 = vmatpush.bf16.msra.mxu0 %v1727
        %2996 = vmatpush.bf16.msra.mxu0 %v1723
        %2997 = vmatpush.bf16.msra.mxu0 %v1719
        %2998 = vmatpush.bf16.msra.mxu0 %v1715
        %2999 = vmatpush.bf16.msra.mxu0 %v1711
        %3000 = vmatpush.bf16.msra.mxu0 %v1707
        %3001 = vmatmul.bf16.gmra.mxu0 %v429
        %v3002 = vpop.f32.mrf.mxu0
        %v3003 = vadd.f32 %v2959, %v3002
        %v3004 = vpop.f32.mrf.mxu0
        %v3005 = vadd.f32 %v2961, %v3004
        %3006 = vmatmul.bf16.gmra.mxu0 %v437
        %v3007 = vpop.f32.mrf.mxu0
        %v3008 = vadd.f32 %v2964, %v3007
        %v3009 = vpop.f32.mrf.mxu0
        %v3010 = vadd.f32 %v2966, %v3009
        %3011 = vmatmul.bf16.gmra.mxu0 %v445
        %v3012 = vpop.f32.mrf.mxu0
        %v3013 = vadd.f32 %v2969, %v3012
        %v3014 = vpop.f32.mrf.mxu0
        %v3015 = vadd.f32 %v2971, %v3014
        %3016 = vmatmul.bf16.gmra.mxu0 %v453
        %v3017 = vpop.f32.mrf.mxu0
        %v3018 = vadd.f32 %v2974, %v3017
        %v3019 = vpop.f32.mrf.mxu0
        %v3020 = vadd.f32 %v2976, %v3019
        %3021 = vmatmul.bf16.gmra.mxu0 %v461
        %v3022 = vpop.f32.mrf.mxu0
        %v3023 = vadd.f32 %v2979, %v3022
        %v3024 = vpop.f32.mrf.mxu0
        %v3025 = vadd.f32 %v2981, %v3024
        %3026 = vmatmul.bf16.gmra.mxu0 %v469
        %v3027 = vpop.f32.mrf.mxu0
        %v3028 = vadd.f32 %v2984, %v3027
        %v3029 = vpop.f32.mrf.mxu0
        %v3030 = vadd.f32 %v2986, %v3029
        %3031 = vmatmul.bf16.gmra.mxu0 %v477
        %v3032 = vpop.f32.mrf.mxu0
        %v3033 = vadd.f32 %v2989, %v3032
        %v3034 = vpop.f32.mrf.mxu0
        %v3035 = vadd.f32 %v2991, %v3034
        %3036 = vdwg.mxu0
        %3037 = vmatpush.bf16.msra.mxu0 %v1767
        %3038 = vmatpush.bf16.msra.mxu0 %v1763
        %3039 = vmatpush.bf16.msra.mxu0 %v1759
        %3040 = vmatpush.bf16.msra.mxu0 %v1755
        %3041 = vmatpush.bf16.msra.mxu0 %v1751
        %3042 = vmatpush.bf16.msra.mxu0 %v1747
        %3043 = vmatpush.bf16.msra.mxu0 %v1743
        %3044 = vmatpush.bf16.msra.mxu0 %v1739
        %3045 = vmatmul.bf16.gmra.mxu0 %v430
        %v3046 = vpop.f32.mrf.mxu0
        %v3047 = vadd.f32 %v3003, %v3046
        %v3048 = vpop.f32.mrf.mxu0
        %v3049 = vadd.f32 %v3005, %v3048
        %3050 = vmatmul.bf16.gmra.mxu0 %v438
        %v3051 = vpop.f32.mrf.mxu0
        %v3052 = vadd.f32 %v3008, %v3051
        %v3053 = vpop.f32.mrf.mxu0
        %v3054 = vadd.f32 %v3010, %v3053
        %3055 = vmatmul.bf16.gmra.mxu0 %v446
        %v3056 = vpop.f32.mrf.mxu0
        %v3057 = vadd.f32 %v3013, %v3056
        %v3058 = vpop.f32.mrf.mxu0
        %v3059 = vadd.f32 %v3015, %v3058
        %3060 = vmatmul.bf16.gmra.mxu0 %v454
        %v3061 = vpop.f32.mrf.mxu0
        %v3062 = vadd.f32 %v3018, %v3061
        %v3063 = vpop.f32.mrf.mxu0
        %v3064 = vadd.f32 %v3020, %v3063
        %3065 = vmatmul.bf16.gmra.mxu0 %v462
        %v3066 = vpop.f32.mrf.mxu0
        %v3067 = vadd.f32 %v3023, %v3066
        %v3068 = vpop.f32.mrf.mxu0
        %v3069 = vadd.f32 %v3025, %v3068
        %3070 = vmatmul.bf16.gmra.mxu0 %v470
        %v3071 = vpop.f32.mrf.mxu0
        %v3072 = vadd.f32 %v3028, %v3071
        %v3073 = vpop.f32.mrf.mxu0
        %v3074 = vadd.f32 %v3030, %v3073
        %3075 = vmatmul.bf16.gmra.mxu0 %v478
        %v3076 = vpop.f32.mrf.mxu0
        %v3077 = vadd.f32 %v3033, %v3076
        %v3078 = vpop.f32.mrf.mxu0
        %v3079 = vadd.f32 %v3035, %v3078
        %3080 = vdwg.mxu0
        %3081 = vmatpush.bf16.msra.mxu0 %v1544
        %3082 = vmatpush.bf16.msra.mxu0 %v1540
        %3083 = vmatpush.bf16.msra.mxu0 %v1536
        %3084 = vmatpush.bf16.msra.mxu0 %v1532
        %3085 = vmatpush.bf16.msra.mxu0 %v1528
        %3086 = vmatpush.bf16.msra.mxu0 %v1524
        %3087 = vmatpush.bf16.msra.mxu0 %v1520
        %3088 = vmatpush.bf16.msra.mxu0 %v1516
        %3089 = vmatmul.bf16.gmra.mxu0 %v423
        %v3090 = vpop.f32.mrf.mxu0
        %v3091 = vadd.f32 %v740, %v3090
        %v3092 = vpop.f32.mrf.mxu0
        %v3093 = vadd.f32 %v740, %v3092
        %3094 = vmatmul.bf16.gmra.mxu0 %v431
        %v3095 = vpop.f32.mrf.mxu0
        %v3096 = vadd.f32 %v740, %v3095
        %v3097 = vpop.f32.mrf.mxu0
        %v3098 = vadd.f32 %v740, %v3097
        %3099 = vmatmul.bf16.gmra.mxu0 %v439
        %v3100 = vpop.f32.mrf.mxu0
        %v3101 = vadd.f32 %v740, %v3100
        %v3102 = vpop.f32.mrf.mxu0
        %v3103 = vadd.f32 %v740, %v3102
        %3104 = vmatmul.bf16.gmra.mxu0 %v447
        %v3105 = vpop.f32.mrf.mxu0
        %v3106 = vadd.f32 %v740, %v3105
        %v3107 = vpop.f32.mrf.mxu0
        %v3108 = vadd.f32 %v740, %v3107
        %3109 = vmatmul.bf16.gmra.mxu0 %v455
        %v3110 = vpop.f32.mrf.mxu0
        %v3111 = vadd.f32 %v740, %v3110
        %v3112 = vpop.f32.mrf.mxu0
        %v3113 = vadd.f32 %v740, %v3112
        %3114 = vmatmul.bf16.gmra.mxu0 %v463
        %v3115 = vpop.f32.mrf.mxu0
        %v3116 = vadd.f32 %v740, %v3115
        %v3117 = vpop.f32.mrf.mxu0
        %v3118 = vadd.f32 %v740, %v3117
        %3119 = vmatmul.bf16.gmra.mxu0 %v471
        %v3120 = vpop.f32.mrf.mxu0
        %v3121 = vadd.f32 %v740, %v3120
        %v3122 = vpop.f32.mrf.mxu0
        %v3123 = vadd.f32 %v740, %v3122
        %3124 = vdwg.mxu0
        %3125 = vmatpush.bf16.msra.mxu0 %v1576
        %3126 = vmatpush.bf16.msra.mxu0 %v1572
        %3127 = vmatpush.bf16.msra.mxu0 %v1568
        %3128 = vmatpush.bf16.msra.mxu0 %v1564
        %3129 = vmatpush.bf16.msra.mxu0 %v1560
        %3130 = vmatpush.bf16.msra.mxu0 %v1556
        %3131 = vmatpush.bf16.msra.mxu0 %v1552
        %3132 = vmatpush.bf16.msra.mxu0 %v1548
        %3133 = vmatmul.bf16.gmra.mxu0 %v424
        %v3134 = vpop.f32.mrf.mxu0
        %v3135 = vadd.f32 %v3091, %v3134
        %v3136 = vpop.f32.mrf.mxu0
        %v3137 = vadd.f32 %v3093, %v3136
        %3138 = vmatmul.bf16.gmra.mxu0 %v432
        %v3139 = vpop.f32.mrf.mxu0
        %v3140 = vadd.f32 %v3096, %v3139
        %v3141 = vpop.f32.mrf.mxu0
        %v3142 = vadd.f32 %v3098, %v3141
        %3143 = vmatmul.bf16.gmra.mxu0 %v440
        %v3144 = vpop.f32.mrf.mxu0
        %v3145 = vadd.f32 %v3101, %v3144
        %v3146 = vpop.f32.mrf.mxu0
        %v3147 = vadd.f32 %v3103, %v3146
        %3148 = vmatmul.bf16.gmra.mxu0 %v448
        %v3149 = vpop.f32.mrf.mxu0
        %v3150 = vadd.f32 %v3106, %v3149
        %v3151 = vpop.f32.mrf.mxu0
        %v3152 = vadd.f32 %v3108, %v3151
        %3153 = vmatmul.bf16.gmra.mxu0 %v456
        %v3154 = vpop.f32.mrf.mxu0
        %v3155 = vadd.f32 %v3111, %v3154
        %v3156 = vpop.f32.mrf.mxu0
        %v3157 = vadd.f32 %v3113, %v3156
        %3158 = vmatmul.bf16.gmra.mxu0 %v464
        %v3159 = vpop.f32.mrf.mxu0
        %v3160 = vadd.f32 %v3116, %v3159
        %v3161 = vpop.f32.mrf.mxu0
        %v3162 = vadd.f32 %v3118, %v3161
        %3163 = vmatmul.bf16.gmra.mxu0 %v472
        %v3164 = vpop.f32.mrf.mxu0
        %v3165 = vadd.f32 %v3121, %v3164
        %v3166 = vpop.f32.mrf.mxu0
        %v3167 = vadd.f32 %v3123, %v3166
        %3168 = vdwg.mxu0
        %3169 = vmatpush.bf16.msra.mxu0 %v1608
        %3170 = vmatpush.bf16.msra.mxu0 %v1604
        %3171 = vmatpush.bf16.msra.mxu0 %v1600
        %3172 = vmatpush.bf16.msra.mxu0 %v1596
        %3173 = vmatpush.bf16.msra.mxu0 %v1592
        %3174 = vmatpush.bf16.msra.mxu0 %v1588
        %3175 = vmatpush.bf16.msra.mxu0 %v1584
        %3176 = vmatpush.bf16.msra.mxu0 %v1580
        %3177 = vmatmul.bf16.gmra.mxu0 %v425
        %v3178 = vpop.f32.mrf.mxu0
        %v3179 = vadd.f32 %v3135, %v3178
        %v3180 = vpop.f32.mrf.mxu0
        %v3181 = vadd.f32 %v3137, %v3180
        %3182 = vmatmul.bf16.gmra.mxu0 %v433
        %v3183 = vpop.f32.mrf.mxu0
        %v3184 = vadd.f32 %v3140, %v3183
        %v3185 = vpop.f32.mrf.mxu0
        %v3186 = vadd.f32 %v3142, %v3185
        %3187 = vmatmul.bf16.gmra.mxu0 %v441
        %v3188 = vpop.f32.mrf.mxu0
        %v3189 = vadd.f32 %v3145, %v3188
        %v3190 = vpop.f32.mrf.mxu0
        %v3191 = vadd.f32 %v3147, %v3190
        %3192 = vmatmul.bf16.gmra.mxu0 %v449
        %v3193 = vpop.f32.mrf.mxu0
        %v3194 = vadd.f32 %v3150, %v3193
        %v3195 = vpop.f32.mrf.mxu0
        %v3196 = vadd.f32 %v3152, %v3195
        %3197 = vmatmul.bf16.gmra.mxu0 %v457
        %v3198 = vpop.f32.mrf.mxu0
        %v3199 = vadd.f32 %v3155, %v3198
        %v3200 = vpop.f32.mrf.mxu0
        %v3201 = vadd.f32 %v3157, %v3200
        %3202 = vmatmul.bf16.gmra.mxu0 %v465
        %v3203 = vpop.f32.mrf.mxu0
        %v3204 = vadd.f32 %v3160, %v3203
        %v3205 = vpop.f32.mrf.mxu0
        %v3206 = vadd.f32 %v3162, %v3205
        %3207 = vmatmul.bf16.gmra.mxu0 %v473
        %v3208 = vpop.f32.mrf.mxu0
        %v3209 = vadd.f32 %v3165, %v3208
        %v3210 = vpop.f32.mrf.mxu0
        %v3211 = vadd.f32 %v3167, %v3210
        %3212 = vdwg.mxu0
        %3213 = vmatpush.bf16.msra.mxu0 %v1640
        %3214 = vmatpush.bf16.msra.mxu0 %v1636
        %3215 = vmatpush.bf16.msra.mxu0 %v1632
        %3216 = vmatpush.bf16.msra.mxu0 %v1628
        %3217 = vmatpush.bf16.msra.mxu0 %v1624
        %3218 = vmatpush.bf16.msra.mxu0 %v1620
        %3219 = vmatpush.bf16.msra.mxu0 %v1616
        %3220 = vmatpush.bf16.msra.mxu0 %v1612
        %3221 = vmatmul.bf16.gmra.mxu0 %v426
        %v3222 = vpop.f32.mrf.mxu0
        %v3223 = vadd.f32 %v3179, %v3222
        %v3224 = vpop.f32.mrf.mxu0
        %v3225 = vadd.f32 %v3181, %v3224
        %3226 = vmatmul.bf16.gmra.mxu0 %v434
        %v3227 = vpop.f32.mrf.mxu0
        %v3228 = vadd.f32 %v3184, %v3227
        %v3229 = vpop.f32.mrf.mxu0
        %v3230 = vadd.f32 %v3186, %v3229
        %3231 = vmatmul.bf16.gmra.mxu0 %v442
        %v3232 = vpop.f32.mrf.mxu0
        %v3233 = vadd.f32 %v3189, %v3232
        %v3234 = vpop.f32.mrf.mxu0
        %v3235 = vadd.f32 %v3191, %v3234
        %3236 = vmatmul.bf16.gmra.mxu0 %v450
        %v3237 = vpop.f32.mrf.mxu0
        %v3238 = vadd.f32 %v3194, %v3237
        %v3239 = vpop.f32.mrf.mxu0
        %v3240 = vadd.f32 %v3196, %v3239
        %3241 = vmatmul.bf16.gmra.mxu0 %v458
        %v3242 = vpop.f32.mrf.mxu0
        %v3243 = vadd.f32 %v3199, %v3242
        %v3244 = vpop.f32.mrf.mxu0
        %v3245 = vadd.f32 %v3201, %v3244
        %3246 = vmatmul.bf16.gmra.mxu0 %v466
        %v3247 = vpop.f32.mrf.mxu0
        %v3248 = vadd.f32 %v3204, %v3247
        %v3249 = vpop.f32.mrf.mxu0
        %v3250 = vadd.f32 %v3206, %v3249
        %3251 = vmatmul.bf16.gmra.mxu0 %v474
        %v3252 = vpop.f32.mrf.mxu0
        %v3253 = vadd.f32 %v3209, %v3252
        %v3254 = vpop.f32.mrf.mxu0
        %v3255 = vadd.f32 %v3211, %v3254
        %3256 = vdwg.mxu0
        %3257 = vmatpush.bf16.msra.mxu0 %v1672
        %3258 = vmatpush.bf16.msra.mxu0 %v1668
        %3259 = vmatpush.bf16.msra.mxu0 %v1664
        %3260 = vmatpush.bf16.msra.mxu0 %v1660
        %3261 = vmatpush.bf16.msra.mxu0 %v1656
        %3262 = vmatpush.bf16.msra.mxu0 %v1652
        %3263 = vmatpush.bf16.msra.mxu0 %v1648
        %3264 = vmatpush.bf16.msra.mxu0 %v1644
        %3265 = vmatmul.bf16.gmra.mxu0 %v427
        %v3266 = vpop.f32.mrf.mxu0
        %v3267 = vadd.f32 %v3223, %v3266
        %v3268 = vpop.f32.mrf.mxu0
        %v3269 = vadd.f32 %v3225, %v3268
        %3270 = vmatmul.bf16.gmra.mxu0 %v435
        %v3271 = vpop.f32.mrf.mxu0
        %v3272 = vadd.f32 %v3228, %v3271
        %v3273 = vpop.f32.mrf.mxu0
        %v3274 = vadd.f32 %v3230, %v3273
        %3275 = vmatmul.bf16.gmra.mxu0 %v443
        %v3276 = vpop.f32.mrf.mxu0
        %v3277 = vadd.f32 %v3233, %v3276
        %v3278 = vpop.f32.mrf.mxu0
        %v3279 = vadd.f32 %v3235, %v3278
        %3280 = vmatmul.bf16.gmra.mxu0 %v451
        %v3281 = vpop.f32.mrf.mxu0
        %v3282 = vadd.f32 %v3238, %v3281
        %v3283 = vpop.f32.mrf.mxu0
        %v3284 = vadd.f32 %v3240, %v3283
        %3285 = vmatmul.bf16.gmra.mxu0 %v459
        %v3286 = vpop.f32.mrf.mxu0
        %v3287 = vadd.f32 %v3243, %v3286
        %v3288 = vpop.f32.mrf.mxu0
        %v3289 = vadd.f32 %v3245, %v3288
        %3290 = vmatmul.bf16.gmra.mxu0 %v467
        %v3291 = vpop.f32.mrf.mxu0
        %v3292 = vadd.f32 %v3248, %v3291
        %v3293 = vpop.f32.mrf.mxu0
        %v3294 = vadd.f32 %v3250, %v3293
        %3295 = vmatmul.bf16.gmra.mxu0 %v475
        %v3296 = vpop.f32.mrf.mxu0
        %v3297 = vadd.f32 %v3253, %v3296
        %v3298 = vpop.f32.mrf.mxu0
        %v3299 = vadd.f32 %v3255, %v3298
        %3300 = vdwg.mxu0
        %3301 = vmatpush.bf16.msra.mxu0 %v1704
        %3302 = vmatpush.bf16.msra.mxu0 %v1700
        %3303 = vmatpush.bf16.msra.mxu0 %v1696
        %3304 = vmatpush.bf16.msra.mxu0 %v1692
        %3305 = vmatpush.bf16.msra.mxu0 %v1688
        %3306 = vmatpush.bf16.msra.mxu0 %v1684
        %3307 = vmatpush.bf16.msra.mxu0 %v1680
        %3308 = vmatpush.bf16.msra.mxu0 %v1676
        %3309 = vmatmul.bf16.gmra.mxu0 %v428
        %v3310 = vpop.f32.mrf.mxu0
        %v3311 = vadd.f32 %v3267, %v3310
        %v3312 = vpop.f32.mrf.mxu0
        %v3313 = vadd.f32 %v3269, %v3312
        %3314 = vmatmul.bf16.gmra.mxu0 %v436
        %v3315 = vpop.f32.mrf.mxu0
        %v3316 = vadd.f32 %v3272, %v3315
        %v3317 = vpop.f32.mrf.mxu0
        %v3318 = vadd.f32 %v3274, %v3317
        %3319 = vmatmul.bf16.gmra.mxu0 %v444
        %v3320 = vpop.f32.mrf.mxu0
        %v3321 = vadd.f32 %v3277, %v3320
        %v3322 = vpop.f32.mrf.mxu0
        %v3323 = vadd.f32 %v3279, %v3322
        %3324 = vmatmul.bf16.gmra.mxu0 %v452
        %v3325 = vpop.f32.mrf.mxu0
        %v3326 = vadd.f32 %v3282, %v3325
        %v3327 = vpop.f32.mrf.mxu0
        %v3328 = vadd.f32 %v3284, %v3327
        %3329 = vmatmul.bf16.gmra.mxu0 %v460
        %v3330 = vpop.f32.mrf.mxu0
        %v3331 = vadd.f32 %v3287, %v3330
        %v3332 = vpop.f32.mrf.mxu0
        %v3333 = vadd.f32 %v3289, %v3332
        %3334 = vmatmul.bf16.gmra.mxu0 %v468
        %v3335 = vpop.f32.mrf.mxu0
        %v3336 = vadd.f32 %v3292, %v3335
        %v3337 = vpop.f32.mrf.mxu0
        %v3338 = vadd.f32 %v3294, %v3337
        %3339 = vmatmul.bf16.gmra.mxu0 %v476
        %v3340 = vpop.f32.mrf.mxu0
        %v3341 = vadd.f32 %v3297, %v3340
        %v3342 = vpop.f32.mrf.mxu0
        %v3343 = vadd.f32 %v3299, %v3342
        %3344 = vdwg.mxu0
        %3345 = vmatpush.bf16.msra.mxu0 %v1736
        %3346 = vmatpush.bf16.msra.mxu0 %v1732
        %3347 = vmatpush.bf16.msra.mxu0 %v1728
        %3348 = vmatpush.bf16.msra.mxu0 %v1724
        %3349 = vmatpush.bf16.msra.mxu0 %v1720
        %3350 = vmatpush.bf16.msra.mxu0 %v1716
        %3351 = vmatpush.bf16.msra.mxu0 %v1712
        %3352 = vmatpush.bf16.msra.mxu0 %v1708
        %3353 = vmatmul.bf16.gmra.mxu0 %v429
        %v3354 = vpop.f32.mrf.mxu0
        %v3355 = vadd.f32 %v3311, %v3354
        %v3356 = vpop.f32.mrf.mxu0
        %v3357 = vadd.f32 %v3313, %v3356
        %3358 = vmatmul.bf16.gmra.mxu0 %v437
        %v3359 = vpop.f32.mrf.mxu0
        %v3360 = vadd.f32 %v3316, %v3359
        %v3361 = vpop.f32.mrf.mxu0
        %v3362 = vadd.f32 %v3318, %v3361
        %3363 = vmatmul.bf16.gmra.mxu0 %v445
        %v3364 = vpop.f32.mrf.mxu0
        %v3365 = vadd.f32 %v3321, %v3364
        %v3366 = vpop.f32.mrf.mxu0
        %v3367 = vadd.f32 %v3323, %v3366
        %3368 = vmatmul.bf16.gmra.mxu0 %v453
        %v3369 = vpop.f32.mrf.mxu0
        %v3370 = vadd.f32 %v3326, %v3369
        %v3371 = vpop.f32.mrf.mxu0
        %v3372 = vadd.f32 %v3328, %v3371
        %3373 = vmatmul.bf16.gmra.mxu0 %v461
        %v3374 = vpop.f32.mrf.mxu0
        %v3375 = vadd.f32 %v3331, %v3374
        %v3376 = vpop.f32.mrf.mxu0
        %v3377 = vadd.f32 %v3333, %v3376
        %3378 = vmatmul.bf16.gmra.mxu0 %v469
        %v3379 = vpop.f32.mrf.mxu0
        %v3380 = vadd.f32 %v3336, %v3379
        %v3381 = vpop.f32.mrf.mxu0
        %v3382 = vadd.f32 %v3338, %v3381
        %3383 = vmatmul.bf16.gmra.mxu0 %v477
        %v3384 = vpop.f32.mrf.mxu0
        %v3385 = vadd.f32 %v3341, %v3384
        %v3386 = vpop.f32.mrf.mxu0
        %v3387 = vadd.f32 %v3343, %v3386
        %3388 = vdwg.mxu0
        %3389 = vmatpush.bf16.msra.mxu0 %v1768
        %3390 = vmatpush.bf16.msra.mxu0 %v1764
        %3391 = vmatpush.bf16.msra.mxu0 %v1760
        %3392 = vmatpush.bf16.msra.mxu0 %v1756
        %3393 = vmatpush.bf16.msra.mxu0 %v1752
        %3394 = vmatpush.bf16.msra.mxu0 %v1748
        %3395 = vmatpush.bf16.msra.mxu0 %v1744
        %3396 = vmatpush.bf16.msra.mxu0 %v1740
        %3397 = vmatmul.bf16.gmra.mxu0 %v430
        %v3398 = vpop.f32.mrf.mxu0
        %v3399 = vadd.f32 %v3355, %v3398
        %v3400 = vpop.f32.mrf.mxu0
        %v3401 = vadd.f32 %v3357, %v3400
        %3402 = vmatmul.bf16.gmra.mxu0 %v438
        %v3403 = vpop.f32.mrf.mxu0
        %v3404 = vadd.f32 %v3360, %v3403
        %v3405 = vpop.f32.mrf.mxu0
        %v3406 = vadd.f32 %v3362, %v3405
        %3407 = vmatmul.bf16.gmra.mxu0 %v446
        %v3408 = vpop.f32.mrf.mxu0
        %v3409 = vadd.f32 %v3365, %v3408
        %v3410 = vpop.f32.mrf.mxu0
        %v3411 = vadd.f32 %v3367, %v3410
        %3412 = vmatmul.bf16.gmra.mxu0 %v454
        %v3413 = vpop.f32.mrf.mxu0
        %v3414 = vadd.f32 %v3370, %v3413
        %v3415 = vpop.f32.mrf.mxu0
        %v3416 = vadd.f32 %v3372, %v3415
        %3417 = vmatmul.bf16.gmra.mxu0 %v462
        %v3418 = vpop.f32.mrf.mxu0
        %v3419 = vadd.f32 %v3375, %v3418
        %v3420 = vpop.f32.mrf.mxu0
        %v3421 = vadd.f32 %v3377, %v3420
        %3422 = vmatmul.bf16.gmra.mxu0 %v470
        %v3423 = vpop.f32.mrf.mxu0
        %v3424 = vadd.f32 %v3380, %v3423
        %v3425 = vpop.f32.mrf.mxu0
        %v3426 = vadd.f32 %v3382, %v3425
        %3427 = vmatmul.bf16.gmra.mxu0 %v478
        %v3428 = vpop.f32.mrf.mxu0
        %v3429 = vadd.f32 %v3385, %v3428
        %v3430 = vpop.f32.mrf.mxu0
        %v3431 = vadd.f32 %v3387, %v3430
        %3432 = vdwg.mxu0
        %v3433 = vtanh.pop %v2343
        %v3434 = vtanh.pop %v2695
        %v3435 = vtanh.pop %v2345
        %v3436 = vtanh.pop %v2697
        %v3437 = vtanh.pop %v2348
        %v3438 = vtanh.pop %v2700
        %v3439 = vtanh.pop %v2350
        %v3440 = vtanh.pop %v2702
        %v3441 = vtanh.pop %v2353
        %v3442 = vtanh.pop %v2705
        %v3443 = vtanh.pop %v2355
        %v3444 = vtanh.pop %v2707
        %v3445 = vtanh.pop %v2358
        %v3446 = vtanh.pop %v2710
        %v3447 = vtanh.pop %v2360
        %v3448 = vtanh.pop %v2712
        %v3449 = vtanh.pop %v2363
        %v3450 = vtanh.pop %v2715
        %v3451 = vtanh.pop %v2365
        %v3452 = vtanh.pop %v2717
        %v3453 = vtanh.pop %v2368
        %v3454 = vtanh.pop %v2720
        %v3455 = vtanh.pop %v2370
        %v3456 = vtanh.pop %v2722
        %v3457 = vtanh.pop %v2373
        %v3458 = vtanh.pop %v2725
        %v3459 = vtanh.pop %v2375
        %v3460 = vtanh.pop %v2727
        %v3461 = vmul.f32 %v3047, 0.5
        %v3462 = vmul.f32 %v3399, 0.5
        %v3463 = vmul.f32 %v3049, 0.5
        %v3464 = vmul.f32 %v3401, 0.5
        %v3465 = vmul.f32 %v3052, 0.5
        %v3466 = vmul.f32 %v3404, 0.5
        %v3467 = vmul.f32 %v3054, 0.5
        %v3468 = vmul.f32 %v3406, 0.5
        %v3469 = vmul.f32 %v3057, 0.5
        %v3470 = vmul.f32 %v3409, 0.5
        %v3471 = vmul.f32 %v3059, 0.5
        %v3472 = vmul.f32 %v3411, 0.5
        %v3473 = vmul.f32 %v3062, 0.5
        %v3474 = vmul.f32 %v3414, 0.5
        %v3475 = vmul.f32 %v3064, 0.5
        %v3476 = vmul.f32 %v3416, 0.5
        %v3477 = vmul.f32 %v3067, 0.5
        %v3478 = vmul.f32 %v3419, 0.5
        %v3479 = vmul.f32 %v3069, 0.5
        %v3480 = vmul.f32 %v3421, 0.5
        %v3481 = vmul.f32 %v3072, 0.5
        %v3482 = vmul.f32 %v3424, 0.5
        %v3483 = vmul.f32 %v3074, 0.5
        %v3484 = vmul.f32 %v3426, 0.5
        %v3485 = vmul.f32 %v3077, 0.5
        %v3486 = vmul.f32 %v3429, 0.5
        %v3487 = vmul.f32 %v3079, 0.5
        %v3488 = vmul.f32 %v3431, 0.5
        %v3489 = vtanh.pop %v3461
        %v3490 = vtanh.pop %v3462
        %v3491 = vtanh.pop %v3463
        %v3492 = vtanh.pop %v3464
        %v3493 = vtanh.pop %v3465
        %v3494 = vtanh.pop %v3466
        %v3495 = vtanh.pop %v3467
        %v3496 = vtanh.pop %v3468
        %v3497 = vtanh.pop %v3469
        %v3498 = vtanh.pop %v3470
        %v3499 = vtanh.pop %v3471
        %v3500 = vtanh.pop %v3472
        %v3501 = vtanh.pop %v3473
        %v3502 = vtanh.pop %v3474
        %v3503 = vtanh.pop %v3475
        %v3504 = vtanh.pop %v3476
        %v3505 = vtanh.pop %v3477
        %v3506 = vtanh.pop %v3478
        %v3507 = vtanh.pop %v3479
        %v3508 = vtanh.pop %v3480
        %v3509 = vtanh.pop %v3481
        %v3510 = vtanh.pop %v3482
        %v3511 = vtanh.pop %v3483
        %v3512 = vtanh.pop %v3484
        %v3513 = vtanh.pop %v3485
        %v3514 = vtanh.pop %v3486
        %v3515 = vtanh.pop %v3487
        %v3516 = vtanh.pop %v3488
        %v3517 = vmul.f32 %v3489, 0.5
        %v3518 = vmul.f32 %v3490, 0.5
        %v3519 = vmul.f32 %v3491, 0.5
        %v3520 = vmul.f32 %v3492, 0.5
        %v3521 = vmul.f32 %v3493, 0.5
        %v3522 = vmul.f32 %v3494, 0.5
        %v3523 = vmul.f32 %v3495, 0.5
        %v3524 = vmul.f32 %v3496, 0.5
        %v3525 = vmul.f32 %v3497, 0.5
        %v3526 = vmul.f32 %v3498, 0.5
        %v3527 = vmul.f32 %v3499, 0.5
        %v3528 = vmul.f32 %v3500, 0.5
        %v3529 = vmul.f32 %v3501, 0.5
        %v3530 = vmul.f32 %v3502, 0.5
        %v3531 = vmul.f32 %v3503, 0.5
        %v3532 = vmul.f32 %v3504, 0.5
        %v3533 = vmul.f32 %v3505, 0.5
        %v3534 = vmul.f32 %v3506, 0.5
        %v3535 = vmul.f32 %v3507, 0.5
        %v3536 = vmul.f32 %v3508, 0.5
        %v3537 = vmul.f32 %v3509, 0.5
        %v3538 = vmul.f32 %v3510, 0.5
        %v3539 = vmul.f32 %v3511, 0.5
        %v3540 = vmul.f32 %v3512, 0.5
        %v3541 = vmul.f32 %v3513, 0.5
        %v3542 = vmul.f32 %v3514, 0.5
        %v3543 = vmul.f32 %v3515, 0.5
        %v3544 = vmul.f32 %v3516, 0.5
        %v3545 = vadd.f32 %v3517, 0.5
        %v3546 = vadd.f32 %v3518, 0.5
        %v3547 = vadd.f32 %v3519, 0.5
        %v3548 = vadd.f32 %v3520, 0.5
        %v3549 = vadd.f32 %v3521, 0.5
        %v3550 = vadd.f32 %v3522, 0.5
        %v3551 = vadd.f32 %v3523, 0.5
        %v3552 = vadd.f32 %v3524, 0.5
        %v3553 = vadd.f32 %v3525, 0.5
        %v3554 = vadd.f32 %v3526, 0.5
        %v3555 = vadd.f32 %v3527, 0.5
        %v3556 = vadd.f32 %v3528, 0.5
        %v3557 = vadd.f32 %v3529, 0.5
        %v3558 = vadd.f32 %v3530, 0.5
        %v3559 = vadd.f32 %v3531, 0.5
        %v3560 = vadd.f32 %v3532, 0.5
        %v3561 = vadd.f32 %v3533, 0.5
        %v3562 = vadd.f32 %v3534, 0.5
        %v3563 = vadd.f32 %v3535, 0.5
        %v3564 = vadd.f32 %v3536, 0.5
        %v3565 = vadd.f32 %v3537, 0.5
        %v3566 = vadd.f32 %v3538, 0.5
        %v3567 = vadd.f32 %v3539, 0.5
        %v3568 = vadd.f32 %v3540, 0.5
        %v3569 = vadd.f32 %v3541, 0.5
        %v3570 = vadd.f32 %v3542, 0.5
        %v3571 = vadd.f32 %v3543, 0.5
        %v3572 = vadd.f32 %v3544, 0.5
        %v3573 = vmul.f32 %v3433, %v3545
        %v3574 = vmul.f32 %v3434, %v3546
        %v3575 = vmul.f32 %v3435, %v3547
        %v3576 = vmul.f32 %v3436, %v3548
        %v3577 = vmul.f32 %v3437, %v3549
        %v3578 = vmul.f32 %v3438, %v3550
        %v3579 = vmul.f32 %v3439, %v3551
        %v3580 = vmul.f32 %v3440, %v3552
        %v3581 = vmul.f32 %v3441, %v3553
        %v3582 = vmul.f32 %v3442, %v3554
        %v3583 = vmul.f32 %v3443, %v3555
        %v3584 = vmul.f32 %v3444, %v3556
        %v3585 = vmul.f32 %v3445, %v3557
        %v3586 = vmul.f32 %v3446, %v3558
        %v3587 = vmul.f32 %v3447, %v3559
        %v3588 = vmul.f32 %v3448, %v3560
        %v3589 = vmul.f32 %v3449, %v3561
        %v3590 = vmul.f32 %v3450, %v3562
        %v3591 = vmul.f32 %v3451, %v3563
        %v3592 = vmul.f32 %v3452, %v3564
        %v3593 = vmul.f32 %v3453, %v3565
        %v3594 = vmul.f32 %v3454, %v3566
        %v3595 = vmul.f32 %v3455, %v3567
        %v3596 = vmul.f32 %v3456, %v3568
        %v3597 = vmul.f32 %v3457, %v3569
        %v3598 = vmul.f32 %v3458, %v3570
        %v3599 = vmul.f32 %v3459, %v3571
        %v3600 = vmul.f32 %v3460, %v3572
        %v3601 = vpack.c.bf16 %v3575, %v3573
        %v3602 = vpack.c.bf16 %v3576, %v3574
        %v3603 = vpack.c.bf16 %v3579, %v3577
        %v3604 = vpack.c.bf16 %v3580, %v3578
        %v3605 = vpack.c.bf16 %v3583, %v3581
        %v3606 = vpack.c.bf16 %v3584, %v3582
        %v3607 = vpack.c.bf16 %v3587, %v3585
        %v3608 = vpack.c.bf16 %v3588, %v3586
        %v3609 = vpack.c.bf16 %v3591, %v3589
        %v3610 = vpack.c.bf16 %v3592, %v3590
        %v3611 = vpack.c.bf16 %v3595, %v3593
        %v3612 = vpack.c.bf16 %v3596, %v3594
        %v3613 = vpack.c.bf16 %v3599, %v3597
        %v3614 = vpack.c.bf16 %v3600, %v3598
        %v3615 = vld [vmem:[#allocation8] sm:$0xf]
        %v3616 = vld [vmem:[#allocation8 + $0x4] sm:$0xf]
        %v3617 = vld [vmem:[#allocation8 + $0x8] sm:$0xf]
        %v3618 = vld [vmem:[#allocation8 + $0xc] sm:$0xf]
        %v3619 = vld [vmem:[#allocation8 + $0x10] sm:$0xf]
        %v3620 = vld [vmem:[#allocation8 + $0x14] sm:$0xf]
        %v3621 = vld [vmem:[#allocation8 + $0x18] sm:$0xf]
        %v3622 = vld [vmem:[#allocation8 + $0x1c] sm:$0xf]
        %v3623 = vld [vmem:[#allocation8 + $0x20] sm:$0xf]
        %v3624 = vld [vmem:[#allocation8 + $0x24] sm:$0xf]
        %v3625 = vld [vmem:[#allocation8 + $0x28] sm:$0xf]
        %v3626 = vld [vmem:[#allocation8 + $0x2c] sm:$0xf]
        %v3627 = vld [vmem:[#allocation8 + $0x30] sm:$0xf]
        %v3628 = vld [vmem:[#allocation8 + $0x34] sm:$0xf]
        %v3629 = vld [vmem:[#allocation8 + $0x38] sm:$0xf]
        %v3630 = vld [vmem:[#allocation8 + $0x3c] sm:$0xf]
        %v3631 = vld [vmem:[#allocation8 + $0x40] sm:$0xf]
        %v3632 = vld [vmem:[#allocation8 + $0x44] sm:$0xf]
        %v3633 = vld [vmem:[#allocation8 + $0x48] sm:$0xf]
        %v3634 = vld [vmem:[#allocation8 + $0x4c] sm:$0xf]
        %v3635 = vld [vmem:[#allocation8 + $0x50] sm:$0xf]
        %v3636 = vld [vmem:[#allocation8 + $0x54] sm:$0xf]
        %v3637 = vld [vmem:[#allocation8 + $0x58] sm:$0xf]
        %v3638 = vld [vmem:[#allocation8 + $0x5c] sm:$0xf]
        %v3639 = vld [vmem:[#allocation8 + $0x60] sm:$0xf]
        %v3640 = vld [vmem:[#allocation8 + $0x64] sm:$0xf]
        %v3641 = vld [vmem:[#allocation8 + $0x68] sm:$0xf]
        %v3642 = vld [vmem:[#allocation8 + $0x6c] sm:$0xf]
        %v3643 = vld [vmem:[#allocation8 + $0x70] sm:$0xf]
        %v3644 = vld [vmem:[#allocation8 + $0x74] sm:$0xf]
        %v3645 = vld [vmem:[#allocation8 + $0x78] sm:$0xf]
        %v3646 = vld [vmem:[#allocation8 + $0x7c] sm:$0xf]
        %v3679 = vunpack.c.l.b16 %v3615
        %v3680 = vunpack.c.l.b16 %v3616
        %v3681 = vunpack.c.l.b16 %v3617
        %v3682 = vunpack.c.l.b16 %v3618
        %v3683 = vunpack.c.l.b16 %v3619
        %v3684 = vunpack.c.l.b16 %v3620
        %v3685 = vunpack.c.l.b16 %v3621
        %v3686 = vunpack.c.l.b16 %v3622
        %v3687 = vunpack.c.l.b16 %v3623
        %v3688 = vunpack.c.l.b16 %v3624
        %v3689 = vunpack.c.l.b16 %v3625
        %v3690 = vunpack.c.l.b16 %v3626
        %v3691 = vunpack.c.l.b16 %v3627
        %v3692 = vunpack.c.l.b16 %v3628
        %v3693 = vunpack.c.l.b16 %v3629
        %v3694 = vunpack.c.l.b16 %v3630
        %v3695 = vunpack.c.l.b16 %v3631
        %v3696 = vunpack.c.l.b16 %v3632
        %v3697 = vunpack.c.l.b16 %v3633
        %v3698 = vunpack.c.l.b16 %v3634
        %v3699 = vunpack.c.l.b16 %v3635
        %v3700 = vunpack.c.l.b16 %v3636
        %v3701 = vunpack.c.l.b16 %v3637
        %v3702 = vunpack.c.l.b16 %v3638
        %v3703 = vunpack.c.l.b16 %v3639
        %v3704 = vunpack.c.l.b16 %v3640
        %v3705 = vunpack.c.l.b16 %v3641
        %v3706 = vunpack.c.l.b16 %v3642
        %v3707 = vunpack.c.l.b16 %v3643
        %v3708 = vunpack.c.l.b16 %v3644
        %v3709 = vunpack.c.l.b16 %v3645
        %v3710 = vunpack.c.l.b16 %v3646
        %v3711 = vpack.c.b16 %v3680, %v3679
        %v3712 = vpack.c.b16 %v3682, %v3681
        %v3713 = vpack.c.b16 %v3684, %v3683
        %v3714 = vpack.c.b16 %v3686, %v3685
        %v3715 = vpack.c.b16 %v3688, %v3687
        %v3716 = vpack.c.b16 %v3690, %v3689
        %v3717 = vpack.c.b16 %v3692, %v3691
        %v3718 = vpack.c.b16 %v3694, %v3693
        %v3719 = vpack.c.b16 %v3696, %v3695
        %v3720 = vpack.c.b16 %v3698, %v3697
        %v3721 = vpack.c.b16 %v3700, %v3699
        %v3722 = vpack.c.b16 %v3702, %v3701
        %v3723 = vpack.c.b16 %v3704, %v3703
        %v3724 = vpack.c.b16 %v3706, %v3705
        %v3725 = vpack.c.b16 %v3708, %v3707
        %v3726 = vpack.c.b16 %v3710, %v3709
        %3743 = vmatpush.bf16.msra.mxu0 %v3718
        %3744 = vmatpush.bf16.msra.mxu0 %v3717
        %3745 = vmatpush.bf16.msra.mxu0 %v3716
        %3746 = vmatpush.bf16.msra.mxu0 %v3715
        %3747 = vmatpush.bf16.msra.mxu0 %v3714
        %3748 = vmatpush.bf16.msra.mxu0 %v3713
        %3749 = vmatpush.bf16.msra.mxu0 %v3712
        %3750 = vmatpush.bf16.msra.mxu0 %v3711
        %3751 = vmatmul.bf16.gmra.mxu0 %v3601
        %v3752 = vpop.f32.mrf.mxu0
        %v3753 = vadd.f32 0.0, %v3752
        %v3754 = vpop.f32.mrf.mxu0
        %v3755 = vadd.f32 0.0, %v3754
        %3756 = vmatmul.bf16.gmra.mxu0 %v3603
        %v3757 = vpop.f32.mrf.mxu0
        %v3758 = vadd.f32 0.0, %v3757
        %v3759 = vpop.f32.mrf.mxu0
        %v3760 = vadd.f32 0.0, %v3759
        %3761 = vmatmul.bf16.gmra.mxu0 %v3605
        %v3762 = vpop.f32.mrf.mxu0
        %v3763 = vadd.f32 0.0, %v3762
        %v3764 = vpop.f32.mrf.mxu0
        %v3765 = vadd.f32 0.0, %v3764
        %3766 = vmatmul.bf16.gmra.mxu0 %v3607
        %v3767 = vpop.f32.mrf.mxu0
        %v3768 = vadd.f32 0.0, %v3767
        %v3769 = vpop.f32.mrf.mxu0
        %v3770 = vadd.f32 0.0, %v3769
        %3771 = vmatmul.bf16.gmra.mxu0 %v3609
        %v3772 = vpop.f32.mrf.mxu0
        %v3773 = vadd.f32 0.0, %v3772
        %v3774 = vpop.f32.mrf.mxu0
        %v3775 = vadd.f32 0.0, %v3774
        %3776 = vmatmul.bf16.gmra.mxu0 %v3611
        %v3777 = vpop.f32.mrf.mxu0
        %v3778 = vadd.f32 0.0, %v3777
        %v3779 = vpop.f32.mrf.mxu0
        %v3780 = vadd.f32 0.0, %v3779
        %3781 = vmatmul.bf16.gmra.mxu0 %v3613
        %v3782 = vpop.f32.mrf.mxu0
        %v3783 = vadd.f32 0.0, %v3782
        %v3784 = vpop.f32.mrf.mxu0
        %v3785 = vadd.f32 0.0, %v3784
        %3786 = vdwg.mxu0
        %3787 = vmatpush.bf16.msra.mxu0 %v3726
        %3788 = vmatpush.bf16.msra.mxu0 %v3725
        %3789 = vmatpush.bf16.msra.mxu0 %v3724
        %3790 = vmatpush.bf16.msra.mxu0 %v3723
        %3791 = vmatpush.bf16.msra.mxu0 %v3722
        %3792 = vmatpush.bf16.msra.mxu0 %v3721
        %3793 = vmatpush.bf16.msra.mxu0 %v3720
        %3794 = vmatpush.bf16.msra.mxu0 %v3719
        %3795 = vmatmul.bf16.gmra.mxu0 %v3602
        %v3796 = vpop.f32.mrf.mxu0
        %v3797 = vadd.f32 %v3753, %v3796
        %v3798 = vpop.f32.mrf.mxu0
        %v3799 = vadd.f32 %v3755, %v3798
        %3800 = vmatmul.bf16.gmra.mxu0 %v3604
        %v3801 = vpop.f32.mrf.mxu0
        %v3802 = vadd.f32 %v3758, %v3801
        %v3803 = vpop.f32.mrf.mxu0
        %v3804 = vadd.f32 %v3760, %v3803
        %3805 = vmatmul.bf16.gmra.mxu0 %v3606
        %v3806 = vpop.f32.mrf.mxu0
        %v3807 = vadd.f32 %v3763, %v3806
        %v3808 = vpop.f32.mrf.mxu0
        %v3809 = vadd.f32 %v3765, %v3808
        %3810 = vmatmul.bf16.gmra.mxu0 %v3608
        %v3811 = vpop.f32.mrf.mxu0
        %v3812 = vadd.f32 %v3768, %v3811
        %v3813 = vpop.f32.mrf.mxu0
        %v3814 = vadd.f32 %v3770, %v3813
        %3815 = vmatmul.bf16.gmra.mxu0 %v3610
        %v3816 = vpop.f32.mrf.mxu0
        %v3817 = vadd.f32 %v3773, %v3816
        %v3818 = vpop.f32.mrf.mxu0
        %v3819 = vadd.f32 %v3775, %v3818
        %3820 = vmatmul.bf16.gmra.mxu0 %v3612
        %v3821 = vpop.f32.mrf.mxu0
        %v3822 = vadd.f32 %v3778, %v3821
        %v3823 = vpop.f32.mrf.mxu0
        %v3824 = vadd.f32 %v3780, %v3823
        %3825 = vmatmul.bf16.gmra.mxu0 %v3614
        %v3826 = vpop.f32.mrf.mxu0
        %v3827 = vadd.f32 %v3783, %v3826
        %v3828 = vpop.f32.mrf.mxu0
        %v3829 = vadd.f32 %v3785, %v3828
        %3830 = vdwg.mxu0
        %v3831 = vld [vmem:[#allocation2] sm:$0x1]
        %v3833 = vperm.slane %v3831, 0
        %v3835 = vadd.f32 %v3797, %v3833
        %v3836 = vadd.f32 %v3799, %v3833
        %v3837 = vadd.f32 %v3802, %v3833
        %v3838 = vadd.f32 %v3804, %v3833
        %v3839 = vadd.f32 %v3807, %v3833
        %v3840 = vadd.f32 %v3809, %v3833
        %v3841 = vadd.f32 %v3812, %v3833
        %v3842 = vadd.f32 %v3814, %v3833
        %v3843 = vadd.f32 %v3817, %v3833
        %v3844 = vadd.f32 %v3819, %v3833
        %v3845 = vadd.f32 %v3822, %v3833
        %v3846 = vadd.f32 %v3824, %v3833
        %v3847 = vadd.f32 %v3827, %v3833
        %v3848 = vadd.f32 %v3829, %v3833
        %vm3849 = vcmask 7168
        %3850 = vst.msk [vmem:[%s299] sm:$0xff] %vm3849, %v3835
        %3851 = vst.msk [vmem:[%s299 + $0x8] sm:$0xff] %vm3849, %v3836
        %3852 = vst.msk [vmem:[%s299 + $0x10] sm:$0xff] %vm3849, %v3837
        %3853 = vst.msk [vmem:[%s299 + $0x18] sm:$0xff] %vm3849, %v3838
        %3854 = vst.msk [vmem:[%s299 + $0x20] sm:$0xff] %vm3849, %v3839
        %3855 = vst.msk [vmem:[%s299 + $0x28] sm:$0xff] %vm3849, %v3840
        %3856 = vst.msk [vmem:[%s299 + $0x30] sm:$0xff] %vm3849, %v3841
        %3857 = vst.msk [vmem:[%s299 + $0x38] sm:$0xff] %vm3849, %v3842
        %3858 = vst.msk [vmem:[%s299 + $0x40] sm:$0xff] %vm3849, %v3843
        %3859 = vst.msk [vmem:[%s299 + $0x48] sm:$0xff] %vm3849, %v3844
        %3860 = vst.msk [vmem:[%s299 + $0x50] sm:$0xff] %vm3849, %v3845
        %3861 = vst.msk [vmem:[%s299 + $0x58] sm:$0xff] %vm3849, %v3846
        %3862 = vst.msk [vmem:[%s299 + $0x60] sm:$0xff] %vm3849, %v3847
        %3863 = vst.msk [vmem:[%s299 + $0x68] sm:$0xff] %vm3849, %v3848
        %s3864 = sand.u32 %s141, 1
        %s3865 = sand.u32 %s141, 1
        %s3866 = smul.addr %s3865, 112
        %s3867 = scalar_lea.vmem [#allocation10], %s3866
        // Predicated region
        $region57: #{attn_net_gated_packed.1} parent=39 // pred_check
          %p3868 = pneg %p151
        $region58: #{attn_net_gated_packed.1} parent=39 // pred_check_branch
          %3870 = sbr.rel (%p3868) target = $region60
        $region59: #{attn_net_gated_packed.1} parent=39 // pred_region
          %s3871 = smul.u32 14, %s23
          %s3872 = ssub.s32 25, %s3871
          %p3873 = scmp.lt.s32.totalorder %s3872, 14
          %s3874 = scalar_select %p3873, %s3872, 14
          %s3875 = smul.u32 8, %s3874
          %p3876 = scmp.ne.s32.totalorder 0, %s3875
          %s3877 = smul.addr %s3871, 8
          %s3878 = scalar_lea.vmem %s5, %s3877
          // Predicated region
          $region61: #{attn_net_gated_packed.1} parent=59 // pred_check
            %p3879 = pneg %p3876
          $region62: #{attn_net_gated_packed.1} parent=59 // pred_check_branch
            %3881 = sbr.rel (%p3879) target = $region64
          $region63: #{attn_net_gated_packed.1} parent=59 // pred_region
            // Predicated region
            $region65: #{attn_net_gated_packed.1} parent=63 // pred_check
              _
            $region66: #{attn_net_gated_packed.1} parent=63 // pred_check_branch
              %3883 = sbr.rel (0) target = $region68
            $region67: #{attn_net_gated_packed.1} parent=63 // pred_region
              // Predicated region
              $region87: #{attn_net_gated_packed.1} parent=67 // pred_check
                _
              $region88: #{attn_net_gated_packed.1} parent=67 // pred_check_branch
                %3960 = sbr.rel (0) target = $region90
              $region89: #{attn_net_gated_packed.1} parent=67 // pred_region
                %s3961 = sdiv.u32.pop %s3874, 14
                %s3962 = srem.u32.pop %s3874, 14
                // While loop
                $region91: #{attn_net_gated_packed.1} parent=89 // loop_pre_header
                  _
                $region92: #{attn_net_gated_packed.1} parent=89 // loop_header
                  %s3964 = sphi 0, %s3966
                  %p3965 = scmp.ge.s32.totalorder %s3964, %s3961
                  %s3969 = sphi 0, %s4002
                  %s3970 = sphi %s3867, %s4005
                  %s3971 = sphi %s3878, %s4006
                $region93: #{attn_net_gated_packed.1} parent=89 // loop_header_branch
                  %3968 = sbr.rel (%p3965) target = $region97
                $region94: #{attn_net_gated_packed.1} parent=89 // loop_body
                  %v3972 = vld [vmem:[%s3970] sm:$0xff]
                  %3973 = vst [vmem:[%s3971] sm:$0xff] %v3972
                  %v3974 = vld [vmem:[%s3970 + $0x8] sm:$0xff]
                  %3975 = vst [vmem:[%s3971 + $0x8] sm:$0xff] %v3974
                  %v3976 = vld [vmem:[%s3970 + $0x10] sm:$0xff]
                  %3977 = vst [vmem:[%s3971 + $0x10] sm:$0xff] %v3976
                  %v3978 = vld [vmem:[%s3970 + $0x18] sm:$0xff]
                  %3979 = vst [vmem:[%s3971 + $0x18] sm:$0xff] %v3978
                  %v3980 = vld [vmem:[%s3970 + $0x20] sm:$0xff]
                  %3981 = vst [vmem:[%s3971 + $0x20] sm:$0xff] %v3980
                  %v3982 = vld [vmem:[%s3970 + $0x28] sm:$0xff]
                  %3983 = vst [vmem:[%s3971 + $0x28] sm:$0xff] %v3982
                  %v3984 = vld [vmem:[%s3970 + $0x30] sm:$0xff]
                  %3985 = vst [vmem:[%s3971 + $0x30] sm:$0xff] %v3984
                  %v3986 = vld [vmem:[%s3970 + $0x38] sm:$0xff]
                  %3987 = vst [vmem:[%s3971 + $0x38] sm:$0xff] %v3986
                  %v3988 = vld [vmem:[%s3970 + $0x40] sm:$0xff]
                  %3989 = vst [vmem:[%s3971 + $0x40] sm:$0xff] %v3988
                  %v3990 = vld [vmem:[%s3970 + $0x48] sm:$0xff]
                  %3991 = vst [vmem:[%s3971 + $0x48] sm:$0xff] %v3990
                  %v3992 = vld [vmem:[%s3970 + $0x50] sm:$0xff]
                  %3993 = vst [vmem:[%s3971 + $0x50] sm:$0xff] %v3992
                  %v3994 = vld [vmem:[%s3970 + $0x58] sm:$0xff]
                  %3995 = vst [vmem:[%s3971 + $0x58] sm:$0xff] %v3994
                  %v3996 = vld [vmem:[%s3970 + $0x60] sm:$0xff]
                  %3997 = vst [vmem:[%s3971 + $0x60] sm:$0xff] %v3996
                  %v3998 = vld [vmem:[%s3970 + $0x68] sm:$0xff]
                  %3999 = vst [vmem:[%s3971 + $0x68] sm:$0xff] %v3998
                  %s4000 = sadd.s32 1, %s3969
                  %p4001 = scmp.ge.s32.totalorder %s4000, %s3961
                  %s4002 = scalar_select %p4001, 0, %s4000
                  %s4003 = smul.u32 %s4002, 112
                  %s4004 = smul.u32 %s4002, 112
                  %s4005 = scalar_lea.vmem %s3867, %s4003 [#allocation10]
                  %s4006 = scalar_lea.vmem %s3878, %s4004
                $region95: #{attn_net_gated_packed.1} parent=89 // loop_footer
                  %s3966 = sadd.s32 %s3964, 1
                $region96: #{attn_net_gated_packed.1} parent=89 // loop_footer_branch
                  %3963 = sbr.rel target = $region92
                $region97: #{attn_net_gated_packed.1} parent=89 // loop_exit
                  _
                %s4007 = sdiv.u32.pop %s3874, 14
                %s4008 = srem.u32.pop %s3874, 14
                %s4009 = smul.u32 %s4007, 14
                %s4010 = smul.u32 8, %s4009
                %s4011 = scalar_lea.vmem %s3867, %s4010 [#allocation10]
                %s4012 = smul.u32 8, %s4009
                %s4013 = scalar_lea.vmem %s3878, %s4012
                // While loop
                $region98: #{attn_net_gated_packed.1} parent=89 // loop_pre_header
                  _
                $region99: #{attn_net_gated_packed.1} parent=89 // loop_header
                  %s4015 = sphi 0, %s4017
                  %p4016 = scmp.ge.s32.totalorder %s4015, %s4008
                  %s4020 = sphi 0, %s4027
                  %s4021 = sphi %s4011, %s4030
                  %s4022 = sphi %s4013, %s4031
                $region100: #{attn_net_gated_packed.1} parent=89 // loop_header_branch
                  %4019 = sbr.rel (%p4016) target = $region104
                $region101: #{attn_net_gated_packed.1} parent=89 // loop_body
                  %v4023 = vld [vmem:[%s4021] sm:$0xff]
                  %4024 = vst [vmem:[%s4022] sm:$0xff] %v4023
                  %s4025 = sadd.s32 1, %s4020
                  %p4026 = scmp.ge.s32.totalorder %s4025, %s4008
                  %s4027 = scalar_select %p4026, 0, %s4025
                  %s4028 = smul.u32 %s4027, 8
                  %s4029 = smul.u32 %s4027, 8
                  %s4030 = scalar_lea.vmem %s4011, %s4028 [#allocation10]
                  %s4031 = scalar_lea.vmem %s4013, %s4029
                $region102: #{attn_net_gated_packed.1} parent=89 // loop_footer
                  %s4017 = sadd.s32 %s4015, 1
                $region103: #{attn_net_gated_packed.1} parent=89 // loop_footer_branch
                  %4014 = sbr.rel target = $region99
                $region104: #{attn_net_gated_packed.1} parent=89 // loop_exit
                  _
              $region90: #{attn_net_gated_packed.1} parent=67 // pred_fallthru
                _
              // Predicated region
              $region105: #{attn_net_gated_packed.1} parent=67 // pred_check
                _
              $region106: #{attn_net_gated_packed.1} parent=67 // pred_check_branch
                %4033 = sbr.rel target = $region108
              $region107: #{attn_net_gated_packed.1} parent=67 // pred_region
                _
              $region108: #{attn_net_gated_packed.1} parent=67 // pred_fallthru
                _
            $region68: #{attn_net_gated_packed.1} parent=63 // pred_fallthru
              _
            // Predicated region
            $region69: #{attn_net_gated_packed.1} parent=63 // pred_check
              _
            $region70: #{attn_net_gated_packed.1} parent=63 // pred_check_branch
              %3885 = sbr.rel target = $region72
            $region71: #{attn_net_gated_packed.1} parent=63 // pred_region
              %s3887 = ssub.s32 256, 1
              %s3888 = sdiv.u32.pop %s3874, 14
              %s3889 = srem.u32.pop %s3874, 14
              // While loop
              $region73: #{attn_net_gated_packed.1} parent=71 // loop_pre_header
                _
              $region74: #{attn_net_gated_packed.1} parent=71 // loop_header
                %s3891 = sphi 0, %s3893
                %p3892 = scmp.ge.s32.totalorder %s3891, %s3888
                %s3896 = sphi 0, %s3929
                %s3897 = sphi %s3867, %s3932
                %s3898 = sphi %s3878, %s3933
              $region75: #{attn_net_gated_packed.1} parent=71 // loop_header_branch
                %3895 = sbr.rel (%p3892) target = $region79
              $region76: #{attn_net_gated_packed.1} parent=71 // loop_body
                %v3899 = vld [vmem:[%s3897] sm:%s3887]
                %3900 = vst [vmem:[%s3898] sm:%s3887] %v3899
                %v3901 = vld [vmem:[%s3897 + $0x8] sm:%s3887]
                %3902 = vst [vmem:[%s3898 + $0x8] sm:%s3887] %v3901
                %v3903 = vld [vmem:[%s3897 + $0x10] sm:%s3887]
                %3904 = vst [vmem:[%s3898 + $0x10] sm:%s3887] %v3903
                %v3905 = vld [vmem:[%s3897 + $0x18] sm:%s3887]
                %3906 = vst [vmem:[%s3898 + $0x18] sm:%s3887] %v3905
                %v3907 = vld [vmem:[%s3897 + $0x20] sm:%s3887]
                %3908 = vst [vmem:[%s3898 + $0x20] sm:%s3887] %v3907
                %v3909 = vld [vmem:[%s3897 + $0x28] sm:%s3887]
                %3910 = vst [vmem:[%s3898 + $0x28] sm:%s3887] %v3909
                %v3911 = vld [vmem:[%s3897 + $0x30] sm:%s3887]
                %3912 = vst [vmem:[%s3898 + $0x30] sm:%s3887] %v3911
                %v3913 = vld [vmem:[%s3897 + $0x38] sm:%s3887]
                %3914 = vst [vmem:[%s3898 + $0x38] sm:%s3887] %v3913
                %v3915 = vld [vmem:[%s3897 + $0x40] sm:%s3887]
                %3916 = vst [vmem:[%s3898 + $0x40] sm:%s3887] %v3915
                %v3917 = vld [vmem:[%s3897 + $0x48] sm:%s3887]
                %3918 = vst [vmem:[%s3898 + $0x48] sm:%s3887] %v3917
                %v3919 = vld [vmem:[%s3897 + $0x50] sm:%s3887]
                %3920 = vst [vmem:[%s3898 + $0x50] sm:%s3887] %v3919
                %v3921 = vld [vmem:[%s3897 + $0x58] sm:%s3887]
                %3922 = vst [vmem:[%s3898 + $0x58] sm:%s3887] %v3921
                %v3923 = vld [vmem:[%s3897 + $0x60] sm:%s3887]
                %3924 = vst [vmem:[%s3898 + $0x60] sm:%s3887] %v3923
                %v3925 = vld [vmem:[%s3897 + $0x68] sm:%s3887]
                %3926 = vst [vmem:[%s3898 + $0x68] sm:%s3887] %v3925
                %s3927 = sadd.s32 1, %s3896
                %p3928 = scmp.ge.s32.totalorder %s3927, %s3888
                %s3929 = scalar_select %p3928, 0, %s3927
                %s3930 = smul.u32 %s3929, 112
                %s3931 = smul.u32 %s3929, 112
                %s3932 = scalar_lea.vmem %s3867, %s3930 [#allocation10]
                %s3933 = scalar_lea.vmem %s3878, %s3931
              $region77: #{attn_net_gated_packed.1} parent=71 // loop_footer
                %s3893 = sadd.s32 %s3891, 1
              $region78: #{attn_net_gated_packed.1} parent=71 // loop_footer_branch
                %3890 = sbr.rel target = $region74
              $region79: #{attn_net_gated_packed.1} parent=71 // loop_exit
                _
              %s3934 = sdiv.u32.pop %s3874, 14
              %s3935 = srem.u32.pop %s3874, 14
              %s3936 = smul.u32 %s3934, 14
              %s3937 = smul.u32 8, %s3936
              %s3938 = scalar_lea.vmem %s3867, %s3937 [#allocation10]
              %s3939 = smul.u32 8, %s3936
              %s3940 = scalar_lea.vmem %s3878, %s3939
              // While loop
              $region80: #{attn_net_gated_packed.1} parent=71 // loop_pre_header
                _
              $region81: #{attn_net_gated_packed.1} parent=71 // loop_header
                %s3942 = sphi 0, %s3944
                %p3943 = scmp.ge.s32.totalorder %s3942, %s3935
                %s3947 = sphi 0, %s3954
                %s3948 = sphi %s3938, %s3957
                %s3949 = sphi %s3940, %s3958
              $region82: #{attn_net_gated_packed.1} parent=71 // loop_header_branch
                %3946 = sbr.rel (%p3943) target = $region86
              $region83: #{attn_net_gated_packed.1} parent=71 // loop_body
                %v3950 = vld [vmem:[%s3948] sm:%s3887]
                %3951 = vst [vmem:[%s3949] sm:%s3887] %v3950
                %s3952 = sadd.s32 1, %s3947
                %p3953 = scmp.ge.s32.totalorder %s3952, %s3935
                %s3954 = scalar_select %p3953, 0, %s3952
                %s3955 = smul.u32 %s3954, 8
                %s3956 = smul.u32 %s3954, 8
                %s3957 = scalar_lea.vmem %s3938, %s3955 [#allocation10]
                %s3958 = scalar_lea.vmem %s3940, %s3956
              $region84: #{attn_net_gated_packed.1} parent=71 // loop_footer
                %s3944 = sadd.s32 %s3942, 1
              $region85: #{attn_net_gated_packed.1} parent=71 // loop_footer_branch
                %3941 = sbr.rel target = $region81
              $region86: #{attn_net_gated_packed.1} parent=71 // loop_exit
                _
            $region72: #{attn_net_gated_packed.1} parent=63 // pred_fallthru
              _
          $region64: #{attn_net_gated_packed.1} parent=59 // pred_fallthru
            _
          %4034 = vnop
        $region60: #{attn_net_gated_packed.1} parent=39 // pred_fallthru
          _
      $region40: #{attn_net_gated_packed.1} parent=5 // pred_fallthru
        _
      %p4035 = scmp.le.s32.totalorder 2, %s18
      // Predicated region
      $region109: #{attn_net_gated_packed.1} parent=5 // pred_check
        %p4036 = pneg %p4035
      $region110: #{attn_net_gated_packed.1} parent=5 // pred_check_branch
        %4038 = sbr.rel (%p4036) target = $region112
      $region111: #{attn_net_gated_packed.1} parent=5 // pred_region
        %s4039 = ssub.s32 %s18, 2
        // Predicated region
        $region113: #{attn_net_gated_packed.1} parent=111 // pred_check
          %p4040 = pneg %p157
        $region114: #{attn_net_gated_packed.1} parent=111 // pred_check_branch
          %4042 = sbr.rel (%p4040) target = $region116
        $region115: #{attn_net_gated_packed.1} parent=111 // pred_region
          %s4043 = sand.u32 %s142, 1
          %s4044 = sand.u32 %s142, 1
          %s4045 = smul.addr %s4044, 112
          %s4046 = scalar_lea.vmem [#allocation10], %s4045
        $region116: #{attn_net_gated_packed.1} parent=111 // pred_fallthru
          _
      $region112: #{attn_net_gated_packed.1} parent=5 // pred_fallthru
        _
    $region6: #{attn_net_gated_packed.1} parent=1 // loop_footer
      %s22 = sadd.s32 1, %s18
    $region7: #{attn_net_gated_packed.1} parent=1 // loop_footer_branch
      %17 = sbr.rel target = $region3
    $region8: #{attn_net_gated_packed.1} parent=1 // loop_exit
      _
    %4047 = vsyncpa [#allocation4], 1
    %s4048 = scalar_lea.sflag [#allocation4], 1
    %4049 = vsyncpa %s4048, 1
    %4050 = vsyncpa [#allocation6], 1
    %4051 = vsyncpa [#allocation9], 1

</llo_original>
